<compile_context>
chip_gen: v6e
topology: v6e:2x2x1
jax: 0.10.0
libtpu: 0.0.40
codegen_flags: <defaults>
</compile_context>

<pallas_src>
import functools

import jax
import jax.numpy as jnp
import numpy as np
from jax import lax
from jax.experimental import pallas as pl
from jax.experimental.pallas import tpu as pltpu


# -----------------------------------------------------------------------------
# Pallas kernel (one batch chunk per grid step)
# -----------------------------------------------------------------------------
def mdnrnn_kernel(x_ref, h0_ref, c0_ref,
                  wih_ref, whh_ref, b_ref,
                  wd_ref, bd_ref,
                  head_ref, h_out_ref, c_out_ref,
                  gxi, gxf, gxg, gxo, hs,
                  *, n_gaussian, z_size, b_chunk, seq_len, unroll):
    Bc = b_chunk                   # batch-chunk rows (multiple of 8)
    S = seq_len
    H = h0_ref.shape[1]
    G, Z = n_gaussian, z_size
    GZ = G * Z

    # ---- Hoisted, per-gate, lane-aligned input projections (off the serial
    # path).  Each gate slab starts at lane offset 0, so the per-step gate math
    # never slices a 128-lane vreg at offsets H/2H/3H.
    x = x_ref[...]                                         # (S*Bc, D)
    gxi[...] = jnp.dot(x, wih_ref[0], preferred_element_type=jnp.float32) + b_ref[0]
    gxf[...] = jnp.dot(x, wih_ref[1], preferred_element_type=jnp.float32) + b_ref[1]
    gxg[...] = jnp.dot(x, wih_ref[2], preferred_element_type=jnp.float32) + b_ref[2]
    gxo[...] = jnp.dot(x, wih_ref[3], preferred_element_type=jnp.float32) + b_ref[3]

    # Per-gate recurrent weights, loaded once outside the loop.
    whh_i = whh_ref[0]
    whh_f = whh_ref[1]
    whh_g = whh_ref[2]
    whh_o = whh_ref[3]
    # TODO(synk): stage W_hh in MXU weight registers across all S steps via
    # pltpu.matmul_push_rhs / matmul_acc_lhs / matmul_pop.

    # ---- LSTM recurrence: serial critical path = h_prev @ W_hh_k + gates ----
    def step(t, carry):
        h_prev, c_prev = carry
        row = pl.multiple_of(t * Bc, 8)
        i_g = jax.nn.sigmoid(
            gxi[pl.ds(row, Bc), :]
            + jnp.dot(h_prev, whh_i, preferred_element_type=jnp.float32))
        f_g = jax.nn.sigmoid(
            gxf[pl.ds(row, Bc), :]
            + jnp.dot(h_prev, whh_f, preferred_element_type=jnp.float32))
        g_g = jnp.tanh(
            gxg[pl.ds(row, Bc), :]
            + jnp.dot(h_prev, whh_g, preferred_element_type=jnp.float32))
        o_g = jax.nn.sigmoid(
            gxo[pl.ds(row, Bc), :]
            + jnp.dot(h_prev, whh_o, preferred_element_type=jnp.float32))
        c_new = f_g * c_prev + i_g * g_g
        h_new = o_g * jnp.tanh(c_new)
        hs[pl.ds(row, Bc), :] = h_new
        return (h_new, c_new)

    h_last, c_last = lax.fori_loop(
        0, S, step,
        (h0_ref[...].astype(jnp.float32), c0_ref[...].astype(jnp.float32)),
        unroll=unroll)

    # Final hidden/cell state written once (no per-step redundant stores).
    h_out_ref[...] = h_last.astype(h_out_ref.dtype)
    c_out_ref[...] = c_last.astype(c_out_ref.dtype)

    # ---- MDN head, off the serial path: one (S*Bc, H) @ (H, 3GZ) matmul -----
    d = (jnp.dot(hs[...], wd_ref[...], preferred_element_type=jnp.float32)
         + bd_ref[...])                                 # (S*Bc, 3GZ) = [mu|ls|lp]

    mu = d[:, 0:GZ]
    sigma = jnp.exp(d[:, GZ:2 * GZ])
    lp = d[:, 2 * GZ:3 * GZ]

    # Roll-tree log-softmax over the Gaussian axis (column layout g*Z + z):
    # circular rotations on the XLU replace the (G,Z) reshape + keepdims
    # broadcasts, keeping native lane layout.
    m = lp
    for k in range(1, G):
        m = jnp.maximum(m, pltpu.roll(lp, k * Z, axis=1))
    shifted = lp - m
    e = jnp.exp(shifted)
    esum = e
    for k in range(1, G):
        esum = esum + pltpu.roll(e, k * Z, axis=1)
    log_pi = shifted - jnp.log(esum)

    # Lane-dense output slab [mu | sigma | log_pi] (offsets are 128-multiples
    # here since G*Z = 128).
    head_ref[:, 0:GZ] = mu.astype(head_ref.dtype)
    head_ref[:, GZ:2 * GZ] = sigma.astype(head_ref.dtype)
    head_ref[:, 2 * GZ:3 * GZ] = log_pi.astype(head_ref.dtype)


# -----------------------------------------------------------------------------
# Wrapper (parameter / layout glue + pallas_call)
# -----------------------------------------------------------------------------
_BATCH_CHUNK_CAP = 256   # max rows fed to the MXU per recurrence step


@functools.partial(jax.jit, static_argnames=("n_gaussian", "z_size"))
def mdnrnn_forward(x, h, params, *, n_gaussian, z_size):
    """Pallas MDNRNN forward.

    x: (S, B, z_size + a_size)   h: tuple of (1, B, H) tensors (h0, c0)
    Returns ((log_pi, mu, sigma), (h, c)) with PyTorch-matching shapes:
      log_pi/mu/sigma: (S*B, 1, G, Z)   h, c: (1, B, H)
    """
    W_ih, W_hh, b_ih, b_hh, Wd, bd = params
    S, B, D = x.shape
    H = W_hh.shape[1]
    G, Z = n_gaussian, z_size
    GZ = G * Z

    h0 = h[0][0]    # (B, H)
    c0 = h[1][0]    # (B, H)

    # Batch chunking: pad B to a multiple of 8 (full sublane tiles), then split
    # into <= _BATCH_CHUNK_CAP-row chunks.  Chunks are independent (each carries
    # its own h/c), so the chunk grid axis is "parallel" (v7x megacore) and
    # scratch VMEM scales with S*Bc instead of S*B at production sizes.
    Bp0 = ((B + 7) // 8) * 8
    Bc = Bp0 if Bp0 <= _BATCH_CHUNK_CAP else _BATCH_CHUNK_CAP
    Bp = ((Bp0 + Bc - 1) // Bc) * Bc
    nc = Bp // Bc
    pad = Bp - B

    x_p = jnp.pad(x, ((0, 0), (0, pad), (0, 0)))
    h0_p = jnp.pad(h0, ((0, pad), (0, 0)))
    c0_p = jnp.pad(c0, ((0, pad), (0, 0)))

    # Layout plumbing (XLA side): chunk-major, time-major rows within a chunk.
    x_ck = x_p.reshape(S, nc, Bc, D).transpose(1, 0, 2, 3).reshape(nc, S * Bc, D)
    h0_ck = h0_p.reshape(nc, Bc, H)
    c0_ck = c0_p.reshape(nc, Bc, H)

    # Per-gate weight split (PyTorch gate order i, f, g, o) so every gate's
    # matmul output lands at lane offset 0, aligned with h/c.
    wih_g = W_ih.reshape(4, H, D).transpose(0, 2, 1)        # (4, D, H)
    whh_g = W_hh.reshape(4, H, H).transpose(0, 2, 1)        # (4, H, H)
    b_g = (b_ih + b_hh).reshape(4, 1, H)                    # (4, 1, H)

    # Permute dense-head columns: PyTorch col 3*m + c  ->  col c*GZ + m
    # (contiguous [mu | log_sigma | log_pi] chunks). Pure parameter glue.
    Wd_perm = Wd.reshape(GZ, 3, H).transpose(1, 0, 2).reshape(3 * GZ, H)
    bd_perm = bd.reshape(GZ, 3).transpose(1, 0).reshape(1, 3 * GZ)
    wd_t = Wd_perm.T                                        # (H, 3GZ)

    unroll = int(min(S, 8))     # cap unroll for long sequences
    kernel = functools.partial(mdnrnn_kernel, n_gaussian=G, z_size=Z,
                               b_chunk=Bc, seq_len=S, unroll=unroll)

    out_shapes = (
        jax.ShapeDtypeStruct((nc, S * Bc, 3 * GZ), jnp.float32),  # [mu|sig|lpi]
        jax.ShapeDtypeStruct((nc, Bc, H), jnp.float32),           # h_n
        jax.ShapeDtypeStruct((nc, Bc, H), jnp.float32),           # c_n
    )

    head, h_n, c_n = pl.pallas_call(
        kernel,
        out_shape=out_shapes,
        grid_spec=pltpu.PrefetchScalarGridSpec(
            num_scalar_prefetch=0,
            grid=(nc,),                                            # batch chunks
            in_specs=[
                pl.BlockSpec((None, S * Bc, D), lambda j: (j, 0, 0)),  # x chunk
                pl.BlockSpec((None, Bc, H), lambda j: (j, 0, 0)),      # h0 chunk
                pl.BlockSpec((None, Bc, H), lambda j: (j, 0, 0)),      # c0 chunk
                pl.BlockSpec((4, D, H), lambda j: (0, 0, 0)),          # W_ih per gate
                pl.BlockSpec((4, H, H), lambda j: (0, 0, 0)),          # W_hh per gate
                pl.BlockSpec((4, 1, H), lambda j: (0, 0, 0)),          # bias per gate
                pl.BlockSpec((H, 3 * GZ), lambda j: (0, 0)),           # Wd^T (perm)
                pl.BlockSpec((1, 3 * GZ), lambda j: (0, 0)),           # bd   (perm)
            ],
            out_specs=[
                pl.BlockSpec((None, S * Bc, 3 * GZ), lambda j: (j, 0, 0)),
                pl.BlockSpec((None, Bc, H), lambda j: (j, 0, 0)),
                pl.BlockSpec((None, Bc, H), lambda j: (j, 0, 0)),
            ],
            scratch_shapes=[
                pltpu.VMEM((S * Bc, H), jnp.float32),   # gx_i (hoisted)
                pltpu.VMEM((S * Bc, H), jnp.float32),   # gx_f
                pltpu.VMEM((S * Bc, H), jnp.float32),   # gx_g
                pltpu.VMEM((S * Bc, H), jnp.float32),   # gx_o
                pltpu.VMEM((S * Bc, H), jnp.float32),   # stacked h_t
            ],
        ),
        compiler_params=pltpu.CompilerParams(
            dimension_semantics=("parallel",),          # chunks are independent
        ),
    )(x_ck, h0_ck, c0_ck, wih_g, whh_g, b_g, wd_t, bd_perm)

    # Un-chunk / un-pad + split into PyTorch-matching shapes (wrapper glue).
    head = head.reshape(nc, S, Bc, 3, G, Z).transpose(1, 0, 2, 3, 4, 5)
    head = head.reshape(S, Bp, 3, G, Z)[:, :B].reshape(S * B, 3, G, Z)
    mu = head[:, 0][:, None]        # (S*B, 1, G, Z)
    sigma = head[:, 1][:, None]
    log_pi = head[:, 2][:, None]
    h_n = h_n.reshape(Bp, H)[:B][None]
    c_n = c_n.reshape(Bp, H)[:B][None]
    return (log_pi, mu, sigma), (h_n, c_n)


# -----------------------------------------------------------------------------
# Pure-JAX reference replicating the PyTorch module exactly
# -----------------------------------------------------------------------------
def mdnrnn_reference(x, h, params, *, n_gaussian, z_size):
    W_ih, W_hh, b_ih, b_hh, Wd, bd = params
    S, B, D = x.shape
    H = W_hh.shape[1]
    G, Z = n_gaussian, z_size

    hh, cc = h[0][0], h[1][0]
    ys = []
    for t in range(S):
        gates = x[t] @ W_ih.T + hh @ W_hh.T + b_ih + b_hh
        i_g = jax.nn.sigmoid(gates[:, 0 * H:1 * H])
        f_g = jax.nn.sigmoid(gates[:, 1 * H:2 * H])
        g_g = jnp.tanh(gates[:, 2 * H:3 * H])
        o_g = jax.nn.sigmoid(gates[:, 3 * H:4 * H])
        cc = f_g * cc + i_g * g_g
        hh = o_g * jnp.tanh(cc)
        ys.append(hh)
    y = jnp.stack(ys)                                        # (S, B, H)

    d = y @ Wd.T + bd                                        # (S, B, 3*G*Z)
    d = d.reshape(S, -1, 3).transpose(2, 0, 1)               # (3, S, B*G*Z)
    mu, log_sigma, log_pi = d[0], d[1], d[2]
    shape = (-1, 1, G, Z)
    log_pi = jax.nn.log_softmax(log_pi.reshape(shape), axis=2)
    mu = mu.reshape(shape)
    sigma = jnp.exp(log_sigma.reshape(shape))
    return (log_pi, mu, sigma), (hh[None], cc[None])


# -----------------------------------------------------------------------------
# Main
# -----------------------------------------------------------------------------
if __name__ == "__main__":
    # Small MDNRNN config (n_layers=1). 3*G*Z = 384 -> lane-dense head output.
    z_size, a_size, n_hidden, n_gaussian = 32, 3, 32, 4
    seq_len, batch = 8, 2
    D = z_size + a_size
    H = n_hidden
    G, Z = n_gaussian, z_size

    key = jax.random.PRNGKey(0)
    keys = jax.random.split(key, 9)
    scale = 1.0 / np.sqrt(H)

    # Deterministic parameter init (PyTorch-convention shapes).
    W_ih = jax.random.uniform(keys[0], (4 * H, D), jnp.float32, -scale, scale)
    W_hh = jax.random.uniform(keys[1], (4 * H, H), jnp.float32, -scale, scale)
    b_ih = jax.random.uniform(keys[2], (4 * H,), jnp.float32, -scale, scale)
    b_hh = jax.random.uniform(keys[3], (4 * H,), jnp.float32, -scale, scale)
    Wd = jax.random.uniform(keys[4], (3 * G * Z, H), jnp.float32, -scale, scale)
    bd = jax.random.uniform(keys[5], (3 * G * Z,), jnp.float32, -scale, scale)
    params = (W_ih, W_hh, b_ih, b_hh, Wd, bd)

    # Inputs.
    x = jax.random.normal(keys[6], (seq_len, batch, D), jnp.float32)
    h0 = jax.random.normal(keys[7], (1, batch, H), jnp.float32) * 0.1
    c0 = jax.random.normal(keys[8], (1, batch, H), jnp.float32) * 0.1

    (log_pi, mu, sigma), (h_n, c_n) = mdnrnn_forward(
        x, (h0, c0), params, n_gaussian=n_gaussian, z_size=z_size)
    jax.block_until_ready((log_pi, mu, sigma, h_n, c_n))

    # Verify against the pure-JAX reference of the PyTorch forward.
    (lp_r, mu_r, sg_r), (h_r, c_r) = mdnrnn_reference(
        x, (h0, c0), params, n_gaussian=n_gaussian, z_size=z_size)

    assert log_pi.shape == (seq_len * batch, 1, G, Z)
    assert mu.shape == (seq_len * batch, 1, G, Z)
    assert sigma.shape == (seq_len * batch, 1, G, Z)
    assert h_n.shape == (1, batch, H) and c_n.shape == (1, batch, H)

    np.testing.assert_allclose(np.asarray(log_pi), np.asarray(lp_r), rtol=2e-3, atol=2e-3)
    np.testing.assert_allclose(np.asarray(mu), np.asarray(mu_r), rtol=2e-3, atol=2e-3)
    np.testing.assert_allclose(np.asarray(sigma), np.asarray(sg_r), rtol=2e-3, atol=2e-3)
    np.testing.assert_allclose(np.asarray(h_n), np.asarray(h_r), rtol=2e-3, atol=2e-3)
    np.testing.assert_allclose(np.asarray(c_n), np.asarray(c_r), rtol=2e-3, atol=2e-3)

    print("KERNEL_OK")
</pallas_src>

<mosaic_0001>
module attributes {stable_mosaic.version = 11 : i64} {
  func.func @mdnrnn_kernel(%arg0: i32, %arg1: memref<1x64x35xf32, #tpu.memory_space<vmem>>, %arg2: memref<1x8x32xf32, #tpu.memory_space<vmem>>, %arg3: memref<1x8x32xf32, #tpu.memory_space<vmem>>, %arg4: memref<4x35x32xf32, #tpu.memory_space<vmem>>, %arg5: memref<4x32x32xf32, #tpu.memory_space<vmem>>, %arg6: memref<4x1x32xf32, #tpu.memory_space<vmem>>, %arg7: memref<32x384xf32, #tpu.memory_space<vmem>>, %arg8: memref<1x384xf32, #tpu.memory_space<vmem>>, %arg9: memref<1x64x384xf32, #tpu.memory_space<vmem>>, %arg10: memref<1x8x32xf32, #tpu.memory_space<vmem>>, %arg11: memref<1x8x32xf32, #tpu.memory_space<vmem>>, %arg12: memref<64x32xf32, #tpu.memory_space<vmem>>, %arg13: memref<64x32xf32, #tpu.memory_space<vmem>>, %arg14: memref<64x32xf32, #tpu.memory_space<vmem>>, %arg15: memref<64x32xf32, #tpu.memory_space<vmem>>, %arg16: memref<64x32xf32, #tpu.memory_space<vmem>>) attributes {dimension_semantics = [#tpu.dimension_semantics<parallel>], iteration_bounds = array<i64: 1>, scalar_prefetch = 0 : i64, scratch_operands = 5 : i64, tpu.core_type = #tpu.core_type<tc>, window_params = [{transform_indices = @transform_0, window_bounds = array<i64: 1, 64, 35>}, {transform_indices = @transform_1, window_bounds = array<i64: 1, 8, 32>}, {transform_indices = @transform_2, window_bounds = array<i64: 1, 8, 32>}, {pipeline_mode = #tpu.pipeline_mode<synchronous>, transform_indices = @transform_3, window_bounds = array<i64: 4, 35, 32>}, {pipeline_mode = #tpu.pipeline_mode<synchronous>, transform_indices = @transform_4, window_bounds = array<i64: 4, 32, 32>}, {pipeline_mode = #tpu.pipeline_mode<synchronous>, transform_indices = @transform_5, window_bounds = array<i64: 4, 1, 32>}, {pipeline_mode = #tpu.pipeline_mode<synchronous>, transform_indices = @transform_6, window_bounds = array<i64: 32, 384>}, {pipeline_mode = #tpu.pipeline_mode<synchronous>, transform_indices = @transform_7, window_bounds = array<i64: 1, 384>}, {transform_indices = @transform_8, window_bounds = array<i64: 1, 64, 384>}, {transform_indices = @transform_9, window_bounds = array<i64: 1, 8, 32>}, {transform_indices = @transform_10, window_bounds = array<i64: 1, 8, 32>}]} {
    %c0 = arith.constant 0 : index
    %c0_0 = arith.constant 0 : index
    %c0_1 = arith.constant 0 : index
    %0 = vector.load %arg1[%c0, %c0_0, %c0_1] : memref<1x64x35xf32, #tpu.memory_space<vmem>>, vector<1x64x35xf32>
    %1 = vector.shape_cast %0 : vector<1x64x35xf32> to vector<64x35xf32>
    %c0_2 = arith.constant 0 : index
    %c0_3 = arith.constant 0 : index
    %c0_4 = arith.constant 0 : index
    %2 = vector.load %arg4[%c0_2, %c0_3, %c0_4] : memref<4x35x32xf32, #tpu.memory_space<vmem>>, vector<1x35x32xf32>
    %3 = vector.shape_cast %2 : vector<1x35x32xf32> to vector<35x32xf32>
    %cst = arith.constant dense<0.000000e+00> : vector<64x32xf32>
    %4 = tpu.matmul %1, %3, %cst {dimension_numbers = #tpu.dot_dimension_numbers<[1], [0], [0], [1], [0, 0, 1, 1], [], []>} : vector<64x35xf32>, vector<35x32xf32>, vector<64x32xf32> -> vector<64x32xf32>
    %c0_5 = arith.constant 0 : index
    %c0_6 = arith.constant 0 : index
    %c0_7 = arith.constant 0 : index
    %5 = vector.load %arg6[%c0_5, %c0_6, %c0_7] : memref<4x1x32xf32, #tpu.memory_space<vmem>>, vector<1x1x32xf32>
    %6 = vector.shape_cast %5 : vector<1x1x32xf32> to vector<1x32xf32>
    %7 = vector.broadcast %6 : vector<1x32xf32> to vector<64x32xf32>
    %8 = arith.addf %4, %7 : vector<64x32xf32>
    %c0_8 = arith.constant 0 : index
    %c0_9 = arith.constant 0 : index
    %9 = vector.load %arg12[%c0_8, %c0_9] : memref<64x32xf32, #tpu.memory_space<vmem>>, vector<64x32xf32>
    tpu.vector_store %arg12[%c0_8, %c0_9], %8 {strides = array<i32>} : memref<64x32xf32, #tpu.memory_space<vmem>>, vector<64x32xf32>,
    %c1 = arith.constant 1 : index
    %c0_10 = arith.constant 0 : index
    %c0_11 = arith.constant 0 : index
    %10 = vector.load %arg4[%c1, %c0_10, %c0_11] : memref<4x35x32xf32, #tpu.memory_space<vmem>>, vector<1x35x32xf32>
    %11 = vector.shape_cast %10 : vector<1x35x32xf32> to vector<35x32xf32>
    %cst_12 = arith.constant dense<0.000000e+00> : vector<64x32xf32>
    %12 = tpu.matmul %1, %11, %cst_12 {dimension_numbers = #tpu.dot_dimension_numbers<[1], [0], [0], [1], [0, 0, 1, 1], [], []>} : vector<64x35xf32>, vector<35x32xf32>, vector<64x32xf32> -> vector<64x32xf32>
    %c1_13 = arith.constant 1 : index
    %c0_14 = arith.constant 0 : index
    %c0_15 = arith.constant 0 : index
    %13 = vector.load %arg6[%c1_13, %c0_14, %c0_15] : memref<4x1x32xf32, #tpu.memory_space<vmem>>, vector<1x1x32xf32>
    %14 = vector.shape_cast %13 : vector<1x1x32xf32> to vector<1x32xf32>
    %15 = vector.broadcast %14 : vector<1x32xf32> to vector<64x32xf32>
    %16 = arith.addf %12, %15 : vector<64x32xf32>
    %c0_16 = arith.constant 0 : index
    %c0_17 = arith.constant 0 : index
    %17 = vector.load %arg13[%c0_16, %c0_17] : memref<64x32xf32, #tpu.memory_space<vmem>>, vector<64x32xf32>
    tpu.vector_store %arg13[%c0_16, %c0_17], %16 {strides = array<i32>} : memref<64x32xf32, #tpu.memory_space<vmem>>, vector<64x32xf32>,
    %c2 = arith.constant 2 : index
    %c0_18 = arith.constant 0 : index
    %c0_19 = arith.constant 0 : index
    %18 = vector.load %arg4[%c2, %c0_18, %c0_19] : memref<4x35x32xf32, #tpu.memory_space<vmem>>, vector<1x35x32xf32>
    %19 = vector.shape_cast %18 : vector<1x35x32xf32> to vector<35x32xf32>
    %cst_20 = arith.constant dense<0.000000e+00> : vector<64x32xf32>
    %20 = tpu.matmul %1, %19, %cst_20 {dimension_numbers = #tpu.dot_dimension_numbers<[1], [0], [0], [1], [0, 0, 1, 1], [], []>} : vector<64x35xf32>, vector<35x32xf32>, vector<64x32xf32> -> vector<64x32xf32>
    %c2_21 = arith.constant 2 : index
    %c0_22 = arith.constant 0 : index
    %c0_23 = arith.constant 0 : index
    %21 = vector.load %arg6[%c2_21, %c0_22, %c0_23] : memref<4x1x32xf32, #tpu.memory_space<vmem>>, vector<1x1x32xf32>
    %22 = vector.shape_cast %21 : vector<1x1x32xf32> to vector<1x32xf32>
    %23 = vector.broadcast %22 : vector<1x32xf32> to vector<64x32xf32>
    %24 = arith.addf %20, %23 : vector<64x32xf32>
    %c0_24 = arith.constant 0 : index
    %c0_25 = arith.constant 0 : index
    %25 = vector.load %arg14[%c0_24, %c0_25] : memref<64x32xf32, #tpu.memory_space<vmem>>, vector<64x32xf32>
    tpu.vector_store %arg14[%c0_24, %c0_25], %24 {strides = array<i32>} : memref<64x32xf32, #tpu.memory_space<vmem>>, vector<64x32xf32>,
    %c3 = arith.constant 3 : index
    %c0_26 = arith.constant 0 : index
    %c0_27 = arith.constant 0 : index
    %26 = vector.load %arg4[%c3, %c0_26, %c0_27] : memref<4x35x32xf32, #tpu.memory_space<vmem>>, vector<1x35x32xf32>
    %27 = vector.shape_cast %26 : vector<1x35x32xf32> to vector<35x32xf32>
    %cst_28 = arith.constant dense<0.000000e+00> : vector<64x32xf32>
    %28 = tpu.matmul %1, %27, %cst_28 {dimension_numbers = #tpu.dot_dimension_numbers<[1], [0], [0], [1], [0, 0, 1, 1], [], []>} : vector<64x35xf32>, vector<35x32xf32>, vector<64x32xf32> -> vector<64x32xf32>
    %c3_29 = arith.constant 3 : index
    %c0_30 = arith.constant 0 : index
    %c0_31 = arith.constant 0 : index
    %29 = vector.load %arg6[%c3_29, %c0_30, %c0_31] : memref<4x1x32xf32, #tpu.memory_space<vmem>>, vector<1x1x32xf32>
    %30 = vector.shape_cast %29 : vector<1x1x32xf32> to vector<1x32xf32>
    %31 = vector.broadcast %30 : vector<1x32xf32> to vector<64x32xf32>
    %32 = arith.addf %28, %31 : vector<64x32xf32>
    %c0_32 = arith.constant 0 : index
    %c0_33 = arith.constant 0 : index
    %33 = vector.load %arg15[%c0_32, %c0_33] : memref<64x32xf32, #tpu.memory_space<vmem>>, vector<64x32xf32>
    tpu.vector_store %arg15[%c0_32, %c0_33], %32 {strides = array<i32>} : memref<64x32xf32, #tpu.memory_space<vmem>>, vector<64x32xf32>,
    %c0_34 = arith.constant 0 : index
    %c0_35 = arith.constant 0 : index
    %c0_36 = arith.constant 0 : index
    %34 = vector.load %arg5[%c0_34, %c0_35, %c0_36] : memref<4x32x32xf32, #tpu.memory_space<vmem>>, vector<1x32x32xf32>
    %35 = vector.shape_cast %34 : vector<1x32x32xf32> to vector<32x32xf32>
    %c1_37 = arith.constant 1 : index
    %c0_38 = arith.constant 0 : index
    %c0_39 = arith.constant 0 : index
    %36 = vector.load %arg5[%c1_37, %c0_38, %c0_39] : memref<4x32x32xf32, #tpu.memory_space<vmem>>, vector<1x32x32xf32>
    %37 = vector.shape_cast %36 : vector<1x32x32xf32> to vector<32x32xf32>
    %c2_40 = arith.constant 2 : index
    %c0_41 = arith.constant 0 : index
    %c0_42 = arith.constant 0 : index
    %38 = vector.load %arg5[%c2_40, %c0_41, %c0_42] : memref<4x32x32xf32, #tpu.memory_space<vmem>>, vector<1x32x32xf32>
    %39 = vector.shape_cast %38 : vector<1x32x32xf32> to vector<32x32xf32>
    %c3_43 = arith.constant 3 : index
    %c0_44 = arith.constant 0 : index
    %c0_45 = arith.constant 0 : index
    %40 = vector.load %arg5[%c3_43, %c0_44, %c0_45] : memref<4x32x32xf32, #tpu.memory_space<vmem>>, vector<1x32x32xf32>
    %41 = vector.shape_cast %40 : vector<1x32x32xf32> to vector<32x32xf32>
    %c0_46 = arith.constant 0 : index
    %c0_47 = arith.constant 0 : index
    %c0_48 = arith.constant 0 : index
    %42 = vector.load %arg2[%c0_46, %c0_47, %c0_48] : memref<1x8x32xf32, #tpu.memory_space<vmem>>, vector<1x8x32xf32>
    %43 = vector.shape_cast %42 : vector<1x8x32xf32> to vector<8x32xf32>
    %c0_49 = arith.constant 0 : index
    %c0_50 = arith.constant 0 : index
    %c0_51 = arith.constant 0 : index
    %44 = vector.load %arg3[%c0_49, %c0_50, %c0_51] : memref<1x8x32xf32, #tpu.memory_space<vmem>>, vector<1x8x32xf32>
    %45 = vector.shape_cast %44 : vector<1x8x32xf32> to vector<8x32xf32>
    %c0_i32 = arith.constant 0 : i32
    %c8_i32 = arith.constant 8 : i32
    %46 = arith.muli %c0_i32, %c8_i32 : i32
    %47 = tpu.assume_multiple %46, 8 : i32
    %48 = arith.index_cast %47 : i32 to index
    %c0_52 = arith.constant 0 : index
    %49 = vector.load %arg12[%48, %c0_52] : memref<64x32xf32, #tpu.memory_space<vmem>>, vector<8x32xf32>
    %cst_53 = arith.constant dense<0.000000e+00> : vector<8x32xf32>
    %50 = tpu.matmul %43, %35, %cst_53 {dimension_numbers = #tpu.dot_dimension_numbers<[1], [0], [0], [1], [0, 0, 1, 1], [], []>} : vector<8x32xf32>, vector<32x32xf32>, vector<8x32xf32> -> vector<8x32xf32>
    %51 = arith.addf %49, %50 : vector<8x32xf32>
    %52 = arith.negf %51 : vector<8x32xf32>
    %53 = math.exp %52 : vector<8x32xf32>
    %cst_54 = arith.constant 1.000000e+00 : f32
    %54 = vector.broadcast %cst_54 : f32 to vector<8x32xf32>
    %55 = arith.addf %54, %53 : vector<8x32xf32>
    %56 = arith.divf %54, %55 : vector<8x32xf32>
    %57 = arith.index_cast %47 : i32 to index
    %c0_55 = arith.constant 0 : index
    %58 = vector.load %arg13[%57, %c0_55] : memref<64x32xf32, #tpu.memory_space<vmem>>, vector<8x32xf32>
    %cst_56 = arith.constant dense<0.000000e+00> : vector<8x32xf32>
    %59 = tpu.matmul %43, %37, %cst_56 {dimension_numbers = #tpu.dot_dimension_numbers<[1], [0], [0], [1], [0, 0, 1, 1], [], []>} : vector<8x32xf32>, vector<32x32xf32>, vector<8x32xf32> -> vector<8x32xf32>
    %60 = arith.addf %58, %59 : vector<8x32xf32>
    %61 = arith.negf %60 : vector<8x32xf32>
    %62 = math.exp %61 : vector<8x32xf32>
    %cst_57 = arith.constant 1.000000e+00 : f32
    %63 = vector.broadcast %cst_57 : f32 to vector<8x32xf32>
    %64 = arith.addf %63, %62 : vector<8x32xf32>
    %65 = arith.divf %63, %64 : vector<8x32xf32>
    %66 = arith.index_cast %47 : i32 to index
    %c0_58 = arith.constant 0 : index
    %67 = vector.load %arg14[%66, %c0_58] : memref<64x32xf32, #tpu.memory_space<vmem>>, vector<8x32xf32>
    %cst_59 = arith.constant dense<0.000000e+00> : vector<8x32xf32>
    %68 = tpu.matmul %43, %39, %cst_59 {dimension_numbers = #tpu.dot_dimension_numbers<[1], [0], [0], [1], [0, 0, 1, 1], [], []>} : vector<8x32xf32>, vector<32x32xf32>, vector<8x32xf32> -> vector<8x32xf32>
    %69 = arith.addf %67, %68 : vector<8x32xf32>
    %70 = math.tanh %69 : vector<8x32xf32>
    %71 = arith.index_cast %47 : i32 to index
    %c0_60 = arith.constant 0 : index
    %72 = vector.load %arg15[%71, %c0_60] : memref<64x32xf32, #tpu.memory_space<vmem>>, vector<8x32xf32>
    %cst_61 = arith.constant dense<0.000000e+00> : vector<8x32xf32>
    %73 = tpu.matmul %43, %41, %cst_61 {dimension_numbers = #tpu.dot_dimension_numbers<[1], [0], [0], [1], [0, 0, 1, 1], [], []>} : vector<8x32xf32>, vector<32x32xf32>, vector<8x32xf32> -> vector<8x32xf32>
    %74 = arith.addf %72, %73 : vector<8x32xf32>
    %75 = arith.negf %74 : vector<8x32xf32>
    %76 = math.exp %75 : vector<8x32xf32>
    %cst_62 = arith.constant 1.000000e+00 : f32
    %77 = vector.broadcast %cst_62 : f32 to vector<8x32xf32>
    %78 = arith.addf %77, %76 : vector<8x32xf32>
    %79 = arith.divf %77, %78 : vector<8x32xf32>
    %80 = arith.mulf %65, %45 : vector<8x32xf32>
    %81 = arith.mulf %56, %70 : vector<8x32xf32>
    %82 = arith.addf %80, %81 : vector<8x32xf32>
    %83 = math.tanh %82 : vector<8x32xf32>
    %84 = arith.mulf %79, %83 : vector<8x32xf32>
    %85 = arith.index_cast %47 : i32 to index
    %c0_63 = arith.constant 0 : index
    %86 = vector.load %arg16[%85, %c0_63] : memref<64x32xf32, #tpu.memory_space<vmem>>, vector<8x32xf32>
    tpu.vector_store %arg16[%85, %c0_63], %84 {strides = array<i32>} : memref<64x32xf32, #tpu.memory_space<vmem>>, vector<8x32xf32>,
    %c1_i32 = arith.constant 1 : i32
    %c8_i32_64 = arith.constant 8 : i32
    %87 = arith.muli %c1_i32, %c8_i32_64 : i32
    %88 = tpu.assume_multiple %87, 8 : i32
    %89 = arith.index_cast %88 : i32 to index
    %c0_65 = arith.constant 0 : index
    %90 = vector.load %arg12[%89, %c0_65] : memref<64x32xf32, #tpu.memory_space<vmem>>, vector<8x32xf32>
    %cst_66 = arith.constant dense<0.000000e+00> : vector<8x32xf32>
    %91 = tpu.matmul %84, %35, %cst_66 {dimension_numbers = #tpu.dot_dimension_numbers<[1], [0], [0], [1], [0, 0, 1, 1], [], []>} : vector<8x32xf32>, vector<32x32xf32>, vector<8x32xf32> -> vector<8x32xf32>
    %92 = arith.addf %90, %91 : vector<8x32xf32>
    %93 = arith.negf %92 : vector<8x32xf32>
    %94 = math.exp %93 : vector<8x32xf32>
    %cst_67 = arith.constant 1.000000e+00 : f32
    %95 = vector.broadcast %cst_67 : f32 to vector<8x32xf32>
    %96 = arith.addf %95, %94 : vector<8x32xf32>
    %97 = arith.divf %95, %96 : vector<8x32xf32>
    %98 = arith.index_cast %88 : i32 to index
    %c0_68 = arith.constant 0 : index
    %99 = vector.load %arg13[%98, %c0_68] : memref<64x32xf32, #tpu.memory_space<vmem>>, vector<8x32xf32>
    %cst_69 = arith.constant dense<0.000000e+00> : vector<8x32xf32>
    %100 = tpu.matmul %84, %37, %cst_69 {dimension_numbers = #tpu.dot_dimension_numbers<[1], [0], [0], [1], [0, 0, 1, 1], [], []>} : vector<8x32xf32>, vector<32x32xf32>, vector<8x32xf32> -> vector<8x32xf32>
    %101 = arith.addf %99, %100 : vector<8x32xf32>
    %102 = arith.negf %101 : vector<8x32xf32>
    %103 = math.exp %102 : vector<8x32xf32>
    %cst_70 = arith.constant 1.000000e+00 : f32
    %104 = vector.broadcast %cst_70 : f32 to vector<8x32xf32>
    %105 = arith.addf %104, %103 : vector<8x32xf32>
    %106 = arith.divf %104, %105 : vector<8x32xf32>
    %107 = arith.index_cast %88 : i32 to index
    %c0_71 = arith.constant 0 : index
    %108 = vector.load %arg14[%107, %c0_71] : memref<64x32xf32, #tpu.memory_space<vmem>>, vector<8x32xf32>
    %cst_72 = arith.constant dense<0.000000e+00> : vector<8x32xf32>
    %109 = tpu.matmul %84, %39, %cst_72 {dimension_numbers = #tpu.dot_dimension_numbers<[1], [0], [0], [1], [0, 0, 1, 1], [], []>} : vector<8x32xf32>, vector<32x32xf32>, vector<8x32xf32> -> vector<8x32xf32>
    %110 = arith.addf %108, %109 : vector<8x32xf32>
    %111 = math.tanh %110 : vector<8x32xf32>
    %112 = arith.index_cast %88 : i32 to index
    %c0_73 = arith.constant 0 : index
    %113 = vector.load %arg15[%112, %c0_73] : memref<64x32xf32, #tpu.memory_space<vmem>>, vector<8x32xf32>
    %cst_74 = arith.constant dense<0.000000e+00> : vector<8x32xf32>
    %114 = tpu.matmul %84, %41, %cst_74 {dimension_numbers = #tpu.dot_dimension_numbers<[1], [0], [0], [1], [0, 0, 1, 1], [], []>} : vector<8x32xf32>, vector<32x32xf32>, vector<8x32xf32> -> vector<8x32xf32>
    %115 = arith.addf %113, %114 : vector<8x32xf32>
    %116 = arith.negf %115 : vector<8x32xf32>
    %117 = math.exp %116 : vector<8x32xf32>
    %cst_75 = arith.constant 1.000000e+00 : f32
    %118 = vector.broadcast %cst_75 : f32 to vector<8x32xf32>
    %119 = arith.addf %118, %117 : vector<8x32xf32>
    %120 = arith.divf %118, %119 : vector<8x32xf32>
    %121 = arith.mulf %106, %82 : vector<8x32xf32>
    %122 = arith.mulf %97, %111 : vector<8x32xf32>
    %123 = arith.addf %121, %122 : vector<8x32xf32>
    %124 = math.tanh %123 : vector<8x32xf32>
    %125 = arith.mulf %120, %124 : vector<8x32xf32>
    %126 = arith.index_cast %88 : i32 to index
    %c0_76 = arith.constant 0 : index
    %127 = vector.load %arg16[%126, %c0_76] : memref<64x32xf32, #tpu.memory_space<vmem>>, vector<8x32xf32>
    tpu.vector_store %arg16[%126, %c0_76], %125 {strides = array<i32>} : memref<64x32xf32, #tpu.memory_space<vmem>>, vector<8x32xf32>,
    %c2_i32 = arith.constant 2 : i32
    %c8_i32_77 = arith.constant 8 : i32
    %128 = arith.muli %c2_i32, %c8_i32_77 : i32
    %129 = tpu.assume_multiple %128, 8 : i32
    %130 = arith.index_cast %129 : i32 to index
    %c0_78 = arith.constant 0 : index
    %131 = vector.load %arg12[%130, %c0_78] : memref<64x32xf32, #tpu.memory_space<vmem>>, vector<8x32xf32>
    %cst_79 = arith.constant dense<0.000000e+00> : vector<8x32xf32>
    %132 = tpu.matmul %125, %35, %cst_79 {dimension_numbers = #tpu.dot_dimension_numbers<[1], [0], [0], [1], [0, 0, 1, 1], [], []>} : vector<8x32xf32>, vector<32x32xf32>, vector<8x32xf32> -> vector<8x32xf32>
    %133 = arith.addf %131, %132 : vector<8x32xf32>
    %134 = arith.negf %133 : vector<8x32xf32>
    %135 = math.exp %134 : vector<8x32xf32>
    %cst_80 = arith.constant 1.000000e+00 : f32
    %136 = vector.broadcast %cst_80 : f32 to vector<8x32xf32>
    %137 = arith.addf %136, %135 : vector<8x32xf32>
    %138 = arith.divf %136, %137 : vector<8x32xf32>
    %139 = arith.index_cast %129 : i32 to index
    %c0_81 = arith.constant 0 : index
    %140 = vector.load %arg13[%139, %c0_81] : memref<64x32xf32, #tpu.memory_space<vmem>>, vector<8x32xf32>
    %cst_82 = arith.constant dense<0.000000e+00> : vector<8x32xf32>
    %141 = tpu.matmul %125, %37, %cst_82 {dimension_numbers = #tpu.dot_dimension_numbers<[1], [0], [0], [1], [0, 0, 1, 1], [], []>} : vector<8x32xf32>, vector<32x32xf32>, vector<8x32xf32> -> vector<8x32xf32>
    %142 = arith.addf %140, %141 : vector<8x32xf32>
    %143 = arith.negf %142 : vector<8x32xf32>
    %144 = math.exp %143 : vector<8x32xf32>
    %cst_83 = arith.constant 1.000000e+00 : f32
    %145 = vector.broadcast %cst_83 : f32 to vector<8x32xf32>
    %146 = arith.addf %145, %144 : vector<8x32xf32>
    %147 = arith.divf %145, %146 : vector<8x32xf32>
    %148 = arith.index_cast %129 : i32 to index
    %c0_84 = arith.constant 0 : index
    %149 = vector.load %arg14[%148, %c0_84] : memref<64x32xf32, #tpu.memory_space<vmem>>, vector<8x32xf32>
    %cst_85 = arith.constant dense<0.000000e+00> : vector<8x32xf32>
    %150 = tpu.matmul %125, %39, %cst_85 {dimension_numbers = #tpu.dot_dimension_numbers<[1], [0], [0], [1], [0, 0, 1, 1], [], []>} : vector<8x32xf32>, vector<32x32xf32>, vector<8x32xf32> -> vector<8x32xf32>
    %151 = arith.addf %149, %150 : vector<8x32xf32>
    %152 = math.tanh %151 : vector<8x32xf32>
    %153 = arith.index_cast %129 : i32 to index
    %c0_86 = arith.constant 0 : index
    %154 = vector.load %arg15[%153, %c0_86] : memref<64x32xf32, #tpu.memory_space<vmem>>, vector<8x32xf32>
    %cst_87 = arith.constant dense<0.000000e+00> : vector<8x32xf32>
    %155 = tpu.matmul %125, %41, %cst_87 {dimension_numbers = #tpu.dot_dimension_numbers<[1], [0], [0], [1], [0, 0, 1, 1], [], []>} : vector<8x32xf32>, vector<32x32xf32>, vector<8x32xf32> -> vector<8x32xf32>
    %156 = arith.addf %154, %155 : vector<8x32xf32>
    %157 = arith.negf %156 : vector<8x32xf32>
    %158 = math.exp %157 : vector<8x32xf32>
    %cst_88 = arith.constant 1.000000e+00 : f32
    %159 = vector.broadcast %cst_88 : f32 to vector<8x32xf32>
    %160 = arith.addf %159, %158 : vector<8x32xf32>
    %161 = arith.divf %159, %160 : vector<8x32xf32>
    %162 = arith.mulf %147, %123 : vector<8x32xf32>
    %163 = arith.mulf %138, %152 : vector<8x32xf32>
    %164 = arith.addf %162, %163 : vector<8x32xf32>
    %165 = math.tanh %164 : vector<8x32xf32>
    %166 = arith.mulf %161, %165 : vector<8x32xf32>
    %167 = arith.index_cast %129 : i32 to index
    %c0_89 = arith.constant 0 : index
    %168 = vector.load %arg16[%167, %c0_89] : memref<64x32xf32, #tpu.memory_space<vmem>>, vector<8x32xf32>
    tpu.vector_store %arg16[%167, %c0_89], %166 {strides = array<i32>} : memref<64x32xf32, #tpu.memory_space<vmem>>, vector<8x32xf32>,
    %c3_i32 = arith.constant 3 : i32
    %c8_i32_90 = arith.constant 8 : i32
    %169 = arith.muli %c3_i32, %c8_i32_90 : i32
    %170 = tpu.assume_multiple %169, 8 : i32
    %171 = arith.index_cast %170 : i32 to index
    %c0_91 = arith.constant 0 : index
    %172 = vector.load %arg12[%171, %c0_91] : memref<64x32xf32, #tpu.memory_space<vmem>>, vector<8x32xf32>
    %cst_92 = arith.constant dense<0.000000e+00> : vector<8x32xf32>
    %173 = tpu.matmul %166, %35, %cst_92 {dimension_numbers = #tpu.dot_dimension_numbers<[1], [0], [0], [1], [0, 0, 1, 1], [], []>} : vector<8x32xf32>, vector<32x32xf32>, vector<8x32xf32> -> vector<8x32xf32>
    %174 = arith.addf %172, %173 : vector<8x32xf32>
    %175 = arith.negf %174 : vector<8x32xf32>
    %176 = math.exp %175 : vector<8x32xf32>
    %cst_93 = arith.constant 1.000000e+00 : f32
    %177 = vector.broadcast %cst_93 : f32 to vector<8x32xf32>
    %178 = arith.addf %177, %176 : vector<8x32xf32>
    %179 = arith.divf %177, %178 : vector<8x32xf32>
    %180 = arith.index_cast %170 : i32 to index
    %c0_94 = arith.constant 0 : index
    %181 = vector.load %arg13[%180, %c0_94] : memref<64x32xf32, #tpu.memory_space<vmem>>, vector<8x32xf32>
    %cst_95 = arith.constant dense<0.000000e+00> : vector<8x32xf32>
    %182 = tpu.matmul %166, %37, %cst_95 {dimension_numbers = #tpu.dot_dimension_numbers<[1], [0], [0], [1], [0, 0, 1, 1], [], []>} : vector<8x32xf32>, vector<32x32xf32>, vector<8x32xf32> -> vector<8x32xf32>
    %183 = arith.addf %181, %182 : vector<8x32xf32>
    %184 = arith.negf %183 : vector<8x32xf32>
    %185 = math.exp %184 : vector<8x32xf32>
    %cst_96 = arith.constant 1.000000e+00 : f32
    %186 = vector.broadcast %cst_96 : f32 to vector<8x32xf32>
    %187 = arith.addf %186, %185 : vector<8x32xf32>
    %188 = arith.divf %186, %187 : vector<8x32xf32>
    %189 = arith.index_cast %170 : i32 to index
    %c0_97 = arith.constant 0 : index
    %190 = vector.load %arg14[%189, %c0_97] : memref<64x32xf32, #tpu.memory_space<vmem>>, vector<8x32xf32>
    %cst_98 = arith.constant dense<0.000000e+00> : vector<8x32xf32>
    %191 = tpu.matmul %166, %39, %cst_98 {dimension_numbers = #tpu.dot_dimension_numbers<[1], [0], [0], [1], [0, 0, 1, 1], [], []>} : vector<8x32xf32>, vector<32x32xf32>, vector<8x32xf32> -> vector<8x32xf32>
    %192 = arith.addf %190, %191 : vector<8x32xf32>
    %193 = math.tanh %192 : vector<8x32xf32>
    %194 = arith.index_cast %170 : i32 to index
    %c0_99 = arith.constant 0 : index
    %195 = vector.load %arg15[%194, %c0_99] : memref<64x32xf32, #tpu.memory_space<vmem>>, vector<8x32xf32>
    %cst_100 = arith.constant dense<0.000000e+00> : vector<8x32xf32>
    %196 = tpu.matmul %166, %41, %cst_100 {dimension_numbers = #tpu.dot_dimension_numbers<[1], [0], [0], [1], [0, 0, 1, 1], [], []>} : vector<8x32xf32>, vector<32x32xf32>, vector<8x32xf32> -> vector<8x32xf32>
    %197 = arith.addf %195, %196 : vector<8x32xf32>
    %198 = arith.negf %197 : vector<8x32xf32>
    %199 = math.exp %198 : vector<8x32xf32>
    %cst_101 = arith.constant 1.000000e+00 : f32
    %200 = vector.broadcast %cst_101 : f32 to vector<8x32xf32>
    %201 = arith.addf %200, %199 : vector<8x32xf32>
    %202 = arith.divf %200, %201 : vector<8x32xf32>
    %203 = arith.mulf %188, %164 : vector<8x32xf32>
    %204 = arith.mulf %179, %193 : vector<8x32xf32>
    %205 = arith.addf %203, %204 : vector<8x32xf32>
    %206 = math.tanh %205 : vector<8x32xf32>
    %207 = arith.mulf %202, %206 : vector<8x32xf32>
    %208 = arith.index_cast %170 : i32 to index
    %c0_102 = arith.constant 0 : index
    %209 = vector.load %arg16[%208, %c0_102] : memref<64x32xf32, #tpu.memory_space<vmem>>, vector<8x32xf32>
    tpu.vector_store %arg16[%208, %c0_102], %207 {strides = array<i32>} : memref<64x32xf32, #tpu.memory_space<vmem>>, vector<8x32xf32>,
    %c4_i32 = arith.constant 4 : i32
    %c8_i32_103 = arith.constant 8 : i32
    %210 = arith.muli %c4_i32, %c8_i32_103 : i32
    %211 = tpu.assume_multiple %210, 8 : i32
    %212 = arith.index_cast %211 : i32 to index
    %c0_104 = arith.constant 0 : index
    %213 = vector.load %arg12[%212, %c0_104] : memref<64x32xf32, #tpu.memory_space<vmem>>, vector<8x32xf32>
    %cst_105 = arith.constant dense<0.000000e+00> : vector<8x32xf32>
    %214 = tpu.matmul %207, %35, %cst_105 {dimension_numbers = #tpu.dot_dimension_numbers<[1], [0], [0], [1], [0, 0, 1, 1], [], []>} : vector<8x32xf32>, vector<32x32xf32>, vector<8x32xf32> -> vector<8x32xf32>
    %215 = arith.addf %213, %214 : vector<8x32xf32>
    %216 = arith.negf %215 : vector<8x32xf32>
    %217 = math.exp %216 : vector<8x32xf32>
    %cst_106 = arith.constant 1.000000e+00 : f32
    %218 = vector.broadcast %cst_106 : f32 to vector<8x32xf32>
    %219 = arith.addf %218, %217 : vector<8x32xf32>
    %220 = arith.divf %218, %219 : vector<8x32xf32>
    %221 = arith.index_cast %211 : i32 to index
    %c0_107 = arith.constant 0 : index
    %222 = vector.load %arg13[%221, %c0_107] : memref<64x32xf32, #tpu.memory_space<vmem>>, vector<8x32xf32>
    %cst_108 = arith.constant dense<0.000000e+00> : vector<8x32xf32>
    %223 = tpu.matmul %207, %37, %cst_108 {dimension_numbers = #tpu.dot_dimension_numbers<[1], [0], [0], [1], [0, 0, 1, 1], [], []>} : vector<8x32xf32>, vector<32x32xf32>, vector<8x32xf32> -> vector<8x32xf32>
    %224 = arith.addf %222, %223 : vector<8x32xf32>
    %225 = arith.negf %224 : vector<8x32xf32>
    %226 = math.exp %225 : vector<8x32xf32>
    %cst_109 = arith.constant 1.000000e+00 : f32
    %227 = vector.broadcast %cst_109 : f32 to vector<8x32xf32>
    %228 = arith.addf %227, %226 : vector<8x32xf32>
    %229 = arith.divf %227, %228 : vector<8x32xf32>
    %230 = arith.index_cast %211 : i32 to index
    %c0_110 = arith.constant 0 : index
    %231 = vector.load %arg14[%230, %c0_110] : memref<64x32xf32, #tpu.memory_space<vmem>>, vector<8x32xf32>
    %cst_111 = arith.constant dense<0.000000e+00> : vector<8x32xf32>
    %232 = tpu.matmul %207, %39, %cst_111 {dimension_numbers = #tpu.dot_dimension_numbers<[1], [0], [0], [1], [0, 0, 1, 1], [], []>} : vector<8x32xf32>, vector<32x32xf32>, vector<8x32xf32> -> vector<8x32xf32>
    %233 = arith.addf %231, %232 : vector<8x32xf32>
    %234 = math.tanh %233 : vector<8x32xf32>
    %235 = arith.index_cast %211 : i32 to index
    %c0_112 = arith.constant 0 : index
    %236 = vector.load %arg15[%235, %c0_112] : memref<64x32xf32, #tpu.memory_space<vmem>>, vector<8x32xf32>
    %cst_113 = arith.constant dense<0.000000e+00> : vector<8x32xf32>
    %237 = tpu.matmul %207, %41, %cst_113 {dimension_numbers = #tpu.dot_dimension_numbers<[1], [0], [0], [1], [0, 0, 1, 1], [], []>} : vector<8x32xf32>, vector<32x32xf32>, vector<8x32xf32> -> vector<8x32xf32>
    %238 = arith.addf %236, %237 : vector<8x32xf32>
    %239 = arith.negf %238 : vector<8x32xf32>
    %240 = math.exp %239 : vector<8x32xf32>
    %cst_114 = arith.constant 1.000000e+00 : f32
    %241 = vector.broadcast %cst_114 : f32 to vector<8x32xf32>
    %242 = arith.addf %241, %240 : vector<8x32xf32>
    %243 = arith.divf %241, %242 : vector<8x32xf32>
    %244 = arith.mulf %229, %205 : vector<8x32xf32>
    %245 = arith.mulf %220, %234 : vector<8x32xf32>
    %246 = arith.addf %244, %245 : vector<8x32xf32>
    %247 = math.tanh %246 : vector<8x32xf32>
    %248 = arith.mulf %243, %247 : vector<8x32xf32>
    %249 = arith.index_cast %211 : i32 to index
    %c0_115 = arith.constant 0 : index
    %250 = vector.load %arg16[%249, %c0_115] : memref<64x32xf32, #tpu.memory_space<vmem>>, vector<8x32xf32>
    tpu.vector_store %arg16[%249, %c0_115], %248 {strides = array<i32>} : memref<64x32xf32, #tpu.memory_space<vmem>>, vector<8x32xf32>,
    %c5_i32 = arith.constant 5 : i32
    %c8_i32_116 = arith.constant 8 : i32
    %251 = arith.muli %c5_i32, %c8_i32_116 : i32
    %252 = tpu.assume_multiple %251, 8 : i32
    %253 = arith.index_cast %252 : i32 to index
    %c0_117 = arith.constant 0 : index
    %254 = vector.load %arg12[%253, %c0_117] : memref<64x32xf32, #tpu.memory_space<vmem>>, vector<8x32xf32>
    %cst_118 = arith.constant dense<0.000000e+00> : vector<8x32xf32>
    %255 = tpu.matmul %248, %35, %cst_118 {dimension_numbers = #tpu.dot_dimension_numbers<[1], [0], [0], [1], [0, 0, 1, 1], [], []>} : vector<8x32xf32>, vector<32x32xf32>, vector<8x32xf32> -> vector<8x32xf32>
    %256 = arith.addf %254, %255 : vector<8x32xf32>
    %257 = arith.negf %256 : vector<8x32xf32>
    %258 = math.exp %257 : vector<8x32xf32>
    %cst_119 = arith.constant 1.000000e+00 : f32
    %259 = vector.broadcast %cst_119 : f32 to vector<8x32xf32>
    %260 = arith.addf %259, %258 : vector<8x32xf32>
    %261 = arith.divf %259, %260 : vector<8x32xf32>
    %262 = arith.index_cast %252 : i32 to index
    %c0_120 = arith.constant 0 : index
    %263 = vector.load %arg13[%262, %c0_120] : memref<64x32xf32, #tpu.memory_space<vmem>>, vector<8x32xf32>
    %cst_121 = arith.constant dense<0.000000e+00> : vector<8x32xf32>
    %264 = tpu.matmul %248, %37, %cst_121 {dimension_numbers = #tpu.dot_dimension_numbers<[1], [0], [0], [1], [0, 0, 1, 1], [], []>} : vector<8x32xf32>, vector<32x32xf32>, vector<8x32xf32> -> vector<8x32xf32>
    %265 = arith.addf %263, %264 : vector<8x32xf32>
    %266 = arith.negf %265 : vector<8x32xf32>
    %267 = math.exp %266 : vector<8x32xf32>
    %cst_122 = arith.constant 1.000000e+00 : f32
    %268 = vector.broadcast %cst_122 : f32 to vector<8x32xf32>
    %269 = arith.addf %268, %267 : vector<8x32xf32>
    %270 = arith.divf %268, %269 : vector<8x32xf32>
    %271 = arith.index_cast %252 : i32 to index
    %c0_123 = arith.constant 0 : index
    %272 = vector.load %arg14[%271, %c0_123] : memref<64x32xf32, #tpu.memory_space<vmem>>, vector<8x32xf32>
    %cst_124 = arith.constant dense<0.000000e+00> : vector<8x32xf32>
    %273 = tpu.matmul %248, %39, %cst_124 {dimension_numbers = #tpu.dot_dimension_numbers<[1], [0], [0], [1], [0, 0, 1, 1], [], []>} : vector<8x32xf32>, vector<32x32xf32>, vector<8x32xf32> -> vector<8x32xf32>
    %274 = arith.addf %272, %273 : vector<8x32xf32>
    %275 = math.tanh %274 : vector<8x32xf32>
    %276 = arith.index_cast %252 : i32 to index
    %c0_125 = arith.constant 0 : index
    %277 = vector.load %arg15[%276, %c0_125] : memref<64x32xf32, #tpu.memory_space<vmem>>, vector<8x32xf32>
    %cst_126 = arith.constant dense<0.000000e+00> : vector<8x32xf32>
    %278 = tpu.matmul %248, %41, %cst_126 {dimension_numbers = #tpu.dot_dimension_numbers<[1], [0], [0], [1], [0, 0, 1, 1], [], []>} : vector<8x32xf32>, vector<32x32xf32>, vector<8x32xf32> -> vector<8x32xf32>
    %279 = arith.addf %277, %278 : vector<8x32xf32>
    %280 = arith.negf %279 : vector<8x32xf32>
    %281 = math.exp %280 : vector<8x32xf32>
    %cst_127 = arith.constant 1.000000e+00 : f32
    %282 = vector.broadcast %cst_127 : f32 to vector<8x32xf32>
    %283 = arith.addf %282, %281 : vector<8x32xf32>
    %284 = arith.divf %282, %283 : vector<8x32xf32>
    %285 = arith.mulf %270, %246 : vector<8x32xf32>
    %286 = arith.mulf %261, %275 : vector<8x32xf32>
    %287 = arith.addf %285, %286 : vector<8x32xf32>
    %288 = math.tanh %287 : vector<8x32xf32>
    %289 = arith.mulf %284, %288 : vector<8x32xf32>
    %290 = arith.index_cast %252 : i32 to index
    %c0_128 = arith.constant 0 : index
    %291 = vector.load %arg16[%290, %c0_128] : memref<64x32xf32, #tpu.memory_space<vmem>>, vector<8x32xf32>
    tpu.vector_store %arg16[%290, %c0_128], %289 {strides = array<i32>} : memref<64x32xf32, #tpu.memory_space<vmem>>, vector<8x32xf32>,
    %c6_i32 = arith.constant 6 : i32
    %c8_i32_129 = arith.constant 8 : i32
    %292 = arith.muli %c6_i32, %c8_i32_129 : i32
    %293 = tpu.assume_multiple %292, 8 : i32
    %294 = arith.index_cast %293 : i32 to index
    %c0_130 = arith.constant 0 : index
    %295 = vector.load %arg12[%294, %c0_130] : memref<64x32xf32, #tpu.memory_space<vmem>>, vector<8x32xf32>
    %cst_131 = arith.constant dense<0.000000e+00> : vector<8x32xf32>
    %296 = tpu.matmul %289, %35, %cst_131 {dimension_numbers = #tpu.dot_dimension_numbers<[1], [0], [0], [1], [0, 0, 1, 1], [], []>} : vector<8x32xf32>, vector<32x32xf32>, vector<8x32xf32> -> vector<8x32xf32>
    %297 = arith.addf %295, %296 : vector<8x32xf32>
    %298 = arith.negf %297 : vector<8x32xf32>
    %299 = math.exp %298 : vector<8x32xf32>
    %cst_132 = arith.constant 1.000000e+00 : f32
    %300 = vector.broadcast %cst_132 : f32 to vector<8x32xf32>
    %301 = arith.addf %300, %299 : vector<8x32xf32>
    %302 = arith.divf %300, %301 : vector<8x32xf32>
    %303 = arith.index_cast %293 : i32 to index
    %c0_133 = arith.constant 0 : index
    %304 = vector.load %arg13[%303, %c0_133] : memref<64x32xf32, #tpu.memory_space<vmem>>, vector<8x32xf32>
    %cst_134 = arith.constant dense<0.000000e+00> : vector<8x32xf32>
    %305 = tpu.matmul %289, %37, %cst_134 {dimension_numbers = #tpu.dot_dimension_numbers<[1], [0], [0], [1], [0, 0, 1, 1], [], []>} : vector<8x32xf32>, vector<32x32xf32>, vector<8x32xf32> -> vector<8x32xf32>
    %306 = arith.addf %304, %305 : vector<8x32xf32>
    %307 = arith.negf %306 : vector<8x32xf32>
    %308 = math.exp %307 : vector<8x32xf32>
    %cst_135 = arith.constant 1.000000e+00 : f32
    %309 = vector.broadcast %cst_135 : f32 to vector<8x32xf32>
    %310 = arith.addf %309, %308 : vector<8x32xf32>
    %311 = arith.divf %309, %310 : vector<8x32xf32>
    %312 = arith.index_cast %293 : i32 to index
    %c0_136 = arith.constant 0 : index
    %313 = vector.load %arg14[%312, %c0_136] : memref<64x32xf32, #tpu.memory_space<vmem>>, vector<8x32xf32>
    %cst_137 = arith.constant dense<0.000000e+00> : vector<8x32xf32>
    %314 = tpu.matmul %289, %39, %cst_137 {dimension_numbers = #tpu.dot_dimension_numbers<[1], [0], [0], [1], [0, 0, 1, 1], [], []>} : vector<8x32xf32>, vector<32x32xf32>, vector<8x32xf32> -> vector<8x32xf32>
    %315 = arith.addf %313, %314 : vector<8x32xf32>
    %316 = math.tanh %315 : vector<8x32xf32>
    %317 = arith.index_cast %293 : i32 to index
    %c0_138 = arith.constant 0 : index
    %318 = vector.load %arg15[%317, %c0_138] : memref<64x32xf32, #tpu.memory_space<vmem>>, vector<8x32xf32>
    %cst_139 = arith.constant dense<0.000000e+00> : vector<8x32xf32>
    %319 = tpu.matmul %289, %41, %cst_139 {dimension_numbers = #tpu.dot_dimension_numbers<[1], [0], [0], [1], [0, 0, 1, 1], [], []>} : vector<8x32xf32>, vector<32x32xf32>, vector<8x32xf32> -> vector<8x32xf32>
    %320 = arith.addf %318, %319 : vector<8x32xf32>
    %321 = arith.negf %320 : vector<8x32xf32>
    %322 = math.exp %321 : vector<8x32xf32>
    %cst_140 = arith.constant 1.000000e+00 : f32
    %323 = vector.broadcast %cst_140 : f32 to vector<8x32xf32>
    %324 = arith.addf %323, %322 : vector<8x32xf32>
    %325 = arith.divf %323, %324 : vector<8x32xf32>
    %326 = arith.mulf %311, %287 : vector<8x32xf32>
    %327 = arith.mulf %302, %316 : vector<8x32xf32>
    %328 = arith.addf %326, %327 : vector<8x32xf32>
    %329 = math.tanh %328 : vector<8x32xf32>
    %330 = arith.mulf %325, %329 : vector<8x32xf32>
    %331 = arith.index_cast %293 : i32 to index
    %c0_141 = arith.constant 0 : index
    %332 = vector.load %arg16[%331, %c0_141] : memref<64x32xf32, #tpu.memory_space<vmem>>, vector<8x32xf32>
    tpu.vector_store %arg16[%331, %c0_141], %330 {strides = array<i32>} : memref<64x32xf32, #tpu.memory_space<vmem>>, vector<8x32xf32>,
    %c7_i32 = arith.constant 7 : i32
    %c8_i32_142 = arith.constant 8 : i32
    %333 = arith.muli %c7_i32, %c8_i32_142 : i32
    %334 = tpu.assume_multiple %333, 8 : i32
    %335 = arith.index_cast %334 : i32 to index
    %c0_143 = arith.constant 0 : index
    %336 = vector.load %arg12[%335, %c0_143] : memref<64x32xf32, #tpu.memory_space<vmem>>, vector<8x32xf32>
    %cst_144 = arith.constant dense<0.000000e+00> : vector<8x32xf32>
    %337 = tpu.matmul %330, %35, %cst_144 {dimension_numbers = #tpu.dot_dimension_numbers<[1], [0], [0], [1], [0, 0, 1, 1], [], []>} : vector<8x32xf32>, vector<32x32xf32>, vector<8x32xf32> -> vector<8x32xf32>
    %338 = arith.addf %336, %337 : vector<8x32xf32>
    %339 = arith.negf %338 : vector<8x32xf32>
    %340 = math.exp %339 : vector<8x32xf32>
    %cst_145 = arith.constant 1.000000e+00 : f32
    %341 = vector.broadcast %cst_145 : f32 to vector<8x32xf32>
    %342 = arith.addf %341, %340 : vector<8x32xf32>
    %343 = arith.divf %341, %342 : vector<8x32xf32>
    %344 = arith.index_cast %334 : i32 to index
    %c0_146 = arith.constant 0 : index
    %345 = vector.load %arg13[%344, %c0_146] : memref<64x32xf32, #tpu.memory_space<vmem>>, vector<8x32xf32>
    %cst_147 = arith.constant dense<0.000000e+00> : vector<8x32xf32>
    %346 = tpu.matmul %330, %37, %cst_147 {dimension_numbers = #tpu.dot_dimension_numbers<[1], [0], [0], [1], [0, 0, 1, 1], [], []>} : vector<8x32xf32>, vector<32x32xf32>, vector<8x32xf32> -> vector<8x32xf32>
    %347 = arith.addf %345, %346 : vector<8x32xf32>
    %348 = arith.negf %347 : vector<8x32xf32>
    %349 = math.exp %348 : vector<8x32xf32>
    %cst_148 = arith.constant 1.000000e+00 : f32
    %350 = vector.broadcast %cst_148 : f32 to vector<8x32xf32>
    %351 = arith.addf %350, %349 : vector<8x32xf32>
    %352 = arith.divf %350, %351 : vector<8x32xf32>
    %353 = arith.index_cast %334 : i32 to index
    %c0_149 = arith.constant 0 : index
    %354 = vector.load %arg14[%353, %c0_149] : memref<64x32xf32, #tpu.memory_space<vmem>>, vector<8x32xf32>
    %cst_150 = arith.constant dense<0.000000e+00> : vector<8x32xf32>
    %355 = tpu.matmul %330, %39, %cst_150 {dimension_numbers = #tpu.dot_dimension_numbers<[1], [0], [0], [1], [0, 0, 1, 1], [], []>} : vector<8x32xf32>, vector<32x32xf32>, vector<8x32xf32> -> vector<8x32xf32>
    %356 = arith.addf %354, %355 : vector<8x32xf32>
    %357 = math.tanh %356 : vector<8x32xf32>
    %358 = arith.index_cast %334 : i32 to index
    %c0_151 = arith.constant 0 : index
    %359 = vector.load %arg15[%358, %c0_151] : memref<64x32xf32, #tpu.memory_space<vmem>>, vector<8x32xf32>
    %cst_152 = arith.constant dense<0.000000e+00> : vector<8x32xf32>
    %360 = tpu.matmul %330, %41, %cst_152 {dimension_numbers = #tpu.dot_dimension_numbers<[1], [0], [0], [1], [0, 0, 1, 1], [], []>} : vector<8x32xf32>, vector<32x32xf32>, vector<8x32xf32> -> vector<8x32xf32>
    %361 = arith.addf %359, %360 : vector<8x32xf32>
    %362 = arith.negf %361 : vector<8x32xf32>
    %363 = math.exp %362 : vector<8x32xf32>
    %cst_153 = arith.constant 1.000000e+00 : f32
    %364 = vector.broadcast %cst_153 : f32 to vector<8x32xf32>
    %365 = arith.addf %364, %363 : vector<8x32xf32>
    %366 = arith.divf %364, %365 : vector<8x32xf32>
    %367 = arith.mulf %352, %328 : vector<8x32xf32>
    %368 = arith.mulf %343, %357 : vector<8x32xf32>
    %369 = arith.addf %367, %368 : vector<8x32xf32>
    %370 = math.tanh %369 : vector<8x32xf32>
    %371 = arith.mulf %366, %370 : vector<8x32xf32>
    %372 = arith.index_cast %334 : i32 to index
    %c0_154 = arith.constant 0 : index
    %373 = vector.load %arg16[%372, %c0_154] : memref<64x32xf32, #tpu.memory_space<vmem>>, vector<8x32xf32>
    tpu.vector_store %arg16[%372, %c0_154], %371 {strides = array<i32>} : memref<64x32xf32, #tpu.memory_space<vmem>>, vector<8x32xf32>,
    %c8_i32_155 = arith.constant 8 : i32
    %c0_156 = arith.constant 0 : index
    %c0_157 = arith.constant 0 : index
    %c0_158 = arith.constant 0 : index
    %374 = vector.load %arg10[%c0_156, %c0_157, %c0_158] : memref<1x8x32xf32, #tpu.memory_space<vmem>>, vector<1x8x32xf32>
    %375 = vector.shape_cast %374 : vector<1x8x32xf32> to vector<8x32xf32>
    %376 = vector.shape_cast %371 : vector<8x32xf32> to vector<1x8x32xf32>
    tpu.vector_store %arg10[%c0_156, %c0_157, %c0_158], %376 {strides = array<i32>} : memref<1x8x32xf32, #tpu.memory_space<vmem>>, vector<1x8x32xf32>,
    %c0_159 = arith.constant 0 : index
    %c0_160 = arith.constant 0 : index
    %c0_161 = arith.constant 0 : index
    %377 = vector.load %arg11[%c0_159, %c0_160, %c0_161] : memref<1x8x32xf32, #tpu.memory_space<vmem>>, vector<1x8x32xf32>
    %378 = vector.shape_cast %377 : vector<1x8x32xf32> to vector<8x32xf32>
    %379 = vector.shape_cast %369 : vector<8x32xf32> to vector<1x8x32xf32>
    tpu.vector_store %arg11[%c0_159, %c0_160, %c0_161], %379 {strides = array<i32>} : memref<1x8x32xf32, #tpu.memory_space<vmem>>, vector<1x8x32xf32>,
    %c0_162 = arith.constant 0 : index
    %c0_163 = arith.constant 0 : index
    %380 = vector.load %arg16[%c0_162, %c0_163] : memref<64x32xf32, #tpu.memory_space<vmem>>, vector<64x32xf32>
    %c0_164 = arith.constant 0 : index
    %c0_165 = arith.constant 0 : index
    %381 = vector.load %arg7[%c0_164, %c0_165] : memref<32x384xf32, #tpu.memory_space<vmem>>, vector<32x384xf32>
    %cst_166 = arith.constant dense<0.000000e+00> : vector<64x384xf32>
    %382 = tpu.matmul %380, %381, %cst_166 {dimension_numbers = #tpu.dot_dimension_numbers<[1], [0], [0], [1], [0, 0, 1, 1], [], []>} : vector<64x32xf32>, vector<32x384xf32>, vector<64x384xf32> -> vector<64x384xf32>
    %c0_167 = arith.constant 0 : index
    %c0_168 = arith.constant 0 : index
    %383 = vector.load %arg8[%c0_167, %c0_168] : memref<1x384xf32, #tpu.memory_space<vmem>>, vector<1x384xf32>
    %384 = vector.broadcast %383 : vector<1x384xf32> to vector<64x384xf32>
    %385 = arith.addf %382, %384 : vector<64x384xf32>
    %386 = vector.extract_strided_slice %385 {offsets = [0, 0], sizes = [64, 128], strides = [1, 1]} : vector<64x384xf32> to vector<64x128xf32>
    %387 = vector.extract_strided_slice %385 {offsets = [0, 128], sizes = [64, 128], strides = [1, 1]} : vector<64x384xf32> to vector<64x128xf32>
    %388 = math.exp %387 : vector<64x128xf32>
    %389 = vector.extract_strided_slice %385 {offsets = [0, 256], sizes = [64, 128], strides = [1, 1]} : vector<64x384xf32> to vector<64x128xf32>
    %c32_i32 = arith.constant 32 : i32
    %390 = tpu.dynamic_rotate %389 by %c32_i32 dim 1 : vector<64x128xf32>, i32 -> vector<64x128xf32>
    %391 = arith.maximumf %389, %390 : vector<64x128xf32>
    %c64_i32 = arith.constant 64 : i32
    %392 = tpu.dynamic_rotate %389 by %c64_i32 dim 1 : vector<64x128xf32>, i32 -> vector<64x128xf32>
    %393 = arith.maximumf %391, %392 : vector<64x128xf32>
    %c96_i32 = arith.constant 96 : i32
    %394 = tpu.dynamic_rotate %389 by %c96_i32 dim 1 : vector<64x128xf32>, i32 -> vector<64x128xf32>
    %395 = arith.maximumf %393, %394 : vector<64x128xf32>
    %396 = arith.subf %389, %395 : vector<64x128xf32>
    %397 = math.exp %396 : vector<64x128xf32>
    %c32_i32_169 = arith.constant 32 : i32
    %398 = tpu.dynamic_rotate %397 by %c32_i32_169 dim 1 : vector<64x128xf32>, i32 -> vector<64x128xf32>
    %399 = arith.addf %397, %398 : vector<64x128xf32>
    %c64_i32_170 = arith.constant 64 : i32
    %400 = tpu.dynamic_rotate %397 by %c64_i32_170 dim 1 : vector<64x128xf32>, i32 -> vector<64x128xf32>
    %401 = arith.addf %399, %400 : vector<64x128xf32>
    %c96_i32_171 = arith.constant 96 : i32
    %402 = tpu.dynamic_rotate %397 by %c96_i32_171 dim 1 : vector<64x128xf32>, i32 -> vector<64x128xf32>
    %403 = arith.addf %401, %402 : vector<64x128xf32>
    %404 = math.log %403 : vector<64x128xf32>
    %405 = arith.subf %396, %404 : vector<64x128xf32>
    %c0_172 = arith.constant 0 : index
    %c0_173 = arith.constant 0 : index
    %c0_174 = arith.constant 0 : index
    %406 = vector.load %arg9[%c0_172, %c0_173, %c0_174] : memref<1x64x384xf32, #tpu.memory_space<vmem>>, vector<1x64x128xf32>
    %407 = vector.shape_cast %406 : vector<1x64x128xf32> to vector<64x128xf32>
    %408 = vector.shape_cast %386 : vector<64x128xf32> to vector<1x64x128xf32>
    tpu.vector_store %arg9[%c0_172, %c0_173, %c0_174], %408 {strides = array<i32>} : memref<1x64x384xf32, #tpu.memory_space<vmem>>, vector<1x64x128xf32>,
    %c0_175 = arith.constant 0 : index
    %c0_176 = arith.constant 0 : index
    %c128 = arith.constant 128 : index
    %409 = vector.load %arg9[%c0_175, %c0_176, %c128] : memref<1x64x384xf32, #tpu.memory_space<vmem>>, vector<1x64x128xf32>
    %410 = vector.shape_cast %409 : vector<1x64x128xf32> to vector<64x128xf32>
    %411 = vector.shape_cast %388 : vector<64x128xf32> to vector<1x64x128xf32>
    tpu.vector_store %arg9[%c0_175, %c0_176, %c128], %411 {strides = array<i32>} : memref<1x64x384xf32, #tpu.memory_space<vmem>>, vector<1x64x128xf32>,
    %c0_177 = arith.constant 0 : index
    %c0_178 = arith.constant 0 : index
    %c256 = arith.constant 256 : index
    %412 = vector.load %arg9[%c0_177, %c0_178, %c256] : memref<1x64x384xf32, #tpu.memory_space<vmem>>, vector<1x64x128xf32>
    %413 = vector.shape_cast %412 : vector<1x64x128xf32> to vector<64x128xf32>
    %414 = vector.shape_cast %405 : vector<64x128xf32> to vector<1x64x128xf32>
    tpu.vector_store %arg9[%c0_177, %c0_178, %c256], %414 {strides = array<i32>} : memref<1x64x384xf32, #tpu.memory_space<vmem>>, vector<1x64x128xf32>,
    return
  }
  func.func @transform_0(%arg0: i32) -> (i32, i32, i32) {
    %c0_i32 = arith.constant 0 : i32
    %c0_i32_0 = arith.constant 0 : i32
    %c0_i32_1 = arith.constant 0 : i32
    return %arg0, %c0_i32, %c0_i32_0 : i32, i32, i32
  }
  func.func @transform_1(%arg0: i32) -> (i32, i32, i32) {
    %c0_i32 = arith.constant 0 : i32
    %c0_i32_0 = arith.constant 0 : i32
    %c0_i32_1 = arith.constant 0 : i32
    return %arg0, %c0_i32, %c0_i32_0 : i32, i32, i32
  }
  func.func @transform_2(%arg0: i32) -> (i32, i32, i32) {
    %c0_i32 = arith.constant 0 : i32
    %c0_i32_0 = arith.constant 0 : i32
    %c0_i32_1 = arith.constant 0 : i32
    return %arg0, %c0_i32, %c0_i32_0 : i32, i32, i32
  }
  func.func @transform_3(%arg0: i32) -> (i32, i32, i32) {
    %c0_i32 = arith.constant 0 : i32
    %c0_i32_0 = arith.constant 0 : i32
    %c0_i32_1 = arith.constant 0 : i32
    %c0_i32_2 = arith.constant 0 : i32
    return %c0_i32, %c0_i32_0, %c0_i32_1 : i32, i32, i32
  }
  func.func @transform_4(%arg0: i32) -> (i32, i32, i32) {
    %c0_i32 = arith.constant 0 : i32
    %c0_i32_0 = arith.constant 0 : i32
    %c0_i32_1 = arith.constant 0 : i32
    %c0_i32_2 = arith.constant 0 : i32
    return %c0_i32, %c0_i32_0, %c0_i32_1 : i32, i32, i32
  }
  func.func @transform_5(%arg0: i32) -> (i32, i32, i32) {
    %c0_i32 = arith.constant 0 : i32
    %c0_i32_0 = arith.constant 0 : i32
    %c0_i32_1 = arith.constant 0 : i32
    %c0_i32_2 = arith.constant 0 : i32
    return %c0_i32, %c0_i32_0, %c0_i32_1 : i32, i32, i32
  }
  func.func @transform_6(%arg0: i32) -> (i32, i32) {
    %c0_i32 = arith.constant 0 : i32
    %c0_i32_0 = arith.constant 0 : i32
    %c0_i32_1 = arith.constant 0 : i32
    return %c0_i32, %c0_i32_0 : i32, i32
  }
  func.func @transform_7(%arg0: i32) -> (i32, i32) {
    %c0_i32 = arith.constant 0 : i32
    %c0_i32_0 = arith.constant 0 : i32
    %c0_i32_1 = arith.constant 0 : i32
    return %c0_i32, %c0_i32_0 : i32, i32
  }
  func.func @transform_8(%arg0: i32) -> (i32, i32, i32) {
    %c0_i32 = arith.constant 0 : i32
    %c0_i32_0 = arith.constant 0 : i32
    %c0_i32_1 = arith.constant 0 : i32
    return %arg0, %c0_i32, %c0_i32_0 : i32, i32, i32
  }
  func.func @transform_9(%arg0: i32) -> (i32, i32, i32) {
    %c0_i32 = arith.constant 0 : i32
    %c0_i32_0 = arith.constant 0 : i32
    %c0_i32_1 = arith.constant 0 : i32
    return %arg0, %c0_i32, %c0_i32_0 : i32, i32, i32
  }
  func.func @transform_10(%arg0: i32) -> (i32, i32, i32) {
    %c0_i32 = arith.constant 0 : i32
    %c0_i32_0 = arith.constant 0 : i32
    %c0_i32_1 = arith.constant 0 : i32
    return %arg0, %c0_i32, %c0_i32_0 : i32, i32, i32
  }
}

</mosaic_0001>

<llo_original>
// kernel: mdnrnn_forward.1
$region0: #{mdnrnn_forward.1}
  #allocation0 [shape = 'u32[]', space=smem, size = 0x4, offset = 0x4, fixed_abs, tag = 'smem constant byte address 0x4 - core index']
  #allocation1 [shape = 'u32[144,128]{1,0:T(1,128)}', space=vmem, size = 0x12000, scoped, tag = 'internal scratch']
  #allocation2 [shape = 'f32[64,32]{1,0:T(8,128)}', space=vmem, size = 0x8000, scoped, tag = 'scratch operand']
  #allocation3 [shape = 'f32[64,32]{1,0:T(8,128)}', space=vmem, size = 0x8000, scoped, tag = 'scratch operand']
  #allocation4 [shape = 'f32[64,32]{1,0:T(8,128)}', space=vmem, size = 0x8000, scoped, tag = 'scratch operand']
  #allocation5 [shape = 'f32[64,32]{1,0:T(8,128)}', space=vmem, size = 0x8000, scoped, tag = 'scratch operand']
  #allocation6 [shape = 'f32[64,32]{1,0:T(8,128)}', space=vmem, size = 0x8000, scoped, tag = 'scratch operand']
  %s0 = inlined_call_operand.vmem [shape: f32[1,64,35], index: 0, kind: input, shape index: {}]
  %s1 = inlined_call_operand.vmem [shape: f32[1,8,32], index: 1, kind: input, shape index: {}]
  %s2 = inlined_call_operand.vmem [shape: f32[1,8,32], index: 2, kind: input, shape index: {}]
  %s3 = inlined_call_operand.vmem [shape: f32[4,35,32], index: 3, kind: input, shape index: {}]
  %s4 = inlined_call_operand.vmem [shape: f32[4,32,32], index: 4, kind: input, shape index: {}]
  %s5 = inlined_call_operand.vmem [shape: f32[4,1,32], index: 5, kind: input, shape index: {}]
  %s6 = inlined_call_operand.vmem [shape: f32[32,384], index: 6, kind: input, shape index: {}]
  %s7 = inlined_call_operand.vmem [shape: f32[1,384], index: 7, kind: input, shape index: {}]
  %s8 = inlined_call_operand.vmem [shape: f32[1,64,384], index: 8, kind: output, shape index: {0}]
  %s9 = inlined_call_operand.vmem [shape: f32[1,8,32], index: 9, kind: output, shape index: {1}]
  %s10 = inlined_call_operand.vmem [shape: f32[1,8,32], index: 10, kind: output, shape index: {2}]
  %11 = xla_tuple %s8, %s9, %s10
  %s12 = sld [smem:[#allocation0]]
  $region58: #{mdnrnn_forward.1} parent=0
    _
  %s14 = ssub.s32 1, %s12
  %s15 = scalar_select 0, %s14, %s12
  // Predicated region
  $region2: #{mdnrnn_forward.1} parent=0 // pred_check
    _
  $region3: #{mdnrnn_forward.1} parent=0 // pred_check_branch
    %17 = sbr.rel (0) target = $region5
  $region4: #{mdnrnn_forward.1} parent=0 // pred_region
    _
  $region5: #{mdnrnn_forward.1} parent=0 // pred_fallthru
    _
  // Predicated region
  $region6: #{mdnrnn_forward.1} parent=0 // pred_check
    _
  $region7: #{mdnrnn_forward.1} parent=0 // pred_check_branch
    %19 = sbr.rel (0) target = $region9
  $region8: #{mdnrnn_forward.1} parent=0 // pred_region
    _
  $region9: #{mdnrnn_forward.1} parent=0 // pred_fallthru
    _
  // Predicated region
  $region10: #{mdnrnn_forward.1} parent=0 // pred_check
    _
  $region11: #{mdnrnn_forward.1} parent=0 // pred_check_branch
    %21 = sbr.rel (0) target = $region13
  $region12: #{mdnrnn_forward.1} parent=0 // pred_region
    _
  $region13: #{mdnrnn_forward.1} parent=0 // pred_fallthru
    _
  // Predicated region
  $region14: #{mdnrnn_forward.1} parent=0 // pred_check
    _
  $region15: #{mdnrnn_forward.1} parent=0 // pred_check_branch
    %23 = sbr.rel (0) target = $region17
  $region16: #{mdnrnn_forward.1} parent=0 // pred_region
    _
  $region17: #{mdnrnn_forward.1} parent=0 // pred_fallthru
    _
  // Predicated region
  $region18: #{mdnrnn_forward.1} parent=0 // pred_check
    _
  $region19: #{mdnrnn_forward.1} parent=0 // pred_check_branch
    %25 = sbr.rel (0) target = $region21
  $region20: #{mdnrnn_forward.1} parent=0 // pred_region
    _
  $region21: #{mdnrnn_forward.1} parent=0 // pred_fallthru
    _
  // Predicated region
  $region22: #{mdnrnn_forward.1} parent=0 // pred_check
    _
  $region23: #{mdnrnn_forward.1} parent=0 // pred_check_branch
    %27 = sbr.rel (0) target = $region25
  $region24: #{mdnrnn_forward.1} parent=0 // pred_region
    _
  $region25: #{mdnrnn_forward.1} parent=0 // pred_fallthru
    _
  // Predicated region
  $region26: #{mdnrnn_forward.1} parent=0 // pred_check
    _
  $region27: #{mdnrnn_forward.1} parent=0 // pred_check_branch
    %29 = sbr.rel (0) target = $region29
  $region28: #{mdnrnn_forward.1} parent=0 // pred_region
    _
  $region29: #{mdnrnn_forward.1} parent=0 // pred_fallthru
    _
  // Predicated region
  $region30: #{mdnrnn_forward.1} parent=0 // pred_check
    _
  $region31: #{mdnrnn_forward.1} parent=0 // pred_check_branch
    %31 = sbr.rel (0) target = $region33
  $region32: #{mdnrnn_forward.1} parent=0 // pred_region
    _
  $region33: #{mdnrnn_forward.1} parent=0 // pred_fallthru
    _
  %v32 = vld [vmem:[%s0] sm:$0xff]
  %v33 = vld [vmem:[%s0 + $0x8] sm:$0xff]
  %v34 = vld [vmem:[%s0 + $0x10] sm:$0xff]
  %v35 = vld [vmem:[%s0 + $0x18] sm:$0xff]
  %v36 = vld [vmem:[%s0 + $0x20] sm:$0xff]
  %v37 = vld [vmem:[%s0 + $0x28] sm:$0xff]
  %v38 = vld [vmem:[%s0 + $0x30] sm:$0xff]
  %v39 = vld [vmem:[%s0 + $0x38] sm:$0xff]
  %v40 = vld [vmem:[%s3] sm:$0xff]
  %v41 = vld [vmem:[%s3 + $0x8] sm:$0xff]
  %v42 = vld [vmem:[%s3 + $0x10] sm:$0xff]
  %v43 = vld [vmem:[%s3 + $0x18] sm:$0xff]
  %v44 = vld [vmem:[%s3 + $0x20] sm:$0x7]
  %v45 = vld [vmem:[%s5] sm:$0x1]
  %v47 = vlaneseq
  %v48 = vshrl.u32 %v47, 7
  %v49 = vsub.s32 0, %v48
  %v50 = vrot.slane %v45, %v49
  %vm52 = vcmask 285696
  %v54 = vsel %vm52, %v32, 0
  %v57 = vsel %vm52, %v33, 0
  %v60 = vsel %vm52, %v34, 0
  %v63 = vsel %vm52, %v35, 0
  %v66 = vsel %vm52, %v36, 0
  %v69 = vsel %vm52, %v37, 0
  %v72 = vsel %vm52, %v38, 0
  %v75 = vsel %vm52, %v39, 0
  %vm77 = vcmask 1042432
  %v79 = vsel %vm77, %v44, 0
  %81 = vmatprep.subr.mxu0 0.0
  %82 = vmatpush1.msra.mxu0 0.0
  %83 = vmatprep.subr.mxu0 0.0
  %84 = vmatpush1.msra.mxu0 0.0
  %85 = vmatprep.subr.mxu0 0.0
  %86 = vmatpush1.msra.mxu0 0.0
  %87 = vmatprep.subr.mxu0 0.0
  %88 = vmatpush1.msra.mxu0 0.0
  %89 = vmatprep.subr.mxu0 0.0
  %90 = vmatpush1.msra.mxu0 0.0
  %91 = vmatprep.subr.mxu0 0.0
  %92 = vmatpush1.msra.mxu0 0.0
  %93 = vmatprep.subr.mxu0 0.0
  %94 = vmatpush1.msra.mxu0 0.0
  %95 = vmatprep.subr.mxu0 0.0
  %96 = vmatpush1.msra.mxu0 0.0
  %97 = vmatprep.subr.mxu0 0.0
  %98 = vmatpush1.msra.mxu0 0.0
  %99 = vmatprep.subr.mxu0 0.0
  %100 = vmatpush1.msra.mxu0 0.0
  %101 = vmatprep.subr.mxu0 0.0
  %102 = vmatpush1.msra.mxu0 0.0
  %103 = vmatprep.subr.mxu0 0.0
  %104 = vmatpush1.msra.mxu0 %v79
  %105 = vmatprep.subr.mxu0 0.0
  %106 = vmatpush1.msra.mxu0 %v43
  %107 = vmatprep.subr.mxu0 0.0
  %108 = vmatpush1.msra.mxu0 %v42
  %109 = vmatprep.subr.mxu0 0.0
  %110 = vmatpush1.msra.mxu0 %v41
  %111 = vmatprep.subr.mxu0 0.0
  %112 = vmatpush1.msra.mxu0 %v40
  %113 = vmatprep.subr.mxu0 0.0
  %114 = vmatpush2.msra.mxu0 0.0
  %115 = vmatprep.subr.mxu0 0.0
  %116 = vmatpush2.msra.mxu0 0.0
  %117 = vmatprep.subr.mxu0 0.0
  %118 = vmatpush2.msra.mxu0 0.0
  %119 = vmatprep.subr.mxu0 0.0
  %120 = vmatpush2.msra.mxu0 0.0
  %121 = vmatprep.subr.mxu0 0.0
  %122 = vmatpush2.msra.mxu0 0.0
  %123 = vmatprep.subr.mxu0 0.0
  %124 = vmatpush2.msra.mxu0 0.0
  %125 = vmatprep.subr.mxu0 0.0
  %126 = vmatpush2.msra.mxu0 0.0
  %127 = vmatprep.subr.mxu0 0.0
  %128 = vmatpush2.msra.mxu0 0.0
  %129 = vmatprep.subr.mxu0 0.0
  %130 = vmatpush2.msra.mxu0 0.0
  %131 = vmatprep.subr.mxu0 0.0
  %132 = vmatpush2.msra.mxu0 0.0
  %133 = vmatprep.subr.mxu0 0.0
  %134 = vmatpush2.msra.mxu0 0.0
  %135 = vmatprep.subr.mxu0 0.0
  %136 = vmatpush2.msra.mxu0 0.0
  %137 = vmatprep.subr.mxu0 0.0
  %138 = vmatpush2.msra.mxu0 0.0
  %139 = vmatprep.subr.mxu0 0.0
  %140 = vmatpush2.msra.mxu0 0.0
  %141 = vmatprep.subr.mxu0 0.0
  %142 = vmatpush2.msra.mxu0 0.0
  %143 = vmatprep.subr.mxu0 0.0
  %144 = vmatpush2.msra.mxu0 0.0
  %145 = vmatprep.mubr.f32.mxu0 0.0
  %146 = vmatmul.mubr.f32.gmra.mxu0 %v54
  %v147 = vpop.f32.mrf.mxu0
  %v148 = vadd.f32 %v50, %v147
  %v149 = vpop.f32.mrf.mxu0
  %150 = vmatprep.mubr.f32.mxu0 0.0
  %151 = vmatmul.mubr.f32.gmra.mxu0 %v57
  %v152 = vpop.f32.mrf.mxu0
  %v153 = vadd.f32 %v50, %v152
  %v154 = vpop.f32.mrf.mxu0
  %155 = vmatprep.mubr.f32.mxu0 0.0
  %156 = vmatmul.mubr.f32.gmra.mxu0 %v60
  %v157 = vpop.f32.mrf.mxu0
  %v158 = vadd.f32 %v50, %v157
  %v159 = vpop.f32.mrf.mxu0
  %160 = vmatprep.mubr.f32.mxu0 0.0
  %161 = vmatmul.mubr.f32.gmra.mxu0 %v63
  %v162 = vpop.f32.mrf.mxu0
  %v163 = vadd.f32 %v50, %v162
  %v164 = vpop.f32.mrf.mxu0
  %165 = vmatprep.mubr.f32.mxu0 0.0
  %166 = vmatmul.mubr.f32.gmra.mxu0 %v66
  %v167 = vpop.f32.mrf.mxu0
  %v168 = vadd.f32 %v50, %v167
  %v169 = vpop.f32.mrf.mxu0
  %170 = vmatprep.mubr.f32.mxu0 0.0
  %171 = vmatmul.mubr.f32.gmra.mxu0 %v69
  %v172 = vpop.f32.mrf.mxu0
  %v173 = vadd.f32 %v50, %v172
  %v174 = vpop.f32.mrf.mxu0
  %175 = vmatprep.mubr.f32.mxu0 0.0
  %176 = vmatmul.mubr.f32.gmra.mxu0 %v72
  %v177 = vpop.f32.mrf.mxu0
  %v178 = vadd.f32 %v50, %v177
  %v179 = vpop.f32.mrf.mxu0
  %180 = vmatprep.mubr.f32.mxu0 0.0
  %181 = vmatmul.mubr.f32.gmra.mxu0 %v75
  %v182 = vpop.f32.mrf.mxu0
  %v183 = vadd.f32 %v50, %v182
  %v184 = vpop.f32.mrf.mxu0
  %185 = vdwg.mxu0
  %vm186 = vcmask 261120
  %187 = vst.msk [vmem:[#allocation2] sm:$0xff] %vm186, %v148
  %188 = vst.msk [vmem:[#allocation2 + $0x8] sm:$0xff] %vm186, %v153
  %189 = vst.msk [vmem:[#allocation2 + $0x10] sm:$0xff] %vm186, %v158
  %190 = vst.msk [vmem:[#allocation2 + $0x18] sm:$0xff] %vm186, %v163
  %191 = vst.msk [vmem:[#allocation2 + $0x20] sm:$0xff] %vm186, %v168
  %192 = vst.msk [vmem:[#allocation2 + $0x28] sm:$0xff] %vm186, %v173
  %193 = vst.msk [vmem:[#allocation2 + $0x30] sm:$0xff] %vm186, %v178
  %194 = vst.msk [vmem:[#allocation2 + $0x38] sm:$0xff] %vm186, %v183
  %s195 = scalar_lea.vmem %s3, 40
  %v196 = vld [vmem:[%s195] sm:$0xff]
  %v197 = vld [vmem:[%s195 + $0x8] sm:$0xff]
  %v198 = vld [vmem:[%s195 + $0x10] sm:$0xff]
  %v199 = vld [vmem:[%s195 + $0x18] sm:$0xff]
  %v200 = vld [vmem:[%s195 + $0x20] sm:$0x7]
  %s201 = scalar_lea.vmem %s5, 1
  %v202 = vld [vmem:[%s201] sm:$0x1]
  %v204 = vlaneseq
  %v205 = vshrl.u32 %v204, 7
  %v206 = vsub.s32 0, %v205
  %v207 = vrot.slane %v202, %v206
  %v210 = vsel %vm77, %v200, 0
  %212 = vmatprep.subr.mxu0 0.0
  %213 = vmatpush1.msra.mxu0 0.0
  %214 = vmatprep.subr.mxu0 0.0
  %215 = vmatpush1.msra.mxu0 0.0
  %216 = vmatprep.subr.mxu0 0.0
  %217 = vmatpush1.msra.mxu0 0.0
  %218 = vmatprep.subr.mxu0 0.0
  %219 = vmatpush1.msra.mxu0 0.0
  %220 = vmatprep.subr.mxu0 0.0
  %221 = vmatpush1.msra.mxu0 0.0
  %222 = vmatprep.subr.mxu0 0.0
  %223 = vmatpush1.msra.mxu0 0.0
  %224 = vmatprep.subr.mxu0 0.0
  %225 = vmatpush1.msra.mxu0 0.0
  %226 = vmatprep.subr.mxu0 0.0
  %227 = vmatpush1.msra.mxu0 0.0
  %228 = vmatprep.subr.mxu0 0.0
  %229 = vmatpush1.msra.mxu0 0.0
  %230 = vmatprep.subr.mxu0 0.0
  %231 = vmatpush1.msra.mxu0 0.0
  %232 = vmatprep.subr.mxu0 0.0
  %233 = vmatpush1.msra.mxu0 0.0
  %234 = vmatprep.subr.mxu0 0.0
  %235 = vmatpush1.msra.mxu0 %v210
  %236 = vmatprep.subr.mxu0 0.0
  %237 = vmatpush1.msra.mxu0 %v199
  %238 = vmatprep.subr.mxu0 0.0
  %239 = vmatpush1.msra.mxu0 %v198
  %240 = vmatprep.subr.mxu0 0.0
  %241 = vmatpush1.msra.mxu0 %v197
  %242 = vmatprep.subr.mxu0 0.0
  %243 = vmatpush1.msra.mxu0 %v196
  %244 = vmatprep.subr.mxu0 0.0
  %245 = vmatpush2.msra.mxu0 0.0
  %246 = vmatprep.subr.mxu0 0.0
  %247 = vmatpush2.msra.mxu0 0.0
  %248 = vmatprep.subr.mxu0 0.0
  %249 = vmatpush2.msra.mxu0 0.0
  %250 = vmatprep.subr.mxu0 0.0
  %251 = vmatpush2.msra.mxu0 0.0
  %252 = vmatprep.subr.mxu0 0.0
  %253 = vmatpush2.msra.mxu0 0.0
  %254 = vmatprep.subr.mxu0 0.0
  %255 = vmatpush2.msra.mxu0 0.0
  %256 = vmatprep.subr.mxu0 0.0
  %257 = vmatpush2.msra.mxu0 0.0
  %258 = vmatprep.subr.mxu0 0.0
  %259 = vmatpush2.msra.mxu0 0.0
  %260 = vmatprep.subr.mxu0 0.0
  %261 = vmatpush2.msra.mxu0 0.0
  %262 = vmatprep.subr.mxu0 0.0
  %263 = vmatpush2.msra.mxu0 0.0
  %264 = vmatprep.subr.mxu0 0.0
  %265 = vmatpush2.msra.mxu0 0.0
  %266 = vmatprep.subr.mxu0 0.0
  %267 = vmatpush2.msra.mxu0 0.0
  %268 = vmatprep.subr.mxu0 0.0
  %269 = vmatpush2.msra.mxu0 0.0
  %270 = vmatprep.subr.mxu0 0.0
  %271 = vmatpush2.msra.mxu0 0.0
  %272 = vmatprep.subr.mxu0 0.0
  %273 = vmatpush2.msra.mxu0 0.0
  %274 = vmatprep.subr.mxu0 0.0
  %275 = vmatpush2.msra.mxu0 0.0
  %276 = vmatprep.mubr.f32.mxu0 0.0
  %277 = vmatmul.mubr.f32.gmra.mxu0 %v54
  %v278 = vpop.f32.mrf.mxu0
  %v279 = vadd.f32 %v207, %v278
  %v280 = vpop.f32.mrf.mxu0
  %281 = vmatprep.mubr.f32.mxu0 0.0
  %282 = vmatmul.mubr.f32.gmra.mxu0 %v57
  %v283 = vpop.f32.mrf.mxu0
  %v284 = vadd.f32 %v207, %v283
  %v285 = vpop.f32.mrf.mxu0
  %286 = vmatprep.mubr.f32.mxu0 0.0
  %287 = vmatmul.mubr.f32.gmra.mxu0 %v60
  %v288 = vpop.f32.mrf.mxu0
  %v289 = vadd.f32 %v207, %v288
  %v290 = vpop.f32.mrf.mxu0
  %291 = vmatprep.mubr.f32.mxu0 0.0
  %292 = vmatmul.mubr.f32.gmra.mxu0 %v63
  %v293 = vpop.f32.mrf.mxu0
  %v294 = vadd.f32 %v207, %v293
  %v295 = vpop.f32.mrf.mxu0
  %296 = vmatprep.mubr.f32.mxu0 0.0
  %297 = vmatmul.mubr.f32.gmra.mxu0 %v66
  %v298 = vpop.f32.mrf.mxu0
  %v299 = vadd.f32 %v207, %v298
  %v300 = vpop.f32.mrf.mxu0
  %301 = vmatprep.mubr.f32.mxu0 0.0
  %302 = vmatmul.mubr.f32.gmra.mxu0 %v69
  %v303 = vpop.f32.mrf.mxu0
  %v304 = vadd.f32 %v207, %v303
  %v305 = vpop.f32.mrf.mxu0
  %306 = vmatprep.mubr.f32.mxu0 0.0
  %307 = vmatmul.mubr.f32.gmra.mxu0 %v72
  %v308 = vpop.f32.mrf.mxu0
  %v309 = vadd.f32 %v207, %v308
  %v310 = vpop.f32.mrf.mxu0
  %311 = vmatprep.mubr.f32.mxu0 0.0
  %312 = vmatmul.mubr.f32.gmra.mxu0 %v75
  %v313 = vpop.f32.mrf.mxu0
  %v314 = vadd.f32 %v207, %v313
  %v315 = vpop.f32.mrf.mxu0
  %316 = vdwg.mxu0
  %317 = vst.msk [vmem:[#allocation3] sm:$0xff] %vm186, %v279
  %318 = vst.msk [vmem:[#allocation3 + $0x8] sm:$0xff] %vm186, %v284
  %319 = vst.msk [vmem:[#allocation3 + $0x10] sm:$0xff] %vm186, %v289
  %320 = vst.msk [vmem:[#allocation3 + $0x18] sm:$0xff] %vm186, %v294
  %321 = vst.msk [vmem:[#allocation3 + $0x20] sm:$0xff] %vm186, %v299
  %322 = vst.msk [vmem:[#allocation3 + $0x28] sm:$0xff] %vm186, %v304
  %323 = vst.msk [vmem:[#allocation3 + $0x30] sm:$0xff] %vm186, %v309
  %324 = vst.msk [vmem:[#allocation3 + $0x38] sm:$0xff] %vm186, %v314
  %s325 = scalar_lea.vmem %s3, 80
  %v326 = vld [vmem:[%s325] sm:$0xff]
  %v327 = vld [vmem:[%s325 + $0x8] sm:$0xff]
  %v328 = vld [vmem:[%s325 + $0x10] sm:$0xff]
  %v329 = vld [vmem:[%s325 + $0x18] sm:$0xff]
  %v330 = vld [vmem:[%s325 + $0x20] sm:$0x7]
  %s331 = scalar_lea.vmem %s5, 2
  %v332 = vld [vmem:[%s331] sm:$0x1]
  %v334 = vlaneseq
  %v335 = vshrl.u32 %v334, 7
  %v336 = vsub.s32 0, %v335
  %v337 = vrot.slane %v332, %v336
  %v340 = vsel %vm77, %v330, 0
  %342 = vmatprep.subr.mxu0 0.0
  %343 = vmatpush1.msra.mxu0 0.0
  %344 = vmatprep.subr.mxu0 0.0
  %345 = vmatpush1.msra.mxu0 0.0
  %346 = vmatprep.subr.mxu0 0.0
  %347 = vmatpush1.msra.mxu0 0.0
  %348 = vmatprep.subr.mxu0 0.0
  %349 = vmatpush1.msra.mxu0 0.0
  %350 = vmatprep.subr.mxu0 0.0
  %351 = vmatpush1.msra.mxu0 0.0
  %352 = vmatprep.subr.mxu0 0.0
  %353 = vmatpush1.msra.mxu0 0.0
  %354 = vmatprep.subr.mxu0 0.0
  %355 = vmatpush1.msra.mxu0 0.0
  %356 = vmatprep.subr.mxu0 0.0
  %357 = vmatpush1.msra.mxu0 0.0
  %358 = vmatprep.subr.mxu0 0.0
  %359 = vmatpush1.msra.mxu0 0.0
  %360 = vmatprep.subr.mxu0 0.0
  %361 = vmatpush1.msra.mxu0 0.0
  %362 = vmatprep.subr.mxu0 0.0
  %363 = vmatpush1.msra.mxu0 0.0
  %364 = vmatprep.subr.mxu0 0.0
  %365 = vmatpush1.msra.mxu0 %v340
  %366 = vmatprep.subr.mxu0 0.0
  %367 = vmatpush1.msra.mxu0 %v329
  %368 = vmatprep.subr.mxu0 0.0
  %369 = vmatpush1.msra.mxu0 %v328
  %370 = vmatprep.subr.mxu0 0.0
  %371 = vmatpush1.msra.mxu0 %v327
  %372 = vmatprep.subr.mxu0 0.0
  %373 = vmatpush1.msra.mxu0 %v326
  %374 = vmatprep.subr.mxu0 0.0
  %375 = vmatpush2.msra.mxu0 0.0
  %376 = vmatprep.subr.mxu0 0.0
  %377 = vmatpush2.msra.mxu0 0.0
  %378 = vmatprep.subr.mxu0 0.0
  %379 = vmatpush2.msra.mxu0 0.0
  %380 = vmatprep.subr.mxu0 0.0
  %381 = vmatpush2.msra.mxu0 0.0
  %382 = vmatprep.subr.mxu0 0.0
  %383 = vmatpush2.msra.mxu0 0.0
  %384 = vmatprep.subr.mxu0 0.0
  %385 = vmatpush2.msra.mxu0 0.0
  %386 = vmatprep.subr.mxu0 0.0
  %387 = vmatpush2.msra.mxu0 0.0
  %388 = vmatprep.subr.mxu0 0.0
  %389 = vmatpush2.msra.mxu0 0.0
  %390 = vmatprep.subr.mxu0 0.0
  %391 = vmatpush2.msra.mxu0 0.0
  %392 = vmatprep.subr.mxu0 0.0
  %393 = vmatpush2.msra.mxu0 0.0
  %394 = vmatprep.subr.mxu0 0.0
  %395 = vmatpush2.msra.mxu0 0.0
  %396 = vmatprep.subr.mxu0 0.0
  %397 = vmatpush2.msra.mxu0 0.0
  %398 = vmatprep.subr.mxu0 0.0
  %399 = vmatpush2.msra.mxu0 0.0
  %400 = vmatprep.subr.mxu0 0.0
  %401 = vmatpush2.msra.mxu0 0.0
  %402 = vmatprep.subr.mxu0 0.0
  %403 = vmatpush2.msra.mxu0 0.0
  %404 = vmatprep.subr.mxu0 0.0
  %405 = vmatpush2.msra.mxu0 0.0
  %406 = vmatprep.mubr.f32.mxu0 0.0
  %407 = vmatmul.mubr.f32.gmra.mxu0 %v54
  %v408 = vpop.f32.mrf.mxu0
  %v409 = vadd.f32 %v337, %v408
  %v410 = vpop.f32.mrf.mxu0
  %411 = vmatprep.mubr.f32.mxu0 0.0
  %412 = vmatmul.mubr.f32.gmra.mxu0 %v57
  %v413 = vpop.f32.mrf.mxu0
  %v414 = vadd.f32 %v337, %v413
  %v415 = vpop.f32.mrf.mxu0
  %416 = vmatprep.mubr.f32.mxu0 0.0
  %417 = vmatmul.mubr.f32.gmra.mxu0 %v60
  %v418 = vpop.f32.mrf.mxu0
  %v419 = vadd.f32 %v337, %v418
  %v420 = vpop.f32.mrf.mxu0
  %421 = vmatprep.mubr.f32.mxu0 0.0
  %422 = vmatmul.mubr.f32.gmra.mxu0 %v63
  %v423 = vpop.f32.mrf.mxu0
  %v424 = vadd.f32 %v337, %v423
  %v425 = vpop.f32.mrf.mxu0
  %426 = vmatprep.mubr.f32.mxu0 0.0
  %427 = vmatmul.mubr.f32.gmra.mxu0 %v66
  %v428 = vpop.f32.mrf.mxu0
  %v429 = vadd.f32 %v337, %v428
  %v430 = vpop.f32.mrf.mxu0
  %431 = vmatprep.mubr.f32.mxu0 0.0
  %432 = vmatmul.mubr.f32.gmra.mxu0 %v69
  %v433 = vpop.f32.mrf.mxu0
  %v434 = vadd.f32 %v337, %v433
  %v435 = vpop.f32.mrf.mxu0
  %436 = vmatprep.mubr.f32.mxu0 0.0
  %437 = vmatmul.mubr.f32.gmra.mxu0 %v72
  %v438 = vpop.f32.mrf.mxu0
  %v439 = vadd.f32 %v337, %v438
  %v440 = vpop.f32.mrf.mxu0
  %441 = vmatprep.mubr.f32.mxu0 0.0
  %442 = vmatmul.mubr.f32.gmra.mxu0 %v75
  %v443 = vpop.f32.mrf.mxu0
  %v444 = vadd.f32 %v337, %v443
  %v445 = vpop.f32.mrf.mxu0
  %446 = vdwg.mxu0
  %447 = vst.msk [vmem:[#allocation4] sm:$0xff] %vm186, %v409
  %448 = vst.msk [vmem:[#allocation4 + $0x8] sm:$0xff] %vm186, %v414
  %449 = vst.msk [vmem:[#allocation4 + $0x10] sm:$0xff] %vm186, %v419
  %450 = vst.msk [vmem:[#allocation4 + $0x18] sm:$0xff] %vm186, %v424
  %451 = vst.msk [vmem:[#allocation4 + $0x20] sm:$0xff] %vm186, %v429
  %452 = vst.msk [vmem:[#allocation4 + $0x28] sm:$0xff] %vm186, %v434
  %453 = vst.msk [vmem:[#allocation4 + $0x30] sm:$0xff] %vm186, %v439
  %454 = vst.msk [vmem:[#allocation4 + $0x38] sm:$0xff] %vm186, %v444
  %s455 = scalar_lea.vmem %s3, 120
  %v456 = vld [vmem:[%s455] sm:$0xff]
  %v457 = vld [vmem:[%s455 + $0x8] sm:$0xff]
  %v458 = vld [vmem:[%s455 + $0x10] sm:$0xff]
  %v459 = vld [vmem:[%s455 + $0x18] sm:$0xff]
  %v460 = vld [vmem:[%s455 + $0x20] sm:$0x7]
  %s461 = scalar_lea.vmem %s5, 3
  %v462 = vld [vmem:[%s461] sm:$0x1]
  %v464 = vlaneseq
  %v465 = vshrl.u32 %v464, 7
  %v466 = vsub.s32 0, %v465
  %v467 = vrot.slane %v462, %v466
  %v470 = vsel %vm77, %v460, 0
  %472 = vmatprep.subr.mxu0 0.0
  %473 = vmatpush1.msra.mxu0 0.0
  %474 = vmatprep.subr.mxu0 0.0
  %475 = vmatpush1.msra.mxu0 0.0
  %476 = vmatprep.subr.mxu0 0.0
  %477 = vmatpush1.msra.mxu0 0.0
  %478 = vmatprep.subr.mxu0 0.0
  %479 = vmatpush1.msra.mxu0 0.0
  %480 = vmatprep.subr.mxu0 0.0
  %481 = vmatpush1.msra.mxu0 0.0
  %482 = vmatprep.subr.mxu0 0.0
  %483 = vmatpush1.msra.mxu0 0.0
  %484 = vmatprep.subr.mxu0 0.0
  %485 = vmatpush1.msra.mxu0 0.0
  %486 = vmatprep.subr.mxu0 0.0
  %487 = vmatpush1.msra.mxu0 0.0
  %488 = vmatprep.subr.mxu0 0.0
  %489 = vmatpush1.msra.mxu0 0.0
  %490 = vmatprep.subr.mxu0 0.0
  %491 = vmatpush1.msra.mxu0 0.0
  %492 = vmatprep.subr.mxu0 0.0
  %493 = vmatpush1.msra.mxu0 0.0
  %494 = vmatprep.subr.mxu0 0.0
  %495 = vmatpush1.msra.mxu0 %v470
  %496 = vmatprep.subr.mxu0 0.0
  %497 = vmatpush1.msra.mxu0 %v459
  %498 = vmatprep.subr.mxu0 0.0
  %499 = vmatpush1.msra.mxu0 %v458
  %500 = vmatprep.subr.mxu0 0.0
  %501 = vmatpush1.msra.mxu0 %v457
  %502 = vmatprep.subr.mxu0 0.0
  %503 = vmatpush1.msra.mxu0 %v456
  %504 = vmatprep.subr.mxu0 0.0
  %505 = vmatpush2.msra.mxu0 0.0
  %506 = vmatprep.subr.mxu0 0.0
  %507 = vmatpush2.msra.mxu0 0.0
  %508 = vmatprep.subr.mxu0 0.0
  %509 = vmatpush2.msra.mxu0 0.0
  %510 = vmatprep.subr.mxu0 0.0
  %511 = vmatpush2.msra.mxu0 0.0
  %512 = vmatprep.subr.mxu0 0.0
  %513 = vmatpush2.msra.mxu0 0.0
  %514 = vmatprep.subr.mxu0 0.0
  %515 = vmatpush2.msra.mxu0 0.0
  %516 = vmatprep.subr.mxu0 0.0
  %517 = vmatpush2.msra.mxu0 0.0
  %518 = vmatprep.subr.mxu0 0.0
  %519 = vmatpush2.msra.mxu0 0.0
  %520 = vmatprep.subr.mxu0 0.0
  %521 = vmatpush2.msra.mxu0 0.0
  %522 = vmatprep.subr.mxu0 0.0
  %523 = vmatpush2.msra.mxu0 0.0
  %524 = vmatprep.subr.mxu0 0.0
  %525 = vmatpush2.msra.mxu0 0.0
  %526 = vmatprep.subr.mxu0 0.0
  %527 = vmatpush2.msra.mxu0 0.0
  %528 = vmatprep.subr.mxu0 0.0
  %529 = vmatpush2.msra.mxu0 0.0
  %530 = vmatprep.subr.mxu0 0.0
  %531 = vmatpush2.msra.mxu0 0.0
  %532 = vmatprep.subr.mxu0 0.0
  %533 = vmatpush2.msra.mxu0 0.0
  %534 = vmatprep.subr.mxu0 0.0
  %535 = vmatpush2.msra.mxu0 0.0
  %536 = vmatprep.mubr.f32.mxu0 0.0
  %537 = vmatmul.mubr.f32.gmra.mxu0 %v54
  %v538 = vpop.f32.mrf.mxu0
  %v539 = vadd.f32 %v467, %v538
  %v540 = vpop.f32.mrf.mxu0
  %541 = vmatprep.mubr.f32.mxu0 0.0
  %542 = vmatmul.mubr.f32.gmra.mxu0 %v57
  %v543 = vpop.f32.mrf.mxu0
  %v544 = vadd.f32 %v467, %v543
  %v545 = vpop.f32.mrf.mxu0
  %546 = vmatprep.mubr.f32.mxu0 0.0
  %547 = vmatmul.mubr.f32.gmra.mxu0 %v60
  %v548 = vpop.f32.mrf.mxu0
  %v549 = vadd.f32 %v467, %v548
  %v550 = vpop.f32.mrf.mxu0
  %551 = vmatprep.mubr.f32.mxu0 0.0
  %552 = vmatmul.mubr.f32.gmra.mxu0 %v63
  %v553 = vpop.f32.mrf.mxu0
  %v554 = vadd.f32 %v467, %v553
  %v555 = vpop.f32.mrf.mxu0
  %556 = vmatprep.mubr.f32.mxu0 0.0
  %557 = vmatmul.mubr.f32.gmra.mxu0 %v66
  %v558 = vpop.f32.mrf.mxu0
  %v559 = vadd.f32 %v467, %v558
  %v560 = vpop.f32.mrf.mxu0
  %561 = vmatprep.mubr.f32.mxu0 0.0
  %562 = vmatmul.mubr.f32.gmra.mxu0 %v69
  %v563 = vpop.f32.mrf.mxu0
  %v564 = vadd.f32 %v467, %v563
  %v565 = vpop.f32.mrf.mxu0
  %566 = vmatprep.mubr.f32.mxu0 0.0
  %567 = vmatmul.mubr.f32.gmra.mxu0 %v72
  %v568 = vpop.f32.mrf.mxu0
  %v569 = vadd.f32 %v467, %v568
  %v570 = vpop.f32.mrf.mxu0
  %571 = vmatprep.mubr.f32.mxu0 0.0
  %572 = vmatmul.mubr.f32.gmra.mxu0 %v75
  %v573 = vpop.f32.mrf.mxu0
  %v574 = vadd.f32 %v467, %v573
  %v575 = vpop.f32.mrf.mxu0
  %576 = vdwg.mxu0
  %577 = vst.msk [vmem:[#allocation5] sm:$0xff] %vm186, %v539
  %578 = vst.msk [vmem:[#allocation5 + $0x8] sm:$0xff] %vm186, %v544
  %579 = vst.msk [vmem:[#allocation5 + $0x10] sm:$0xff] %vm186, %v549
  %580 = vst.msk [vmem:[#allocation5 + $0x18] sm:$0xff] %vm186, %v554
  %581 = vst.msk [vmem:[#allocation5 + $0x20] sm:$0xff] %vm186, %v559
  %582 = vst.msk [vmem:[#allocation5 + $0x28] sm:$0xff] %vm186, %v564
  %583 = vst.msk [vmem:[#allocation5 + $0x30] sm:$0xff] %vm186, %v569
  %584 = vst.msk [vmem:[#allocation5 + $0x38] sm:$0xff] %vm186, %v574
  %v585 = vld [vmem:[%s4] sm:$0xff]
  %v586 = vld [vmem:[%s4 + $0x8] sm:$0xff]
  %v587 = vld [vmem:[%s4 + $0x10] sm:$0xff]
  %v588 = vld [vmem:[%s4 + $0x18] sm:$0xff]
  %s589 = scalar_lea.vmem %s4, 32
  %v590 = vld [vmem:[%s589] sm:$0xff]
  %v591 = vld [vmem:[%s589 + $0x8] sm:$0xff]
  %v592 = vld [vmem:[%s589 + $0x10] sm:$0xff]
  %v593 = vld [vmem:[%s589 + $0x18] sm:$0xff]
  %s594 = scalar_lea.vmem %s4, 64
  %v595 = vld [vmem:[%s594] sm:$0xff]
  %v596 = vld [vmem:[%s594 + $0x8] sm:$0xff]
  %v597 = vld [vmem:[%s594 + $0x10] sm:$0xff]
  %v598 = vld [vmem:[%s594 + $0x18] sm:$0xff]
  %s599 = scalar_lea.vmem %s4, 96
  %v600 = vld [vmem:[%s599] sm:$0xff]
  %v601 = vld [vmem:[%s599 + $0x8] sm:$0xff]
  %v602 = vld [vmem:[%s599 + $0x10] sm:$0xff]
  %v603 = vld [vmem:[%s599 + $0x18] sm:$0xff]
  %v604 = vld [vmem:[%s1] sm:$0xff]
  %v605 = vld [vmem:[%s2] sm:$0xff]
  %v606 = vld [vmem:[#allocation2] sm:$0xff]
  %v608 = vsel %vm186, %v604, 0
  %610 = vmatprep.subr.mxu0 0.0
  %611 = vmatpush1.msra.mxu0 0.0
  %612 = vmatprep.subr.mxu0 0.0
  %613 = vmatpush1.msra.mxu0 0.0
  %614 = vmatprep.subr.mxu0 0.0
  %615 = vmatpush1.msra.mxu0 0.0
  %616 = vmatprep.subr.mxu0 0.0
  %617 = vmatpush1.msra.mxu0 0.0
  %618 = vmatprep.subr.mxu0 0.0
  %619 = vmatpush1.msra.mxu0 0.0
  %620 = vmatprep.subr.mxu0 0.0
  %621 = vmatpush1.msra.mxu0 0.0
  %622 = vmatprep.subr.mxu0 0.0
  %623 = vmatpush1.msra.mxu0 0.0
  %624 = vmatprep.subr.mxu0 0.0
  %625 = vmatpush1.msra.mxu0 0.0
  %626 = vmatprep.subr.mxu0 0.0
  %627 = vmatpush1.msra.mxu0 0.0
  %628 = vmatprep.subr.mxu0 0.0
  %629 = vmatpush1.msra.mxu0 0.0
  %630 = vmatprep.subr.mxu0 0.0
  %631 = vmatpush1.msra.mxu0 0.0
  %632 = vmatprep.subr.mxu0 0.0
  %633 = vmatpush1.msra.mxu0 0.0
  %634 = vmatprep.subr.mxu0 0.0
  %635 = vmatpush1.msra.mxu0 %v588
  %636 = vmatprep.subr.mxu0 0.0
  %637 = vmatpush1.msra.mxu0 %v587
  %638 = vmatprep.subr.mxu0 0.0
  %639 = vmatpush1.msra.mxu0 %v586
  %640 = vmatprep.subr.mxu0 0.0
  %641 = vmatpush1.msra.mxu0 %v585
  %642 = vmatprep.subr.mxu0 0.0
  %643 = vmatpush2.msra.mxu0 0.0
  %644 = vmatprep.subr.mxu0 0.0
  %645 = vmatpush2.msra.mxu0 0.0
  %646 = vmatprep.subr.mxu0 0.0
  %647 = vmatpush2.msra.mxu0 0.0
  %648 = vmatprep.subr.mxu0 0.0
  %649 = vmatpush2.msra.mxu0 0.0
  %650 = vmatprep.subr.mxu0 0.0
  %651 = vmatpush2.msra.mxu0 0.0
  %652 = vmatprep.subr.mxu0 0.0
  %653 = vmatpush2.msra.mxu0 0.0
  %654 = vmatprep.subr.mxu0 0.0
  %655 = vmatpush2.msra.mxu0 0.0
  %656 = vmatprep.subr.mxu0 0.0
  %657 = vmatpush2.msra.mxu0 0.0
  %658 = vmatprep.subr.mxu0 0.0
  %659 = vmatpush2.msra.mxu0 0.0
  %660 = vmatprep.subr.mxu0 0.0
  %661 = vmatpush2.msra.mxu0 0.0
  %662 = vmatprep.subr.mxu0 0.0
  %663 = vmatpush2.msra.mxu0 0.0
  %664 = vmatprep.subr.mxu0 0.0
  %665 = vmatpush2.msra.mxu0 0.0
  %666 = vmatprep.subr.mxu0 0.0
  %667 = vmatpush2.msra.mxu0 0.0
  %668 = vmatprep.subr.mxu0 0.0
  %669 = vmatpush2.msra.mxu0 0.0
  %670 = vmatprep.subr.mxu0 0.0
  %671 = vmatpush2.msra.mxu0 0.0
  %672 = vmatprep.subr.mxu0 0.0
  %673 = vmatpush2.msra.mxu0 0.0
  %674 = vmatprep.mubr.f32.mxu0 0.0
  %675 = vmatmul.mubr.f32.gmra.mxu0 %v608
  %v676 = vpop.f32.mrf.mxu0
  %v677 = vadd.f32 0.0, %v676
  %v678 = vpop.f32.mrf.mxu0
  %679 = vdwg.mxu0
  %v680 = vadd.f32 %v606, %v677
  %v681 = vxor.u32 %v680, 2147483648
  %v682 = vmul.f32 %v681, 1.442695
  %v683 = vpow.pop %v682
  %v684 = vadd.f32 %v683, 1.0
  %v685 = vrcp.pop %v684
  %v686 = vmul.f32 1.0, %v685
  %v687 = vld [vmem:[#allocation3] sm:$0xff]
  %688 = vmatprep.subr.mxu0 0.0
  %689 = vmatpush1.msra.mxu0 0.0
  %690 = vmatprep.subr.mxu0 0.0
  %691 = vmatpush1.msra.mxu0 0.0
  %692 = vmatprep.subr.mxu0 0.0
  %693 = vmatpush1.msra.mxu0 0.0
  %694 = vmatprep.subr.mxu0 0.0
  %695 = vmatpush1.msra.mxu0 0.0
  %696 = vmatprep.subr.mxu0 0.0
  %697 = vmatpush1.msra.mxu0 0.0
  %698 = vmatprep.subr.mxu0 0.0
  %699 = vmatpush1.msra.mxu0 0.0
  %700 = vmatprep.subr.mxu0 0.0
  %701 = vmatpush1.msra.mxu0 0.0
  %702 = vmatprep.subr.mxu0 0.0
  %703 = vmatpush1.msra.mxu0 0.0
  %704 = vmatprep.subr.mxu0 0.0
  %705 = vmatpush1.msra.mxu0 0.0
  %706 = vmatprep.subr.mxu0 0.0
  %707 = vmatpush1.msra.mxu0 0.0
  %708 = vmatprep.subr.mxu0 0.0
  %709 = vmatpush1.msra.mxu0 0.0
  %710 = vmatprep.subr.mxu0 0.0
  %711 = vmatpush1.msra.mxu0 0.0
  %712 = vmatprep.subr.mxu0 0.0
  %713 = vmatpush1.msra.mxu0 %v593
  %714 = vmatprep.subr.mxu0 0.0
  %715 = vmatpush1.msra.mxu0 %v592
  %716 = vmatprep.subr.mxu0 0.0
  %717 = vmatpush1.msra.mxu0 %v591
  %718 = vmatprep.subr.mxu0 0.0
  %719 = vmatpush1.msra.mxu0 %v590
  %720 = vmatprep.subr.mxu0 0.0
  %721 = vmatpush2.msra.mxu0 0.0
  %722 = vmatprep.subr.mxu0 0.0
  %723 = vmatpush2.msra.mxu0 0.0
  %724 = vmatprep.subr.mxu0 0.0
  %725 = vmatpush2.msra.mxu0 0.0
  %726 = vmatprep.subr.mxu0 0.0
  %727 = vmatpush2.msra.mxu0 0.0
  %728 = vmatprep.subr.mxu0 0.0
  %729 = vmatpush2.msra.mxu0 0.0
  %730 = vmatprep.subr.mxu0 0.0
  %731 = vmatpush2.msra.mxu0 0.0
  %732 = vmatprep.subr.mxu0 0.0
  %733 = vmatpush2.msra.mxu0 0.0
  %734 = vmatprep.subr.mxu0 0.0
  %735 = vmatpush2.msra.mxu0 0.0
  %736 = vmatprep.subr.mxu0 0.0
  %737 = vmatpush2.msra.mxu0 0.0
  %738 = vmatprep.subr.mxu0 0.0
  %739 = vmatpush2.msra.mxu0 0.0
  %740 = vmatprep.subr.mxu0 0.0
  %741 = vmatpush2.msra.mxu0 0.0
  %742 = vmatprep.subr.mxu0 0.0
  %743 = vmatpush2.msra.mxu0 0.0
  %744 = vmatprep.subr.mxu0 0.0
  %745 = vmatpush2.msra.mxu0 0.0
  %746 = vmatprep.subr.mxu0 0.0
  %747 = vmatpush2.msra.mxu0 0.0
  %748 = vmatprep.subr.mxu0 0.0
  %749 = vmatpush2.msra.mxu0 0.0
  %750 = vmatprep.subr.mxu0 0.0
  %751 = vmatpush2.msra.mxu0 0.0
  %752 = vmatprep.mubr.f32.mxu0 0.0
  %753 = vmatmul.mubr.f32.gmra.mxu0 %v608
  %v754 = vpop.f32.mrf.mxu0
  %v755 = vadd.f32 0.0, %v754
  %v756 = vpop.f32.mrf.mxu0
  %757 = vdwg.mxu0
  %v758 = vadd.f32 %v687, %v755
  %v759 = vxor.u32 %v758, 2147483648
  %v760 = vmul.f32 %v759, 1.442695
  %v761 = vpow.pop %v760
  %v762 = vadd.f32 %v761, 1.0
  %v763 = vrcp.pop %v762
  %v764 = vmul.f32 1.0, %v763
  %v765 = vld [vmem:[#allocation4] sm:$0xff]
  %766 = vmatprep.subr.mxu0 0.0
  %767 = vmatpush1.msra.mxu0 0.0
  %768 = vmatprep.subr.mxu0 0.0
  %769 = vmatpush1.msra.mxu0 0.0
  %770 = vmatprep.subr.mxu0 0.0
  %771 = vmatpush1.msra.mxu0 0.0
  %772 = vmatprep.subr.mxu0 0.0
  %773 = vmatpush1.msra.mxu0 0.0
  %774 = vmatprep.subr.mxu0 0.0
  %775 = vmatpush1.msra.mxu0 0.0
  %776 = vmatprep.subr.mxu0 0.0
  %777 = vmatpush1.msra.mxu0 0.0
  %778 = vmatprep.subr.mxu0 0.0
  %779 = vmatpush1.msra.mxu0 0.0
  %780 = vmatprep.subr.mxu0 0.0
  %781 = vmatpush1.msra.mxu0 0.0
  %782 = vmatprep.subr.mxu0 0.0
  %783 = vmatpush1.msra.mxu0 0.0
  %784 = vmatprep.subr.mxu0 0.0
  %785 = vmatpush1.msra.mxu0 0.0
  %786 = vmatprep.subr.mxu0 0.0
  %787 = vmatpush1.msra.mxu0 0.0
  %788 = vmatprep.subr.mxu0 0.0
  %789 = vmatpush1.msra.mxu0 0.0
  %790 = vmatprep.subr.mxu0 0.0
  %791 = vmatpush1.msra.mxu0 %v598
  %792 = vmatprep.subr.mxu0 0.0
  %793 = vmatpush1.msra.mxu0 %v597
  %794 = vmatprep.subr.mxu0 0.0
  %795 = vmatpush1.msra.mxu0 %v596
  %796 = vmatprep.subr.mxu0 0.0
  %797 = vmatpush1.msra.mxu0 %v595
  %798 = vmatprep.subr.mxu0 0.0
  %799 = vmatpush2.msra.mxu0 0.0
  %800 = vmatprep.subr.mxu0 0.0
  %801 = vmatpush2.msra.mxu0 0.0
  %802 = vmatprep.subr.mxu0 0.0
  %803 = vmatpush2.msra.mxu0 0.0
  %804 = vmatprep.subr.mxu0 0.0
  %805 = vmatpush2.msra.mxu0 0.0
  %806 = vmatprep.subr.mxu0 0.0
  %807 = vmatpush2.msra.mxu0 0.0
  %808 = vmatprep.subr.mxu0 0.0
  %809 = vmatpush2.msra.mxu0 0.0
  %810 = vmatprep.subr.mxu0 0.0
  %811 = vmatpush2.msra.mxu0 0.0
  %812 = vmatprep.subr.mxu0 0.0
  %813 = vmatpush2.msra.mxu0 0.0
  %814 = vmatprep.subr.mxu0 0.0
  %815 = vmatpush2.msra.mxu0 0.0
  %816 = vmatprep.subr.mxu0 0.0
  %817 = vmatpush2.msra.mxu0 0.0
  %818 = vmatprep.subr.mxu0 0.0
  %819 = vmatpush2.msra.mxu0 0.0
  %820 = vmatprep.subr.mxu0 0.0
  %821 = vmatpush2.msra.mxu0 0.0
  %822 = vmatprep.subr.mxu0 0.0
  %823 = vmatpush2.msra.mxu0 0.0
  %824 = vmatprep.subr.mxu0 0.0
  %825 = vmatpush2.msra.mxu0 0.0
  %826 = vmatprep.subr.mxu0 0.0
  %827 = vmatpush2.msra.mxu0 0.0
  %828 = vmatprep.subr.mxu0 0.0
  %829 = vmatpush2.msra.mxu0 0.0
  %830 = vmatprep.mubr.f32.mxu0 0.0
  %831 = vmatmul.mubr.f32.gmra.mxu0 %v608
  %v832 = vpop.f32.mrf.mxu0
  %v833 = vadd.f32 0.0, %v832
  %v834 = vpop.f32.mrf.mxu0
  %835 = vdwg.mxu0
  %v836 = vadd.f32 %v765, %v833
  %v837 = vtanh.pop %v836
  %v838 = vld [vmem:[#allocation5] sm:$0xff]
  %839 = vmatprep.subr.mxu0 0.0
  %840 = vmatpush1.msra.mxu0 0.0
  %841 = vmatprep.subr.mxu0 0.0
  %842 = vmatpush1.msra.mxu0 0.0
  %843 = vmatprep.subr.mxu0 0.0
  %844 = vmatpush1.msra.mxu0 0.0
  %845 = vmatprep.subr.mxu0 0.0
  %846 = vmatpush1.msra.mxu0 0.0
  %847 = vmatprep.subr.mxu0 0.0
  %848 = vmatpush1.msra.mxu0 0.0
  %849 = vmatprep.subr.mxu0 0.0
  %850 = vmatpush1.msra.mxu0 0.0
  %851 = vmatprep.subr.mxu0 0.0
  %852 = vmatpush1.msra.mxu0 0.0
  %853 = vmatprep.subr.mxu0 0.0
  %854 = vmatpush1.msra.mxu0 0.0
  %855 = vmatprep.subr.mxu0 0.0
  %856 = vmatpush1.msra.mxu0 0.0
  %857 = vmatprep.subr.mxu0 0.0
  %858 = vmatpush1.msra.mxu0 0.0
  %859 = vmatprep.subr.mxu0 0.0
  %860 = vmatpush1.msra.mxu0 0.0
  %861 = vmatprep.subr.mxu0 0.0
  %862 = vmatpush1.msra.mxu0 0.0
  %863 = vmatprep.subr.mxu0 0.0
  %864 = vmatpush1.msra.mxu0 %v603
  %865 = vmatprep.subr.mxu0 0.0
  %866 = vmatpush1.msra.mxu0 %v602
  %867 = vmatprep.subr.mxu0 0.0
  %868 = vmatpush1.msra.mxu0 %v601
  %869 = vmatprep.subr.mxu0 0.0
  %870 = vmatpush1.msra.mxu0 %v600
  %871 = vmatprep.subr.mxu0 0.0
  %872 = vmatpush2.msra.mxu0 0.0
  %873 = vmatprep.subr.mxu0 0.0
  %874 = vmatpush2.msra.mxu0 0.0
  %875 = vmatprep.subr.mxu0 0.0
  %876 = vmatpush2.msra.mxu0 0.0
  %877 = vmatprep.subr.mxu0 0.0
  %878 = vmatpush2.msra.mxu0 0.0
  %879 = vmatprep.subr.mxu0 0.0
  %880 = vmatpush2.msra.mxu0 0.0
  %881 = vmatprep.subr.mxu0 0.0
  %882 = vmatpush2.msra.mxu0 0.0
  %883 = vmatprep.subr.mxu0 0.0
  %884 = vmatpush2.msra.mxu0 0.0
  %885 = vmatprep.subr.mxu0 0.0
  %886 = vmatpush2.msra.mxu0 0.0
  %887 = vmatprep.subr.mxu0 0.0
  %888 = vmatpush2.msra.mxu0 0.0
  %889 = vmatprep.subr.mxu0 0.0
  %890 = vmatpush2.msra.mxu0 0.0
  %891 = vmatprep.subr.mxu0 0.0
  %892 = vmatpush2.msra.mxu0 0.0
  %893 = vmatprep.subr.mxu0 0.0
  %894 = vmatpush2.msra.mxu0 0.0
  %895 = vmatprep.subr.mxu0 0.0
  %896 = vmatpush2.msra.mxu0 0.0
  %897 = vmatprep.subr.mxu0 0.0
  %898 = vmatpush2.msra.mxu0 0.0
  %899 = vmatprep.subr.mxu0 0.0
  %900 = vmatpush2.msra.mxu0 0.0
  %901 = vmatprep.subr.mxu0 0.0
  %902 = vmatpush2.msra.mxu0 0.0
  %903 = vmatprep.mubr.f32.mxu0 0.0
  %904 = vmatmul.mubr.f32.gmra.mxu0 %v608
  %v905 = vpop.f32.mrf.mxu0
  %v906 = vadd.f32 0.0, %v905
  %v907 = vpop.f32.mrf.mxu0
  %908 = vdwg.mxu0
  %v909 = vadd.f32 %v838, %v906
  %v910 = vxor.u32 %v909, 2147483648
  %v911 = vmul.f32 %v910, 1.442695
  %v912 = vpow.pop %v911
  %v913 = vadd.f32 %v912, 1.0
  %v914 = vrcp.pop %v913
  %v915 = vmul.f32 1.0, %v914
  %v916 = vmul.f32 %v764, %v605
  %v917 = vmul.f32 %v686, %v837
  %v918 = vadd.f32 %v916, %v917
  %v919 = vtanh.pop %v918
  %v920 = vmul.f32 %v915, %v919
  %921 = vst.msk [vmem:[#allocation6] sm:$0xff] %vm186, %v920
  %s922 = scalar_lea.vmem [#allocation2], 8
  %v923 = vld [vmem:[%s922] sm:$0xff]
  %v925 = vsel %vm186, %v920, 0
  %927 = vmatprep.subr.mxu0 0.0
  %928 = vmatpush1.msra.mxu0 0.0
  %929 = vmatprep.subr.mxu0 0.0
  %930 = vmatpush1.msra.mxu0 0.0
  %931 = vmatprep.subr.mxu0 0.0
  %932 = vmatpush1.msra.mxu0 0.0
  %933 = vmatprep.subr.mxu0 0.0
  %934 = vmatpush1.msra.mxu0 0.0
  %935 = vmatprep.subr.mxu0 0.0
  %936 = vmatpush1.msra.mxu0 0.0
  %937 = vmatprep.subr.mxu0 0.0
  %938 = vmatpush1.msra.mxu0 0.0
  %939 = vmatprep.subr.mxu0 0.0
  %940 = vmatpush1.msra.mxu0 0.0
  %941 = vmatprep.subr.mxu0 0.0
  %942 = vmatpush1.msra.mxu0 0.0
  %943 = vmatprep.subr.mxu0 0.0
  %944 = vmatpush1.msra.mxu0 0.0
  %945 = vmatprep.subr.mxu0 0.0
  %946 = vmatpush1.msra.mxu0 0.0
  %947 = vmatprep.subr.mxu0 0.0
  %948 = vmatpush1.msra.mxu0 0.0
  %949 = vmatprep.subr.mxu0 0.0
  %950 = vmatpush1.msra.mxu0 0.0
  %951 = vmatprep.subr.mxu0 0.0
  %952 = vmatpush1.msra.mxu0 %v588
  %953 = vmatprep.subr.mxu0 0.0
  %954 = vmatpush1.msra.mxu0 %v587
  %955 = vmatprep.subr.mxu0 0.0
  %956 = vmatpush1.msra.mxu0 %v586
  %957 = vmatprep.subr.mxu0 0.0
  %958 = vmatpush1.msra.mxu0 %v585
  %959 = vmatprep.subr.mxu0 0.0
  %960 = vmatpush2.msra.mxu0 0.0
  %961 = vmatprep.subr.mxu0 0.0
  %962 = vmatpush2.msra.mxu0 0.0
  %963 = vmatprep.subr.mxu0 0.0
  %964 = vmatpush2.msra.mxu0 0.0
  %965 = vmatprep.subr.mxu0 0.0
  %966 = vmatpush2.msra.mxu0 0.0
  %967 = vmatprep.subr.mxu0 0.0
  %968 = vmatpush2.msra.mxu0 0.0
  %969 = vmatprep.subr.mxu0 0.0
  %970 = vmatpush2.msra.mxu0 0.0
  %971 = vmatprep.subr.mxu0 0.0
  %972 = vmatpush2.msra.mxu0 0.0
  %973 = vmatprep.subr.mxu0 0.0
  %974 = vmatpush2.msra.mxu0 0.0
  %975 = vmatprep.subr.mxu0 0.0
  %976 = vmatpush2.msra.mxu0 0.0
  %977 = vmatprep.subr.mxu0 0.0
  %978 = vmatpush2.msra.mxu0 0.0
  %979 = vmatprep.subr.mxu0 0.0
  %980 = vmatpush2.msra.mxu0 0.0
  %981 = vmatprep.subr.mxu0 0.0
  %982 = vmatpush2.msra.mxu0 0.0
  %983 = vmatprep.subr.mxu0 0.0
  %984 = vmatpush2.msra.mxu0 0.0
  %985 = vmatprep.subr.mxu0 0.0
  %986 = vmatpush2.msra.mxu0 0.0
  %987 = vmatprep.subr.mxu0 0.0
  %988 = vmatpush2.msra.mxu0 0.0
  %989 = vmatprep.subr.mxu0 0.0
  %990 = vmatpush2.msra.mxu0 0.0
  %991 = vmatprep.mubr.f32.mxu0 0.0
  %992 = vmatmul.mubr.f32.gmra.mxu0 %v925
  %v993 = vpop.f32.mrf.mxu0
  %v994 = vadd.f32 0.0, %v993
  %v995 = vpop.f32.mrf.mxu0
  %996 = vdwg.mxu0
  %v997 = vadd.f32 %v923, %v994
  %v998 = vxor.u32 %v997, 2147483648
  %v999 = vmul.f32 %v998, 1.442695
  %v1000 = vpow.pop %v999
  %v1001 = vadd.f32 %v1000, 1.0
  %v1002 = vrcp.pop %v1001
  %v1003 = vmul.f32 1.0, %v1002
  %s1004 = scalar_lea.vmem [#allocation3], 8
  %v1005 = vld [vmem:[%s1004] sm:$0xff]
  %1006 = vmatprep.subr.mxu0 0.0
  %1007 = vmatpush1.msra.mxu0 0.0
  %1008 = vmatprep.subr.mxu0 0.0
  %1009 = vmatpush1.msra.mxu0 0.0
  %1010 = vmatprep.subr.mxu0 0.0
  %1011 = vmatpush1.msra.mxu0 0.0
  %1012 = vmatprep.subr.mxu0 0.0
  %1013 = vmatpush1.msra.mxu0 0.0
  %1014 = vmatprep.subr.mxu0 0.0
  %1015 = vmatpush1.msra.mxu0 0.0
  %1016 = vmatprep.subr.mxu0 0.0
  %1017 = vmatpush1.msra.mxu0 0.0
  %1018 = vmatprep.subr.mxu0 0.0
  %1019 = vmatpush1.msra.mxu0 0.0
  %1020 = vmatprep.subr.mxu0 0.0
  %1021 = vmatpush1.msra.mxu0 0.0
  %1022 = vmatprep.subr.mxu0 0.0
  %1023 = vmatpush1.msra.mxu0 0.0
  %1024 = vmatprep.subr.mxu0 0.0
  %1025 = vmatpush1.msra.mxu0 0.0
  %1026 = vmatprep.subr.mxu0 0.0
  %1027 = vmatpush1.msra.mxu0 0.0
  %1028 = vmatprep.subr.mxu0 0.0
  %1029 = vmatpush1.msra.mxu0 0.0
  %1030 = vmatprep.subr.mxu0 0.0
  %1031 = vmatpush1.msra.mxu0 %v593
  %1032 = vmatprep.subr.mxu0 0.0
  %1033 = vmatpush1.msra.mxu0 %v592
  %1034 = vmatprep.subr.mxu0 0.0
  %1035 = vmatpush1.msra.mxu0 %v591
  %1036 = vmatprep.subr.mxu0 0.0
  %1037 = vmatpush1.msra.mxu0 %v590
  %1038 = vmatprep.subr.mxu0 0.0
  %1039 = vmatpush2.msra.mxu0 0.0
  %1040 = vmatprep.subr.mxu0 0.0
  %1041 = vmatpush2.msra.mxu0 0.0
  %1042 = vmatprep.subr.mxu0 0.0
  %1043 = vmatpush2.msra.mxu0 0.0
  %1044 = vmatprep.subr.mxu0 0.0
  %1045 = vmatpush2.msra.mxu0 0.0
  %1046 = vmatprep.subr.mxu0 0.0
  %1047 = vmatpush2.msra.mxu0 0.0
  %1048 = vmatprep.subr.mxu0 0.0
  %1049 = vmatpush2.msra.mxu0 0.0
  %1050 = vmatprep.subr.mxu0 0.0
  %1051 = vmatpush2.msra.mxu0 0.0
  %1052 = vmatprep.subr.mxu0 0.0
  %1053 = vmatpush2.msra.mxu0 0.0
  %1054 = vmatprep.subr.mxu0 0.0
  %1055 = vmatpush2.msra.mxu0 0.0
  %1056 = vmatprep.subr.mxu0 0.0
  %1057 = vmatpush2.msra.mxu0 0.0
  %1058 = vmatprep.subr.mxu0 0.0
  %1059 = vmatpush2.msra.mxu0 0.0
  %1060 = vmatprep.subr.mxu0 0.0
  %1061 = vmatpush2.msra.mxu0 0.0
  %1062 = vmatprep.subr.mxu0 0.0
  %1063 = vmatpush2.msra.mxu0 0.0
  %1064 = vmatprep.subr.mxu0 0.0
  %1065 = vmatpush2.msra.mxu0 0.0
  %1066 = vmatprep.subr.mxu0 0.0
  %1067 = vmatpush2.msra.mxu0 0.0
  %1068 = vmatprep.subr.mxu0 0.0
  %1069 = vmatpush2.msra.mxu0 0.0
  %1070 = vmatprep.mubr.f32.mxu0 0.0
  %1071 = vmatmul.mubr.f32.gmra.mxu0 %v925
  %v1072 = vpop.f32.mrf.mxu0
  %v1073 = vadd.f32 0.0, %v1072
  %v1074 = vpop.f32.mrf.mxu0
  %1075 = vdwg.mxu0
  %v1076 = vadd.f32 %v1005, %v1073
  %v1077 = vxor.u32 %v1076, 2147483648
  %v1078 = vmul.f32 %v1077, 1.442695
  %v1079 = vpow.pop %v1078
  %v1080 = vadd.f32 %v1079, 1.0
  %v1081 = vrcp.pop %v1080
  %v1082 = vmul.f32 1.0, %v1081
  %s1083 = scalar_lea.vmem [#allocation4], 8
  %v1084 = vld [vmem:[%s1083] sm:$0xff]
  %1085 = vmatprep.subr.mxu0 0.0
  %1086 = vmatpush1.msra.mxu0 0.0
  %1087 = vmatprep.subr.mxu0 0.0
  %1088 = vmatpush1.msra.mxu0 0.0
  %1089 = vmatprep.subr.mxu0 0.0
  %1090 = vmatpush1.msra.mxu0 0.0
  %1091 = vmatprep.subr.mxu0 0.0
  %1092 = vmatpush1.msra.mxu0 0.0
  %1093 = vmatprep.subr.mxu0 0.0
  %1094 = vmatpush1.msra.mxu0 0.0
  %1095 = vmatprep.subr.mxu0 0.0
  %1096 = vmatpush1.msra.mxu0 0.0
  %1097 = vmatprep.subr.mxu0 0.0
  %1098 = vmatpush1.msra.mxu0 0.0
  %1099 = vmatprep.subr.mxu0 0.0
  %1100 = vmatpush1.msra.mxu0 0.0
  %1101 = vmatprep.subr.mxu0 0.0
  %1102 = vmatpush1.msra.mxu0 0.0
  %1103 = vmatprep.subr.mxu0 0.0
  %1104 = vmatpush1.msra.mxu0 0.0
  %1105 = vmatprep.subr.mxu0 0.0
  %1106 = vmatpush1.msra.mxu0 0.0
  %1107 = vmatprep.subr.mxu0 0.0
  %1108 = vmatpush1.msra.mxu0 0.0
  %1109 = vmatprep.subr.mxu0 0.0
  %1110 = vmatpush1.msra.mxu0 %v598
  %1111 = vmatprep.subr.mxu0 0.0
  %1112 = vmatpush1.msra.mxu0 %v597
  %1113 = vmatprep.subr.mxu0 0.0
  %1114 = vmatpush1.msra.mxu0 %v596
  %1115 = vmatprep.subr.mxu0 0.0
  %1116 = vmatpush1.msra.mxu0 %v595
  %1117 = vmatprep.subr.mxu0 0.0
  %1118 = vmatpush2.msra.mxu0 0.0
  %1119 = vmatprep.subr.mxu0 0.0
  %1120 = vmatpush2.msra.mxu0 0.0
  %1121 = vmatprep.subr.mxu0 0.0
  %1122 = vmatpush2.msra.mxu0 0.0
  %1123 = vmatprep.subr.mxu0 0.0
  %1124 = vmatpush2.msra.mxu0 0.0
  %1125 = vmatprep.subr.mxu0 0.0
  %1126 = vmatpush2.msra.mxu0 0.0
  %1127 = vmatprep.subr.mxu0 0.0
  %1128 = vmatpush2.msra.mxu0 0.0
  %1129 = vmatprep.subr.mxu0 0.0
  %1130 = vmatpush2.msra.mxu0 0.0
  %1131 = vmatprep.subr.mxu0 0.0
  %1132 = vmatpush2.msra.mxu0 0.0
  %1133 = vmatprep.subr.mxu0 0.0
  %1134 = vmatpush2.msra.mxu0 0.0
  %1135 = vmatprep.subr.mxu0 0.0
  %1136 = vmatpush2.msra.mxu0 0.0
  %1137 = vmatprep.subr.mxu0 0.0
  %1138 = vmatpush2.msra.mxu0 0.0
  %1139 = vmatprep.subr.mxu0 0.0
  %1140 = vmatpush2.msra.mxu0 0.0
  %1141 = vmatprep.subr.mxu0 0.0
  %1142 = vmatpush2.msra.mxu0 0.0
  %1143 = vmatprep.subr.mxu0 0.0
  %1144 = vmatpush2.msra.mxu0 0.0
  %1145 = vmatprep.subr.mxu0 0.0
  %1146 = vmatpush2.msra.mxu0 0.0
  %1147 = vmatprep.subr.mxu0 0.0
  %1148 = vmatpush2.msra.mxu0 0.0
  %1149 = vmatprep.mubr.f32.mxu0 0.0
  %1150 = vmatmul.mubr.f32.gmra.mxu0 %v925
  %v1151 = vpop.f32.mrf.mxu0
  %v1152 = vadd.f32 0.0, %v1151
  %v1153 = vpop.f32.mrf.mxu0
  %1154 = vdwg.mxu0
  %v1155 = vadd.f32 %v1084, %v1152
  %v1156 = vtanh.pop %v1155
  %s1157 = scalar_lea.vmem [#allocation5], 8
  %v1158 = vld [vmem:[%s1157] sm:$0xff]
  %1159 = vmatprep.subr.mxu0 0.0
  %1160 = vmatpush1.msra.mxu0 0.0
  %1161 = vmatprep.subr.mxu0 0.0
  %1162 = vmatpush1.msra.mxu0 0.0
  %1163 = vmatprep.subr.mxu0 0.0
  %1164 = vmatpush1.msra.mxu0 0.0
  %1165 = vmatprep.subr.mxu0 0.0
  %1166 = vmatpush1.msra.mxu0 0.0
  %1167 = vmatprep.subr.mxu0 0.0
  %1168 = vmatpush1.msra.mxu0 0.0
  %1169 = vmatprep.subr.mxu0 0.0
  %1170 = vmatpush1.msra.mxu0 0.0
  %1171 = vmatprep.subr.mxu0 0.0
  %1172 = vmatpush1.msra.mxu0 0.0
  %1173 = vmatprep.subr.mxu0 0.0
  %1174 = vmatpush1.msra.mxu0 0.0
  %1175 = vmatprep.subr.mxu0 0.0
  %1176 = vmatpush1.msra.mxu0 0.0
  %1177 = vmatprep.subr.mxu0 0.0
  %1178 = vmatpush1.msra.mxu0 0.0
  %1179 = vmatprep.subr.mxu0 0.0
  %1180 = vmatpush1.msra.mxu0 0.0
  %1181 = vmatprep.subr.mxu0 0.0
  %1182 = vmatpush1.msra.mxu0 0.0
  %1183 = vmatprep.subr.mxu0 0.0
  %1184 = vmatpush1.msra.mxu0 %v603
  %1185 = vmatprep.subr.mxu0 0.0
  %1186 = vmatpush1.msra.mxu0 %v602
  %1187 = vmatprep.subr.mxu0 0.0
  %1188 = vmatpush1.msra.mxu0 %v601
  %1189 = vmatprep.subr.mxu0 0.0
  %1190 = vmatpush1.msra.mxu0 %v600
  %1191 = vmatprep.subr.mxu0 0.0
  %1192 = vmatpush2.msra.mxu0 0.0
  %1193 = vmatprep.subr.mxu0 0.0
  %1194 = vmatpush2.msra.mxu0 0.0
  %1195 = vmatprep.subr.mxu0 0.0
  %1196 = vmatpush2.msra.mxu0 0.0
  %1197 = vmatprep.subr.mxu0 0.0
  %1198 = vmatpush2.msra.mxu0 0.0
  %1199 = vmatprep.subr.mxu0 0.0
  %1200 = vmatpush2.msra.mxu0 0.0
  %1201 = vmatprep.subr.mxu0 0.0
  %1202 = vmatpush2.msra.mxu0 0.0
  %1203 = vmatprep.subr.mxu0 0.0
  %1204 = vmatpush2.msra.mxu0 0.0
  %1205 = vmatprep.subr.mxu0 0.0
  %1206 = vmatpush2.msra.mxu0 0.0
  %1207 = vmatprep.subr.mxu0 0.0
  %1208 = vmatpush2.msra.mxu0 0.0
  %1209 = vmatprep.subr.mxu0 0.0
  %1210 = vmatpush2.msra.mxu0 0.0
  %1211 = vmatprep.subr.mxu0 0.0
  %1212 = vmatpush2.msra.mxu0 0.0
  %1213 = vmatprep.subr.mxu0 0.0
  %1214 = vmatpush2.msra.mxu0 0.0
  %1215 = vmatprep.subr.mxu0 0.0
  %1216 = vmatpush2.msra.mxu0 0.0
  %1217 = vmatprep.subr.mxu0 0.0
  %1218 = vmatpush2.msra.mxu0 0.0
  %1219 = vmatprep.subr.mxu0 0.0
  %1220 = vmatpush2.msra.mxu0 0.0
  %1221 = vmatprep.subr.mxu0 0.0
  %1222 = vmatpush2.msra.mxu0 0.0
  %1223 = vmatprep.mubr.f32.mxu0 0.0
  %1224 = vmatmul.mubr.f32.gmra.mxu0 %v925
  %v1225 = vpop.f32.mrf.mxu0
  %v1226 = vadd.f32 0.0, %v1225
  %v1227 = vpop.f32.mrf.mxu0
  %1228 = vdwg.mxu0
  %v1229 = vadd.f32 %v1158, %v1226
  %v1230 = vxor.u32 %v1229, 2147483648
  %v1231 = vmul.f32 %v1230, 1.442695
  %v1232 = vpow.pop %v1231
  %v1233 = vadd.f32 %v1232, 1.0
  %v1234 = vrcp.pop %v1233
  %v1235 = vmul.f32 1.0, %v1234
  %v1236 = vmul.f32 %v1082, %v918
  %v1237 = vmul.f32 %v1003, %v1156
  %v1238 = vadd.f32 %v1236, %v1237
  %v1239 = vtanh.pop %v1238
  %v1240 = vmul.f32 %v1235, %v1239
  %s1241 = scalar_lea.vmem [#allocation6], 8
  %1242 = vst.msk [vmem:[%s1241] sm:$0xff] %vm186, %v1240
  %s1243 = scalar_lea.vmem [#allocation2], 16
  %v1244 = vld [vmem:[%s1243] sm:$0xff]
  %v1246 = vsel %vm186, %v1240, 0
  %1248 = vmatprep.subr.mxu0 0.0
  %1249 = vmatpush1.msra.mxu0 0.0
  %1250 = vmatprep.subr.mxu0 0.0
  %1251 = vmatpush1.msra.mxu0 0.0
  %1252 = vmatprep.subr.mxu0 0.0
  %1253 = vmatpush1.msra.mxu0 0.0
  %1254 = vmatprep.subr.mxu0 0.0
  %1255 = vmatpush1.msra.mxu0 0.0
  %1256 = vmatprep.subr.mxu0 0.0
  %1257 = vmatpush1.msra.mxu0 0.0
  %1258 = vmatprep.subr.mxu0 0.0
  %1259 = vmatpush1.msra.mxu0 0.0
  %1260 = vmatprep.subr.mxu0 0.0
  %1261 = vmatpush1.msra.mxu0 0.0
  %1262 = vmatprep.subr.mxu0 0.0
  %1263 = vmatpush1.msra.mxu0 0.0
  %1264 = vmatprep.subr.mxu0 0.0
  %1265 = vmatpush1.msra.mxu0 0.0
  %1266 = vmatprep.subr.mxu0 0.0
  %1267 = vmatpush1.msra.mxu0 0.0
  %1268 = vmatprep.subr.mxu0 0.0
  %1269 = vmatpush1.msra.mxu0 0.0
  %1270 = vmatprep.subr.mxu0 0.0
  %1271 = vmatpush1.msra.mxu0 0.0
  %1272 = vmatprep.subr.mxu0 0.0
  %1273 = vmatpush1.msra.mxu0 %v588
  %1274 = vmatprep.subr.mxu0 0.0
  %1275 = vmatpush1.msra.mxu0 %v587
  %1276 = vmatprep.subr.mxu0 0.0
  %1277 = vmatpush1.msra.mxu0 %v586
  %1278 = vmatprep.subr.mxu0 0.0
  %1279 = vmatpush1.msra.mxu0 %v585
  %1280 = vmatprep.subr.mxu0 0.0
  %1281 = vmatpush2.msra.mxu0 0.0
  %1282 = vmatprep.subr.mxu0 0.0
  %1283 = vmatpush2.msra.mxu0 0.0
  %1284 = vmatprep.subr.mxu0 0.0
  %1285 = vmatpush2.msra.mxu0 0.0
  %1286 = vmatprep.subr.mxu0 0.0
  %1287 = vmatpush2.msra.mxu0 0.0
  %1288 = vmatprep.subr.mxu0 0.0
  %1289 = vmatpush2.msra.mxu0 0.0
  %1290 = vmatprep.subr.mxu0 0.0
  %1291 = vmatpush2.msra.mxu0 0.0
  %1292 = vmatprep.subr.mxu0 0.0
  %1293 = vmatpush2.msra.mxu0 0.0
  %1294 = vmatprep.subr.mxu0 0.0
  %1295 = vmatpush2.msra.mxu0 0.0
  %1296 = vmatprep.subr.mxu0 0.0
  %1297 = vmatpush2.msra.mxu0 0.0
  %1298 = vmatprep.subr.mxu0 0.0
  %1299 = vmatpush2.msra.mxu0 0.0
  %1300 = vmatprep.subr.mxu0 0.0
  %1301 = vmatpush2.msra.mxu0 0.0
  %1302 = vmatprep.subr.mxu0 0.0
  %1303 = vmatpush2.msra.mxu0 0.0
  %1304 = vmatprep.subr.mxu0 0.0
  %1305 = vmatpush2.msra.mxu0 0.0
  %1306 = vmatprep.subr.mxu0 0.0
  %1307 = vmatpush2.msra.mxu0 0.0
  %1308 = vmatprep.subr.mxu0 0.0
  %1309 = vmatpush2.msra.mxu0 0.0
  %1310 = vmatprep.subr.mxu0 0.0
  %1311 = vmatpush2.msra.mxu0 0.0
  %1312 = vmatprep.mubr.f32.mxu0 0.0
  %1313 = vmatmul.mubr.f32.gmra.mxu0 %v1246
  %v1314 = vpop.f32.mrf.mxu0
  %v1315 = vadd.f32 0.0, %v1314
  %v1316 = vpop.f32.mrf.mxu0
  %1317 = vdwg.mxu0
  %v1318 = vadd.f32 %v1244, %v1315
  %v1319 = vxor.u32 %v1318, 2147483648
  %v1320 = vmul.f32 %v1319, 1.442695
  %v1321 = vpow.pop %v1320
  %v1322 = vadd.f32 %v1321, 1.0
  %v1323 = vrcp.pop %v1322
  %v1324 = vmul.f32 1.0, %v1323
  %s1325 = scalar_lea.vmem [#allocation3], 16
  %v1326 = vld [vmem:[%s1325] sm:$0xff]
  %1327 = vmatprep.subr.mxu0 0.0
  %1328 = vmatpush1.msra.mxu0 0.0
  %1329 = vmatprep.subr.mxu0 0.0
  %1330 = vmatpush1.msra.mxu0 0.0
  %1331 = vmatprep.subr.mxu0 0.0
  %1332 = vmatpush1.msra.mxu0 0.0
  %1333 = vmatprep.subr.mxu0 0.0
  %1334 = vmatpush1.msra.mxu0 0.0
  %1335 = vmatprep.subr.mxu0 0.0
  %1336 = vmatpush1.msra.mxu0 0.0
  %1337 = vmatprep.subr.mxu0 0.0
  %1338 = vmatpush1.msra.mxu0 0.0
  %1339 = vmatprep.subr.mxu0 0.0
  %1340 = vmatpush1.msra.mxu0 0.0
  %1341 = vmatprep.subr.mxu0 0.0
  %1342 = vmatpush1.msra.mxu0 0.0
  %1343 = vmatprep.subr.mxu0 0.0
  %1344 = vmatpush1.msra.mxu0 0.0
  %1345 = vmatprep.subr.mxu0 0.0
  %1346 = vmatpush1.msra.mxu0 0.0
  %1347 = vmatprep.subr.mxu0 0.0
  %1348 = vmatpush1.msra.mxu0 0.0
  %1349 = vmatprep.subr.mxu0 0.0
  %1350 = vmatpush1.msra.mxu0 0.0
  %1351 = vmatprep.subr.mxu0 0.0
  %1352 = vmatpush1.msra.mxu0 %v593
  %1353 = vmatprep.subr.mxu0 0.0
  %1354 = vmatpush1.msra.mxu0 %v592
  %1355 = vmatprep.subr.mxu0 0.0
  %1356 = vmatpush1.msra.mxu0 %v591
  %1357 = vmatprep.subr.mxu0 0.0
  %1358 = vmatpush1.msra.mxu0 %v590
  %1359 = vmatprep.subr.mxu0 0.0
  %1360 = vmatpush2.msra.mxu0 0.0
  %1361 = vmatprep.subr.mxu0 0.0
  %1362 = vmatpush2.msra.mxu0 0.0
  %1363 = vmatprep.subr.mxu0 0.0
  %1364 = vmatpush2.msra.mxu0 0.0
  %1365 = vmatprep.subr.mxu0 0.0
  %1366 = vmatpush2.msra.mxu0 0.0
  %1367 = vmatprep.subr.mxu0 0.0
  %1368 = vmatpush2.msra.mxu0 0.0
  %1369 = vmatprep.subr.mxu0 0.0
  %1370 = vmatpush2.msra.mxu0 0.0
  %1371 = vmatprep.subr.mxu0 0.0
  %1372 = vmatpush2.msra.mxu0 0.0
  %1373 = vmatprep.subr.mxu0 0.0
  %1374 = vmatpush2.msra.mxu0 0.0
  %1375 = vmatprep.subr.mxu0 0.0
  %1376 = vmatpush2.msra.mxu0 0.0
  %1377 = vmatprep.subr.mxu0 0.0
  %1378 = vmatpush2.msra.mxu0 0.0
  %1379 = vmatprep.subr.mxu0 0.0
  %1380 = vmatpush2.msra.mxu0 0.0
  %1381 = vmatprep.subr.mxu0 0.0
  %1382 = vmatpush2.msra.mxu0 0.0
  %1383 = vmatprep.subr.mxu0 0.0
  %1384 = vmatpush2.msra.mxu0 0.0
  %1385 = vmatprep.subr.mxu0 0.0
  %1386 = vmatpush2.msra.mxu0 0.0
  %1387 = vmatprep.subr.mxu0 0.0
  %1388 = vmatpush2.msra.mxu0 0.0
  %1389 = vmatprep.subr.mxu0 0.0
  %1390 = vmatpush2.msra.mxu0 0.0
  %1391 = vmatprep.mubr.f32.mxu0 0.0
  %1392 = vmatmul.mubr.f32.gmra.mxu0 %v1246
  %v1393 = vpop.f32.mrf.mxu0
  %v1394 = vadd.f32 0.0, %v1393
  %v1395 = vpop.f32.mrf.mxu0
  %1396 = vdwg.mxu0
  %v1397 = vadd.f32 %v1326, %v1394
  %v1398 = vxor.u32 %v1397, 2147483648
  %v1399 = vmul.f32 %v1398, 1.442695
  %v1400 = vpow.pop %v1399
  %v1401 = vadd.f32 %v1400, 1.0
  %v1402 = vrcp.pop %v1401
  %v1403 = vmul.f32 1.0, %v1402
  %s1404 = scalar_lea.vmem [#allocation4], 16
  %v1405 = vld [vmem:[%s1404] sm:$0xff]
  %1406 = vmatprep.subr.mxu0 0.0
  %1407 = vmatpush1.msra.mxu0 0.0
  %1408 = vmatprep.subr.mxu0 0.0
  %1409 = vmatpush1.msra.mxu0 0.0
  %1410 = vmatprep.subr.mxu0 0.0
  %1411 = vmatpush1.msra.mxu0 0.0
  %1412 = vmatprep.subr.mxu0 0.0
  %1413 = vmatpush1.msra.mxu0 0.0
  %1414 = vmatprep.subr.mxu0 0.0
  %1415 = vmatpush1.msra.mxu0 0.0
  %1416 = vmatprep.subr.mxu0 0.0
  %1417 = vmatpush1.msra.mxu0 0.0
  %1418 = vmatprep.subr.mxu0 0.0
  %1419 = vmatpush1.msra.mxu0 0.0
  %1420 = vmatprep.subr.mxu0 0.0
  %1421 = vmatpush1.msra.mxu0 0.0
  %1422 = vmatprep.subr.mxu0 0.0
  %1423 = vmatpush1.msra.mxu0 0.0
  %1424 = vmatprep.subr.mxu0 0.0
  %1425 = vmatpush1.msra.mxu0 0.0
  %1426 = vmatprep.subr.mxu0 0.0
  %1427 = vmatpush1.msra.mxu0 0.0
  %1428 = vmatprep.subr.mxu0 0.0
  %1429 = vmatpush1.msra.mxu0 0.0
  %1430 = vmatprep.subr.mxu0 0.0
  %1431 = vmatpush1.msra.mxu0 %v598
  %1432 = vmatprep.subr.mxu0 0.0
  %1433 = vmatpush1.msra.mxu0 %v597
  %1434 = vmatprep.subr.mxu0 0.0
  %1435 = vmatpush1.msra.mxu0 %v596
  %1436 = vmatprep.subr.mxu0 0.0
  %1437 = vmatpush1.msra.mxu0 %v595
  %1438 = vmatprep.subr.mxu0 0.0
  %1439 = vmatpush2.msra.mxu0 0.0
  %1440 = vmatprep.subr.mxu0 0.0
  %1441 = vmatpush2.msra.mxu0 0.0
  %1442 = vmatprep.subr.mxu0 0.0
  %1443 = vmatpush2.msra.mxu0 0.0
  %1444 = vmatprep.subr.mxu0 0.0
  %1445 = vmatpush2.msra.mxu0 0.0
  %1446 = vmatprep.subr.mxu0 0.0
  %1447 = vmatpush2.msra.mxu0 0.0
  %1448 = vmatprep.subr.mxu0 0.0
  %1449 = vmatpush2.msra.mxu0 0.0
  %1450 = vmatprep.subr.mxu0 0.0
  %1451 = vmatpush2.msra.mxu0 0.0
  %1452 = vmatprep.subr.mxu0 0.0
  %1453 = vmatpush2.msra.mxu0 0.0
  %1454 = vmatprep.subr.mxu0 0.0
  %1455 = vmatpush2.msra.mxu0 0.0
  %1456 = vmatprep.subr.mxu0 0.0
  %1457 = vmatpush2.msra.mxu0 0.0
  %1458 = vmatprep.subr.mxu0 0.0
  %1459 = vmatpush2.msra.mxu0 0.0
  %1460 = vmatprep.subr.mxu0 0.0
  %1461 = vmatpush2.msra.mxu0 0.0
  %1462 = vmatprep.subr.mxu0 0.0
  %1463 = vmatpush2.msra.mxu0 0.0
  %1464 = vmatprep.subr.mxu0 0.0
  %1465 = vmatpush2.msra.mxu0 0.0
  %1466 = vmatprep.subr.mxu0 0.0
  %1467 = vmatpush2.msra.mxu0 0.0
  %1468 = vmatprep.subr.mxu0 0.0
  %1469 = vmatpush2.msra.mxu0 0.0
  %1470 = vmatprep.mubr.f32.mxu0 0.0
  %1471 = vmatmul.mubr.f32.gmra.mxu0 %v1246
  %v1472 = vpop.f32.mrf.mxu0
  %v1473 = vadd.f32 0.0, %v1472
  %v1474 = vpop.f32.mrf.mxu0
  %1475 = vdwg.mxu0
  %v1476 = vadd.f32 %v1405, %v1473
  %v1477 = vtanh.pop %v1476
  %s1478 = scalar_lea.vmem [#allocation5], 16
  %v1479 = vld [vmem:[%s1478] sm:$0xff]
  %1480 = vmatprep.subr.mxu0 0.0
  %1481 = vmatpush1.msra.mxu0 0.0
  %1482 = vmatprep.subr.mxu0 0.0
  %1483 = vmatpush1.msra.mxu0 0.0
  %1484 = vmatprep.subr.mxu0 0.0
  %1485 = vmatpush1.msra.mxu0 0.0
  %1486 = vmatprep.subr.mxu0 0.0
  %1487 = vmatpush1.msra.mxu0 0.0
  %1488 = vmatprep.subr.mxu0 0.0
  %1489 = vmatpush1.msra.mxu0 0.0
  %1490 = vmatprep.subr.mxu0 0.0
  %1491 = vmatpush1.msra.mxu0 0.0
  %1492 = vmatprep.subr.mxu0 0.0
  %1493 = vmatpush1.msra.mxu0 0.0
  %1494 = vmatprep.subr.mxu0 0.0
  %1495 = vmatpush1.msra.mxu0 0.0
  %1496 = vmatprep.subr.mxu0 0.0
  %1497 = vmatpush1.msra.mxu0 0.0
  %1498 = vmatprep.subr.mxu0 0.0
  %1499 = vmatpush1.msra.mxu0 0.0
  %1500 = vmatprep.subr.mxu0 0.0
  %1501 = vmatpush1.msra.mxu0 0.0
  %1502 = vmatprep.subr.mxu0 0.0
  %1503 = vmatpush1.msra.mxu0 0.0
  %1504 = vmatprep.subr.mxu0 0.0
  %1505 = vmatpush1.msra.mxu0 %v603
  %1506 = vmatprep.subr.mxu0 0.0
  %1507 = vmatpush1.msra.mxu0 %v602
  %1508 = vmatprep.subr.mxu0 0.0
  %1509 = vmatpush1.msra.mxu0 %v601
  %1510 = vmatprep.subr.mxu0 0.0
  %1511 = vmatpush1.msra.mxu0 %v600
  %1512 = vmatprep.subr.mxu0 0.0
  %1513 = vmatpush2.msra.mxu0 0.0
  %1514 = vmatprep.subr.mxu0 0.0
  %1515 = vmatpush2.msra.mxu0 0.0
  %1516 = vmatprep.subr.mxu0 0.0
  %1517 = vmatpush2.msra.mxu0 0.0
  %1518 = vmatprep.subr.mxu0 0.0
  %1519 = vmatpush2.msra.mxu0 0.0
  %1520 = vmatprep.subr.mxu0 0.0
  %1521 = vmatpush2.msra.mxu0 0.0
  %1522 = vmatprep.subr.mxu0 0.0
  %1523 = vmatpush2.msra.mxu0 0.0
  %1524 = vmatprep.subr.mxu0 0.0
  %1525 = vmatpush2.msra.mxu0 0.0
  %1526 = vmatprep.subr.mxu0 0.0
  %1527 = vmatpush2.msra.mxu0 0.0
  %1528 = vmatprep.subr.mxu0 0.0
  %1529 = vmatpush2.msra.mxu0 0.0
  %1530 = vmatprep.subr.mxu0 0.0
  %1531 = vmatpush2.msra.mxu0 0.0
  %1532 = vmatprep.subr.mxu0 0.0
  %1533 = vmatpush2.msra.mxu0 0.0
  %1534 = vmatprep.subr.mxu0 0.0
  %1535 = vmatpush2.msra.mxu0 0.0
  %1536 = vmatprep.subr.mxu0 0.0
  %1537 = vmatpush2.msra.mxu0 0.0
  %1538 = vmatprep.subr.mxu0 0.0
  %1539 = vmatpush2.msra.mxu0 0.0
  %1540 = vmatprep.subr.mxu0 0.0
  %1541 = vmatpush2.msra.mxu0 0.0
  %1542 = vmatprep.subr.mxu0 0.0
  %1543 = vmatpush2.msra.mxu0 0.0
  %1544 = vmatprep.mubr.f32.mxu0 0.0
  %1545 = vmatmul.mubr.f32.gmra.mxu0 %v1246
  %v1546 = vpop.f32.mrf.mxu0
  %v1547 = vadd.f32 0.0, %v1546
  %v1548 = vpop.f32.mrf.mxu0
  %1549 = vdwg.mxu0
  %v1550 = vadd.f32 %v1479, %v1547
  %v1551 = vxor.u32 %v1550, 2147483648
  %v1552 = vmul.f32 %v1551, 1.442695
  %v1553 = vpow.pop %v1552
  %v1554 = vadd.f32 %v1553, 1.0
  %v1555 = vrcp.pop %v1554
  %v1556 = vmul.f32 1.0, %v1555
  %v1557 = vmul.f32 %v1403, %v1238
  %v1558 = vmul.f32 %v1324, %v1477
  %v1559 = vadd.f32 %v1557, %v1558
  %v1560 = vtanh.pop %v1559
  %v1561 = vmul.f32 %v1556, %v1560
  %s1562 = scalar_lea.vmem [#allocation6], 16
  %1563 = vst.msk [vmem:[%s1562] sm:$0xff] %vm186, %v1561
  %s1564 = scalar_lea.vmem [#allocation2], 24
  %v1565 = vld [vmem:[%s1564] sm:$0xff]
  %v1567 = vsel %vm186, %v1561, 0
  %1569 = vmatprep.subr.mxu0 0.0
  %1570 = vmatpush1.msra.mxu0 0.0
  %1571 = vmatprep.subr.mxu0 0.0
  %1572 = vmatpush1.msra.mxu0 0.0
  %1573 = vmatprep.subr.mxu0 0.0
  %1574 = vmatpush1.msra.mxu0 0.0
  %1575 = vmatprep.subr.mxu0 0.0
  %1576 = vmatpush1.msra.mxu0 0.0
  %1577 = vmatprep.subr.mxu0 0.0
  %1578 = vmatpush1.msra.mxu0 0.0
  %1579 = vmatprep.subr.mxu0 0.0
  %1580 = vmatpush1.msra.mxu0 0.0
  %1581 = vmatprep.subr.mxu0 0.0
  %1582 = vmatpush1.msra.mxu0 0.0
  %1583 = vmatprep.subr.mxu0 0.0
  %1584 = vmatpush1.msra.mxu0 0.0
  %1585 = vmatprep.subr.mxu0 0.0
  %1586 = vmatpush1.msra.mxu0 0.0
  %1587 = vmatprep.subr.mxu0 0.0
  %1588 = vmatpush1.msra.mxu0 0.0
  %1589 = vmatprep.subr.mxu0 0.0
  %1590 = vmatpush1.msra.mxu0 0.0
  %1591 = vmatprep.subr.mxu0 0.0
  %1592 = vmatpush1.msra.mxu0 0.0
  %1593 = vmatprep.subr.mxu0 0.0
  %1594 = vmatpush1.msra.mxu0 %v588
  %1595 = vmatprep.subr.mxu0 0.0
  %1596 = vmatpush1.msra.mxu0 %v587
  %1597 = vmatprep.subr.mxu0 0.0
  %1598 = vmatpush1.msra.mxu0 %v586
  %1599 = vmatprep.subr.mxu0 0.0
  %1600 = vmatpush1.msra.mxu0 %v585
  %1601 = vmatprep.subr.mxu0 0.0
  %1602 = vmatpush2.msra.mxu0 0.0
  %1603 = vmatprep.subr.mxu0 0.0
  %1604 = vmatpush2.msra.mxu0 0.0
  %1605 = vmatprep.subr.mxu0 0.0
  %1606 = vmatpush2.msra.mxu0 0.0
  %1607 = vmatprep.subr.mxu0 0.0
  %1608 = vmatpush2.msra.mxu0 0.0
  %1609 = vmatprep.subr.mxu0 0.0
  %1610 = vmatpush2.msra.mxu0 0.0
  %1611 = vmatprep.subr.mxu0 0.0
  %1612 = vmatpush2.msra.mxu0 0.0
  %1613 = vmatprep.subr.mxu0 0.0
  %1614 = vmatpush2.msra.mxu0 0.0
  %1615 = vmatprep.subr.mxu0 0.0
  %1616 = vmatpush2.msra.mxu0 0.0
  %1617 = vmatprep.subr.mxu0 0.0
  %1618 = vmatpush2.msra.mxu0 0.0
  %1619 = vmatprep.subr.mxu0 0.0
  %1620 = vmatpush2.msra.mxu0 0.0
  %1621 = vmatprep.subr.mxu0 0.0
  %1622 = vmatpush2.msra.mxu0 0.0
  %1623 = vmatprep.subr.mxu0 0.0
  %1624 = vmatpush2.msra.mxu0 0.0
  %1625 = vmatprep.subr.mxu0 0.0
  %1626 = vmatpush2.msra.mxu0 0.0
  %1627 = vmatprep.subr.mxu0 0.0
  %1628 = vmatpush2.msra.mxu0 0.0
  %1629 = vmatprep.subr.mxu0 0.0
  %1630 = vmatpush2.msra.mxu0 0.0
  %1631 = vmatprep.subr.mxu0 0.0
  %1632 = vmatpush2.msra.mxu0 0.0
  %1633 = vmatprep.mubr.f32.mxu0 0.0
  %1634 = vmatmul.mubr.f32.gmra.mxu0 %v1567
  %v1635 = vpop.f32.mrf.mxu0
  %v1636 = vadd.f32 0.0, %v1635
  %v1637 = vpop.f32.mrf.mxu0
  %1638 = vdwg.mxu0
  %v1639 = vadd.f32 %v1565, %v1636
  %v1640 = vxor.u32 %v1639, 2147483648
  %v1641 = vmul.f32 %v1640, 1.442695
  %v1642 = vpow.pop %v1641
  %v1643 = vadd.f32 %v1642, 1.0
  %v1644 = vrcp.pop %v1643
  %v1645 = vmul.f32 1.0, %v1644
  %s1646 = scalar_lea.vmem [#allocation3], 24
  %v1647 = vld [vmem:[%s1646] sm:$0xff]
  %1648 = vmatprep.subr.mxu0 0.0
  %1649 = vmatpush1.msra.mxu0 0.0
  %1650 = vmatprep.subr.mxu0 0.0
  %1651 = vmatpush1.msra.mxu0 0.0
  %1652 = vmatprep.subr.mxu0 0.0
  %1653 = vmatpush1.msra.mxu0 0.0
  %1654 = vmatprep.subr.mxu0 0.0
  %1655 = vmatpush1.msra.mxu0 0.0
  %1656 = vmatprep.subr.mxu0 0.0
  %1657 = vmatpush1.msra.mxu0 0.0
  %1658 = vmatprep.subr.mxu0 0.0
  %1659 = vmatpush1.msra.mxu0 0.0
  %1660 = vmatprep.subr.mxu0 0.0
  %1661 = vmatpush1.msra.mxu0 0.0
  %1662 = vmatprep.subr.mxu0 0.0
  %1663 = vmatpush1.msra.mxu0 0.0
  %1664 = vmatprep.subr.mxu0 0.0
  %1665 = vmatpush1.msra.mxu0 0.0
  %1666 = vmatprep.subr.mxu0 0.0
  %1667 = vmatpush1.msra.mxu0 0.0
  %1668 = vmatprep.subr.mxu0 0.0
  %1669 = vmatpush1.msra.mxu0 0.0
  %1670 = vmatprep.subr.mxu0 0.0
  %1671 = vmatpush1.msra.mxu0 0.0
  %1672 = vmatprep.subr.mxu0 0.0
  %1673 = vmatpush1.msra.mxu0 %v593
  %1674 = vmatprep.subr.mxu0 0.0
  %1675 = vmatpush1.msra.mxu0 %v592
  %1676 = vmatprep.subr.mxu0 0.0
  %1677 = vmatpush1.msra.mxu0 %v591
  %1678 = vmatprep.subr.mxu0 0.0
  %1679 = vmatpush1.msra.mxu0 %v590
  %1680 = vmatprep.subr.mxu0 0.0
  %1681 = vmatpush2.msra.mxu0 0.0
  %1682 = vmatprep.subr.mxu0 0.0
  %1683 = vmatpush2.msra.mxu0 0.0
  %1684 = vmatprep.subr.mxu0 0.0
  %1685 = vmatpush2.msra.mxu0 0.0
  %1686 = vmatprep.subr.mxu0 0.0
  %1687 = vmatpush2.msra.mxu0 0.0
  %1688 = vmatprep.subr.mxu0 0.0
  %1689 = vmatpush2.msra.mxu0 0.0
  %1690 = vmatprep.subr.mxu0 0.0
  %1691 = vmatpush2.msra.mxu0 0.0
  %1692 = vmatprep.subr.mxu0 0.0
  %1693 = vmatpush2.msra.mxu0 0.0
  %1694 = vmatprep.subr.mxu0 0.0
  %1695 = vmatpush2.msra.mxu0 0.0
  %1696 = vmatprep.subr.mxu0 0.0
  %1697 = vmatpush2.msra.mxu0 0.0
  %1698 = vmatprep.subr.mxu0 0.0
  %1699 = vmatpush2.msra.mxu0 0.0
  %1700 = vmatprep.subr.mxu0 0.0
  %1701 = vmatpush2.msra.mxu0 0.0
  %1702 = vmatprep.subr.mxu0 0.0
  %1703 = vmatpush2.msra.mxu0 0.0
  %1704 = vmatprep.subr.mxu0 0.0
  %1705 = vmatpush2.msra.mxu0 0.0
  %1706 = vmatprep.subr.mxu0 0.0
  %1707 = vmatpush2.msra.mxu0 0.0
  %1708 = vmatprep.subr.mxu0 0.0
  %1709 = vmatpush2.msra.mxu0 0.0
  %1710 = vmatprep.subr.mxu0 0.0
  %1711 = vmatpush2.msra.mxu0 0.0
  %1712 = vmatprep.mubr.f32.mxu0 0.0
  %1713 = vmatmul.mubr.f32.gmra.mxu0 %v1567
  %v1714 = vpop.f32.mrf.mxu0
  %v1715 = vadd.f32 0.0, %v1714
  %v1716 = vpop.f32.mrf.mxu0
  %1717 = vdwg.mxu0
  %v1718 = vadd.f32 %v1647, %v1715
  %v1719 = vxor.u32 %v1718, 2147483648
  %v1720 = vmul.f32 %v1719, 1.442695
  %v1721 = vpow.pop %v1720
  %v1722 = vadd.f32 %v1721, 1.0
  %v1723 = vrcp.pop %v1722
  %v1724 = vmul.f32 1.0, %v1723
  %s1725 = scalar_lea.vmem [#allocation4], 24
  %v1726 = vld [vmem:[%s1725] sm:$0xff]
  %1727 = vmatprep.subr.mxu0 0.0
  %1728 = vmatpush1.msra.mxu0 0.0
  %1729 = vmatprep.subr.mxu0 0.0
  %1730 = vmatpush1.msra.mxu0 0.0
  %1731 = vmatprep.subr.mxu0 0.0
  %1732 = vmatpush1.msra.mxu0 0.0
  %1733 = vmatprep.subr.mxu0 0.0
  %1734 = vmatpush1.msra.mxu0 0.0
  %1735 = vmatprep.subr.mxu0 0.0
  %1736 = vmatpush1.msra.mxu0 0.0
  %1737 = vmatprep.subr.mxu0 0.0
  %1738 = vmatpush1.msra.mxu0 0.0
  %1739 = vmatprep.subr.mxu0 0.0
  %1740 = vmatpush1.msra.mxu0 0.0
  %1741 = vmatprep.subr.mxu0 0.0
  %1742 = vmatpush1.msra.mxu0 0.0
  %1743 = vmatprep.subr.mxu0 0.0
  %1744 = vmatpush1.msra.mxu0 0.0
  %1745 = vmatprep.subr.mxu0 0.0
  %1746 = vmatpush1.msra.mxu0 0.0
  %1747 = vmatprep.subr.mxu0 0.0
  %1748 = vmatpush1.msra.mxu0 0.0
  %1749 = vmatprep.subr.mxu0 0.0
  %1750 = vmatpush1.msra.mxu0 0.0
  %1751 = vmatprep.subr.mxu0 0.0
  %1752 = vmatpush1.msra.mxu0 %v598
  %1753 = vmatprep.subr.mxu0 0.0
  %1754 = vmatpush1.msra.mxu0 %v597
  %1755 = vmatprep.subr.mxu0 0.0
  %1756 = vmatpush1.msra.mxu0 %v596
  %1757 = vmatprep.subr.mxu0 0.0
  %1758 = vmatpush1.msra.mxu0 %v595
  %1759 = vmatprep.subr.mxu0 0.0
  %1760 = vmatpush2.msra.mxu0 0.0
  %1761 = vmatprep.subr.mxu0 0.0
  %1762 = vmatpush2.msra.mxu0 0.0
  %1763 = vmatprep.subr.mxu0 0.0
  %1764 = vmatpush2.msra.mxu0 0.0
  %1765 = vmatprep.subr.mxu0 0.0
  %1766 = vmatpush2.msra.mxu0 0.0
  %1767 = vmatprep.subr.mxu0 0.0
  %1768 = vmatpush2.msra.mxu0 0.0
  %1769 = vmatprep.subr.mxu0 0.0
  %1770 = vmatpush2.msra.mxu0 0.0
  %1771 = vmatprep.subr.mxu0 0.0
  %1772 = vmatpush2.msra.mxu0 0.0
  %1773 = vmatprep.subr.mxu0 0.0
  %1774 = vmatpush2.msra.mxu0 0.0
  %1775 = vmatprep.subr.mxu0 0.0
  %1776 = vmatpush2.msra.mxu0 0.0
  %1777 = vmatprep.subr.mxu0 0.0
  %1778 = vmatpush2.msra.mxu0 0.0
  %1779 = vmatprep.subr.mxu0 0.0
  %1780 = vmatpush2.msra.mxu0 0.0
  %1781 = vmatprep.subr.mxu0 0.0
  %1782 = vmatpush2.msra.mxu0 0.0
  %1783 = vmatprep.subr.mxu0 0.0
  %1784 = vmatpush2.msra.mxu0 0.0
  %1785 = vmatprep.subr.mxu0 0.0
  %1786 = vmatpush2.msra.mxu0 0.0
  %1787 = vmatprep.subr.mxu0 0.0
  %1788 = vmatpush2.msra.mxu0 0.0
  %1789 = vmatprep.subr.mxu0 0.0
  %1790 = vmatpush2.msra.mxu0 0.0
  %1791 = vmatprep.mubr.f32.mxu0 0.0
  %1792 = vmatmul.mubr.f32.gmra.mxu0 %v1567
  %v1793 = vpop.f32.mrf.mxu0
  %v1794 = vadd.f32 0.0, %v1793
  %v1795 = vpop.f32.mrf.mxu0
  %1796 = vdwg.mxu0
  %v1797 = vadd.f32 %v1726, %v1794
  %v1798 = vtanh.pop %v1797
  %s1799 = scalar_lea.vmem [#allocation5], 24
  %v1800 = vld [vmem:[%s1799] sm:$0xff]
  %1801 = vmatprep.subr.mxu0 0.0
  %1802 = vmatpush1.msra.mxu0 0.0
  %1803 = vmatprep.subr.mxu0 0.0
  %1804 = vmatpush1.msra.mxu0 0.0
  %1805 = vmatprep.subr.mxu0 0.0
  %1806 = vmatpush1.msra.mxu0 0.0
  %1807 = vmatprep.subr.mxu0 0.0
  %1808 = vmatpush1.msra.mxu0 0.0
  %1809 = vmatprep.subr.mxu0 0.0
  %1810 = vmatpush1.msra.mxu0 0.0
  %1811 = vmatprep.subr.mxu0 0.0
  %1812 = vmatpush1.msra.mxu0 0.0
  %1813 = vmatprep.subr.mxu0 0.0
  %1814 = vmatpush1.msra.mxu0 0.0
  %1815 = vmatprep.subr.mxu0 0.0
  %1816 = vmatpush1.msra.mxu0 0.0
  %1817 = vmatprep.subr.mxu0 0.0
  %1818 = vmatpush1.msra.mxu0 0.0
  %1819 = vmatprep.subr.mxu0 0.0
  %1820 = vmatpush1.msra.mxu0 0.0
  %1821 = vmatprep.subr.mxu0 0.0
  %1822 = vmatpush1.msra.mxu0 0.0
  %1823 = vmatprep.subr.mxu0 0.0
  %1824 = vmatpush1.msra.mxu0 0.0
  %1825 = vmatprep.subr.mxu0 0.0
  %1826 = vmatpush1.msra.mxu0 %v603
  %1827 = vmatprep.subr.mxu0 0.0
  %1828 = vmatpush1.msra.mxu0 %v602
  %1829 = vmatprep.subr.mxu0 0.0
  %1830 = vmatpush1.msra.mxu0 %v601
  %1831 = vmatprep.subr.mxu0 0.0
  %1832 = vmatpush1.msra.mxu0 %v600
  %1833 = vmatprep.subr.mxu0 0.0
  %1834 = vmatpush2.msra.mxu0 0.0
  %1835 = vmatprep.subr.mxu0 0.0
  %1836 = vmatpush2.msra.mxu0 0.0
  %1837 = vmatprep.subr.mxu0 0.0
  %1838 = vmatpush2.msra.mxu0 0.0
  %1839 = vmatprep.subr.mxu0 0.0
  %1840 = vmatpush2.msra.mxu0 0.0
  %1841 = vmatprep.subr.mxu0 0.0
  %1842 = vmatpush2.msra.mxu0 0.0
  %1843 = vmatprep.subr.mxu0 0.0
  %1844 = vmatpush2.msra.mxu0 0.0
  %1845 = vmatprep.subr.mxu0 0.0
  %1846 = vmatpush2.msra.mxu0 0.0
  %1847 = vmatprep.subr.mxu0 0.0
  %1848 = vmatpush2.msra.mxu0 0.0
  %1849 = vmatprep.subr.mxu0 0.0
  %1850 = vmatpush2.msra.mxu0 0.0
  %1851 = vmatprep.subr.mxu0 0.0
  %1852 = vmatpush2.msra.mxu0 0.0
  %1853 = vmatprep.subr.mxu0 0.0
  %1854 = vmatpush2.msra.mxu0 0.0
  %1855 = vmatprep.subr.mxu0 0.0
  %1856 = vmatpush2.msra.mxu0 0.0
  %1857 = vmatprep.subr.mxu0 0.0
  %1858 = vmatpush2.msra.mxu0 0.0
  %1859 = vmatprep.subr.mxu0 0.0
  %1860 = vmatpush2.msra.mxu0 0.0
  %1861 = vmatprep.subr.mxu0 0.0
  %1862 = vmatpush2.msra.mxu0 0.0
  %1863 = vmatprep.subr.mxu0 0.0
  %1864 = vmatpush2.msra.mxu0 0.0
  %1865 = vmatprep.mubr.f32.mxu0 0.0
  %1866 = vmatmul.mubr.f32.gmra.mxu0 %v1567
  %v1867 = vpop.f32.mrf.mxu0
  %v1868 = vadd.f32 0.0, %v1867
  %v1869 = vpop.f32.mrf.mxu0
  %1870 = vdwg.mxu0
  %v1871 = vadd.f32 %v1800, %v1868
  %v1872 = vxor.u32 %v1871, 2147483648
  %v1873 = vmul.f32 %v1872, 1.442695
  %v1874 = vpow.pop %v1873
  %v1875 = vadd.f32 %v1874, 1.0
  %v1876 = vrcp.pop %v1875
  %v1877 = vmul.f32 1.0, %v1876
  %v1878 = vmul.f32 %v1724, %v1559
  %v1879 = vmul.f32 %v1645, %v1798
  %v1880 = vadd.f32 %v1878, %v1879
  %v1881 = vtanh.pop %v1880
  %v1882 = vmul.f32 %v1877, %v1881
  %s1883 = scalar_lea.vmem [#allocation6], 24
  %1884 = vst.msk [vmem:[%s1883] sm:$0xff] %vm186, %v1882
  %s1885 = scalar_lea.vmem [#allocation2], 32
  %v1886 = vld [vmem:[%s1885] sm:$0xff]
  %v1888 = vsel %vm186, %v1882, 0
  %1890 = vmatprep.subr.mxu0 0.0
  %1891 = vmatpush1.msra.mxu0 0.0
  %1892 = vmatprep.subr.mxu0 0.0
  %1893 = vmatpush1.msra.mxu0 0.0
  %1894 = vmatprep.subr.mxu0 0.0
  %1895 = vmatpush1.msra.mxu0 0.0
  %1896 = vmatprep.subr.mxu0 0.0
  %1897 = vmatpush1.msra.mxu0 0.0
  %1898 = vmatprep.subr.mxu0 0.0
  %1899 = vmatpush1.msra.mxu0 0.0
  %1900 = vmatprep.subr.mxu0 0.0
  %1901 = vmatpush1.msra.mxu0 0.0
  %1902 = vmatprep.subr.mxu0 0.0
  %1903 = vmatpush1.msra.mxu0 0.0
  %1904 = vmatprep.subr.mxu0 0.0
  %1905 = vmatpush1.msra.mxu0 0.0
  %1906 = vmatprep.subr.mxu0 0.0
  %1907 = vmatpush1.msra.mxu0 0.0
  %1908 = vmatprep.subr.mxu0 0.0
  %1909 = vmatpush1.msra.mxu0 0.0
  %1910 = vmatprep.subr.mxu0 0.0
  %1911 = vmatpush1.msra.mxu0 0.0
  %1912 = vmatprep.subr.mxu0 0.0
  %1913 = vmatpush1.msra.mxu0 0.0
  %1914 = vmatprep.subr.mxu0 0.0
  %1915 = vmatpush1.msra.mxu0 %v588
  %1916 = vmatprep.subr.mxu0 0.0
  %1917 = vmatpush1.msra.mxu0 %v587
  %1918 = vmatprep.subr.mxu0 0.0
  %1919 = vmatpush1.msra.mxu0 %v586
  %1920 = vmatprep.subr.mxu0 0.0
  %1921 = vmatpush1.msra.mxu0 %v585
  %1922 = vmatprep.subr.mxu0 0.0
  %1923 = vmatpush2.msra.mxu0 0.0
  %1924 = vmatprep.subr.mxu0 0.0
  %1925 = vmatpush2.msra.mxu0 0.0
  %1926 = vmatprep.subr.mxu0 0.0
  %1927 = vmatpush2.msra.mxu0 0.0
  %1928 = vmatprep.subr.mxu0 0.0
  %1929 = vmatpush2.msra.mxu0 0.0
  %1930 = vmatprep.subr.mxu0 0.0
  %1931 = vmatpush2.msra.mxu0 0.0
  %1932 = vmatprep.subr.mxu0 0.0
  %1933 = vmatpush2.msra.mxu0 0.0
  %1934 = vmatprep.subr.mxu0 0.0
  %1935 = vmatpush2.msra.mxu0 0.0
  %1936 = vmatprep.subr.mxu0 0.0
  %1937 = vmatpush2.msra.mxu0 0.0
  %1938 = vmatprep.subr.mxu0 0.0
  %1939 = vmatpush2.msra.mxu0 0.0
  %1940 = vmatprep.subr.mxu0 0.0
  %1941 = vmatpush2.msra.mxu0 0.0
  %1942 = vmatprep.subr.mxu0 0.0
  %1943 = vmatpush2.msra.mxu0 0.0
  %1944 = vmatprep.subr.mxu0 0.0
  %1945 = vmatpush2.msra.mxu0 0.0
  %1946 = vmatprep.subr.mxu0 0.0
  %1947 = vmatpush2.msra.mxu0 0.0
  %1948 = vmatprep.subr.mxu0 0.0
  %1949 = vmatpush2.msra.mxu0 0.0
  %1950 = vmatprep.subr.mxu0 0.0
  %1951 = vmatpush2.msra.mxu0 0.0
  %1952 = vmatprep.subr.mxu0 0.0
  %1953 = vmatpush2.msra.mxu0 0.0
  %1954 = vmatprep.mubr.f32.mxu0 0.0
  %1955 = vmatmul.mubr.f32.gmra.mxu0 %v1888
  %v1956 = vpop.f32.mrf.mxu0
  %v1957 = vadd.f32 0.0, %v1956
  %v1958 = vpop.f32.mrf.mxu0
  %1959 = vdwg.mxu0
  %v1960 = vadd.f32 %v1886, %v1957
  %v1961 = vxor.u32 %v1960, 2147483648
  %v1962 = vmul.f32 %v1961, 1.442695
  %v1963 = vpow.pop %v1962
  %v1964 = vadd.f32 %v1963, 1.0
  %v1965 = vrcp.pop %v1964
  %v1966 = vmul.f32 1.0, %v1965
  %s1967 = scalar_lea.vmem [#allocation3], 32
  %v1968 = vld [vmem:[%s1967] sm:$0xff]
  %1969 = vmatprep.subr.mxu0 0.0
  %1970 = vmatpush1.msra.mxu0 0.0
  %1971 = vmatprep.subr.mxu0 0.0
  %1972 = vmatpush1.msra.mxu0 0.0
  %1973 = vmatprep.subr.mxu0 0.0
  %1974 = vmatpush1.msra.mxu0 0.0
  %1975 = vmatprep.subr.mxu0 0.0
  %1976 = vmatpush1.msra.mxu0 0.0
  %1977 = vmatprep.subr.mxu0 0.0
  %1978 = vmatpush1.msra.mxu0 0.0
  %1979 = vmatprep.subr.mxu0 0.0
  %1980 = vmatpush1.msra.mxu0 0.0
  %1981 = vmatprep.subr.mxu0 0.0
  %1982 = vmatpush1.msra.mxu0 0.0
  %1983 = vmatprep.subr.mxu0 0.0
  %1984 = vmatpush1.msra.mxu0 0.0
  %1985 = vmatprep.subr.mxu0 0.0
  %1986 = vmatpush1.msra.mxu0 0.0
  %1987 = vmatprep.subr.mxu0 0.0
  %1988 = vmatpush1.msra.mxu0 0.0
  %1989 = vmatprep.subr.mxu0 0.0
  %1990 = vmatpush1.msra.mxu0 0.0
  %1991 = vmatprep.subr.mxu0 0.0
  %1992 = vmatpush1.msra.mxu0 0.0
  %1993 = vmatprep.subr.mxu0 0.0
  %1994 = vmatpush1.msra.mxu0 %v593
  %1995 = vmatprep.subr.mxu0 0.0
  %1996 = vmatpush1.msra.mxu0 %v592
  %1997 = vmatprep.subr.mxu0 0.0
  %1998 = vmatpush1.msra.mxu0 %v591
  %1999 = vmatprep.subr.mxu0 0.0
  %2000 = vmatpush1.msra.mxu0 %v590
  %2001 = vmatprep.subr.mxu0 0.0
  %2002 = vmatpush2.msra.mxu0 0.0
  %2003 = vmatprep.subr.mxu0 0.0
  %2004 = vmatpush2.msra.mxu0 0.0
  %2005 = vmatprep.subr.mxu0 0.0
  %2006 = vmatpush2.msra.mxu0 0.0
  %2007 = vmatprep.subr.mxu0 0.0
  %2008 = vmatpush2.msra.mxu0 0.0
  %2009 = vmatprep.subr.mxu0 0.0
  %2010 = vmatpush2.msra.mxu0 0.0
  %2011 = vmatprep.subr.mxu0 0.0
  %2012 = vmatpush2.msra.mxu0 0.0
  %2013 = vmatprep.subr.mxu0 0.0
  %2014 = vmatpush2.msra.mxu0 0.0
  %2015 = vmatprep.subr.mxu0 0.0
  %2016 = vmatpush2.msra.mxu0 0.0
  %2017 = vmatprep.subr.mxu0 0.0
  %2018 = vmatpush2.msra.mxu0 0.0
  %2019 = vmatprep.subr.mxu0 0.0
  %2020 = vmatpush2.msra.mxu0 0.0
  %2021 = vmatprep.subr.mxu0 0.0
  %2022 = vmatpush2.msra.mxu0 0.0
  %2023 = vmatprep.subr.mxu0 0.0
  %2024 = vmatpush2.msra.mxu0 0.0
  %2025 = vmatprep.subr.mxu0 0.0
  %2026 = vmatpush2.msra.mxu0 0.0
  %2027 = vmatprep.subr.mxu0 0.0
  %2028 = vmatpush2.msra.mxu0 0.0
  %2029 = vmatprep.subr.mxu0 0.0
  %2030 = vmatpush2.msra.mxu0 0.0
  %2031 = vmatprep.subr.mxu0 0.0
  %2032 = vmatpush2.msra.mxu0 0.0
  %2033 = vmatprep.mubr.f32.mxu0 0.0
  %2034 = vmatmul.mubr.f32.gmra.mxu0 %v1888
  %v2035 = vpop.f32.mrf.mxu0
  %v2036 = vadd.f32 0.0, %v2035
  %v2037 = vpop.f32.mrf.mxu0
  %2038 = vdwg.mxu0
  %v2039 = vadd.f32 %v1968, %v2036
  %v2040 = vxor.u32 %v2039, 2147483648
  %v2041 = vmul.f32 %v2040, 1.442695
  %v2042 = vpow.pop %v2041
  %v2043 = vadd.f32 %v2042, 1.0
  %v2044 = vrcp.pop %v2043
  %v2045 = vmul.f32 1.0, %v2044
  %s2046 = scalar_lea.vmem [#allocation4], 32
  %v2047 = vld [vmem:[%s2046] sm:$0xff]
  %2048 = vmatprep.subr.mxu0 0.0
  %2049 = vmatpush1.msra.mxu0 0.0
  %2050 = vmatprep.subr.mxu0 0.0
  %2051 = vmatpush1.msra.mxu0 0.0
  %2052 = vmatprep.subr.mxu0 0.0
  %2053 = vmatpush1.msra.mxu0 0.0
  %2054 = vmatprep.subr.mxu0 0.0
  %2055 = vmatpush1.msra.mxu0 0.0
  %2056 = vmatprep.subr.mxu0 0.0
  %2057 = vmatpush1.msra.mxu0 0.0
  %2058 = vmatprep.subr.mxu0 0.0
  %2059 = vmatpush1.msra.mxu0 0.0
  %2060 = vmatprep.subr.mxu0 0.0
  %2061 = vmatpush1.msra.mxu0 0.0
  %2062 = vmatprep.subr.mxu0 0.0
  %2063 = vmatpush1.msra.mxu0 0.0
  %2064 = vmatprep.subr.mxu0 0.0
  %2065 = vmatpush1.msra.mxu0 0.0
  %2066 = vmatprep.subr.mxu0 0.0
  %2067 = vmatpush1.msra.mxu0 0.0
  %2068 = vmatprep.subr.mxu0 0.0
  %2069 = vmatpush1.msra.mxu0 0.0
  %2070 = vmatprep.subr.mxu0 0.0
  %2071 = vmatpush1.msra.mxu0 0.0
  %2072 = vmatprep.subr.mxu0 0.0
  %2073 = vmatpush1.msra.mxu0 %v598
  %2074 = vmatprep.subr.mxu0 0.0
  %2075 = vmatpush1.msra.mxu0 %v597
  %2076 = vmatprep.subr.mxu0 0.0
  %2077 = vmatpush1.msra.mxu0 %v596
  %2078 = vmatprep.subr.mxu0 0.0
  %2079 = vmatpush1.msra.mxu0 %v595
  %2080 = vmatprep.subr.mxu0 0.0
  %2081 = vmatpush2.msra.mxu0 0.0
  %2082 = vmatprep.subr.mxu0 0.0
  %2083 = vmatpush2.msra.mxu0 0.0
  %2084 = vmatprep.subr.mxu0 0.0
  %2085 = vmatpush2.msra.mxu0 0.0
  %2086 = vmatprep.subr.mxu0 0.0
  %2087 = vmatpush2.msra.mxu0 0.0
  %2088 = vmatprep.subr.mxu0 0.0
  %2089 = vmatpush2.msra.mxu0 0.0
  %2090 = vmatprep.subr.mxu0 0.0
  %2091 = vmatpush2.msra.mxu0 0.0
  %2092 = vmatprep.subr.mxu0 0.0
  %2093 = vmatpush2.msra.mxu0 0.0
  %2094 = vmatprep.subr.mxu0 0.0
  %2095 = vmatpush2.msra.mxu0 0.0
  %2096 = vmatprep.subr.mxu0 0.0
  %2097 = vmatpush2.msra.mxu0 0.0
  %2098 = vmatprep.subr.mxu0 0.0
  %2099 = vmatpush2.msra.mxu0 0.0
  %2100 = vmatprep.subr.mxu0 0.0
  %2101 = vmatpush2.msra.mxu0 0.0
  %2102 = vmatprep.subr.mxu0 0.0
  %2103 = vmatpush2.msra.mxu0 0.0
  %2104 = vmatprep.subr.mxu0 0.0
  %2105 = vmatpush2.msra.mxu0 0.0
  %2106 = vmatprep.subr.mxu0 0.0
  %2107 = vmatpush2.msra.mxu0 0.0
  %2108 = vmatprep.subr.mxu0 0.0
  %2109 = vmatpush2.msra.mxu0 0.0
  %2110 = vmatprep.subr.mxu0 0.0
  %2111 = vmatpush2.msra.mxu0 0.0
  %2112 = vmatprep.mubr.f32.mxu0 0.0
  %2113 = vmatmul.mubr.f32.gmra.mxu0 %v1888
  %v2114 = vpop.f32.mrf.mxu0
  %v2115 = vadd.f32 0.0, %v2114
  %v2116 = vpop.f32.mrf.mxu0
  %2117 = vdwg.mxu0
  %v2118 = vadd.f32 %v2047, %v2115
  %v2119 = vtanh.pop %v2118
  %s2120 = scalar_lea.vmem [#allocation5], 32
  %v2121 = vld [vmem:[%s2120] sm:$0xff]
  %2122 = vmatprep.subr.mxu0 0.0
  %2123 = vmatpush1.msra.mxu0 0.0
  %2124 = vmatprep.subr.mxu0 0.0
  %2125 = vmatpush1.msra.mxu0 0.0
  %2126 = vmatprep.subr.mxu0 0.0
  %2127 = vmatpush1.msra.mxu0 0.0
  %2128 = vmatprep.subr.mxu0 0.0
  %2129 = vmatpush1.msra.mxu0 0.0
  %2130 = vmatprep.subr.mxu0 0.0
  %2131 = vmatpush1.msra.mxu0 0.0
  %2132 = vmatprep.subr.mxu0 0.0
  %2133 = vmatpush1.msra.mxu0 0.0
  %2134 = vmatprep.subr.mxu0 0.0
  %2135 = vmatpush1.msra.mxu0 0.0
  %2136 = vmatprep.subr.mxu0 0.0
  %2137 = vmatpush1.msra.mxu0 0.0
  %2138 = vmatprep.subr.mxu0 0.0
  %2139 = vmatpush1.msra.mxu0 0.0
  %2140 = vmatprep.subr.mxu0 0.0
  %2141 = vmatpush1.msra.mxu0 0.0
  %2142 = vmatprep.subr.mxu0 0.0
  %2143 = vmatpush1.msra.mxu0 0.0
  %2144 = vmatprep.subr.mxu0 0.0
  %2145 = vmatpush1.msra.mxu0 0.0
  %2146 = vmatprep.subr.mxu0 0.0
  %2147 = vmatpush1.msra.mxu0 %v603
  %2148 = vmatprep.subr.mxu0 0.0
  %2149 = vmatpush1.msra.mxu0 %v602
  %2150 = vmatprep.subr.mxu0 0.0
  %2151 = vmatpush1.msra.mxu0 %v601
  %2152 = vmatprep.subr.mxu0 0.0
  %2153 = vmatpush1.msra.mxu0 %v600
  %2154 = vmatprep.subr.mxu0 0.0
  %2155 = vmatpush2.msra.mxu0 0.0
  %2156 = vmatprep.subr.mxu0 0.0
  %2157 = vmatpush2.msra.mxu0 0.0
  %2158 = vmatprep.subr.mxu0 0.0
  %2159 = vmatpush2.msra.mxu0 0.0
  %2160 = vmatprep.subr.mxu0 0.0
  %2161 = vmatpush2.msra.mxu0 0.0
  %2162 = vmatprep.subr.mxu0 0.0
  %2163 = vmatpush2.msra.mxu0 0.0
  %2164 = vmatprep.subr.mxu0 0.0
  %2165 = vmatpush2.msra.mxu0 0.0
  %2166 = vmatprep.subr.mxu0 0.0
  %2167 = vmatpush2.msra.mxu0 0.0
  %2168 = vmatprep.subr.mxu0 0.0
  %2169 = vmatpush2.msra.mxu0 0.0
  %2170 = vmatprep.subr.mxu0 0.0
  %2171 = vmatpush2.msra.mxu0 0.0
  %2172 = vmatprep.subr.mxu0 0.0
  %2173 = vmatpush2.msra.mxu0 0.0
  %2174 = vmatprep.subr.mxu0 0.0
  %2175 = vmatpush2.msra.mxu0 0.0
  %2176 = vmatprep.subr.mxu0 0.0
  %2177 = vmatpush2.msra.mxu0 0.0
  %2178 = vmatprep.subr.mxu0 0.0
  %2179 = vmatpush2.msra.mxu0 0.0
  %2180 = vmatprep.subr.mxu0 0.0
  %2181 = vmatpush2.msra.mxu0 0.0
  %2182 = vmatprep.subr.mxu0 0.0
  %2183 = vmatpush2.msra.mxu0 0.0
  %2184 = vmatprep.subr.mxu0 0.0
  %2185 = vmatpush2.msra.mxu0 0.0
  %2186 = vmatprep.mubr.f32.mxu0 0.0
  %2187 = vmatmul.mubr.f32.gmra.mxu0 %v1888
  %v2188 = vpop.f32.mrf.mxu0
  %v2189 = vadd.f32 0.0, %v2188
  %v2190 = vpop.f32.mrf.mxu0
  %2191 = vdwg.mxu0
  %v2192 = vadd.f32 %v2121, %v2189
  %v2193 = vxor.u32 %v2192, 2147483648
  %v2194 = vmul.f32 %v2193, 1.442695
  %v2195 = vpow.pop %v2194
  %v2196 = vadd.f32 %v2195, 1.0
  %v2197 = vrcp.pop %v2196
  %v2198 = vmul.f32 1.0, %v2197
  %v2199 = vmul.f32 %v2045, %v1880
  %v2200 = vmul.f32 %v1966, %v2119
  %v2201 = vadd.f32 %v2199, %v2200
  %v2202 = vtanh.pop %v2201
  %v2203 = vmul.f32 %v2198, %v2202
  %s2204 = scalar_lea.vmem [#allocation6], 32
  %2205 = vst.msk [vmem:[%s2204] sm:$0xff] %vm186, %v2203
  %s2206 = scalar_lea.vmem [#allocation2], 40
  %v2207 = vld [vmem:[%s2206] sm:$0xff]
  %v2209 = vsel %vm186, %v2203, 0
  %2211 = vmatprep.subr.mxu0 0.0
  %2212 = vmatpush1.msra.mxu0 0.0
  %2213 = vmatprep.subr.mxu0 0.0
  %2214 = vmatpush1.msra.mxu0 0.0
  %2215 = vmatprep.subr.mxu0 0.0
  %2216 = vmatpush1.msra.mxu0 0.0
  %2217 = vmatprep.subr.mxu0 0.0
  %2218 = vmatpush1.msra.mxu0 0.0
  %2219 = vmatprep.subr.mxu0 0.0
  %2220 = vmatpush1.msra.mxu0 0.0
  %2221 = vmatprep.subr.mxu0 0.0
  %2222 = vmatpush1.msra.mxu0 0.0
  %2223 = vmatprep.subr.mxu0 0.0
  %2224 = vmatpush1.msra.mxu0 0.0
  %2225 = vmatprep.subr.mxu0 0.0
  %2226 = vmatpush1.msra.mxu0 0.0
  %2227 = vmatprep.subr.mxu0 0.0
  %2228 = vmatpush1.msra.mxu0 0.0
  %2229 = vmatprep.subr.mxu0 0.0
  %2230 = vmatpush1.msra.mxu0 0.0
  %2231 = vmatprep.subr.mxu0 0.0
  %2232 = vmatpush1.msra.mxu0 0.0
  %2233 = vmatprep.subr.mxu0 0.0
  %2234 = vmatpush1.msra.mxu0 0.0
  %2235 = vmatprep.subr.mxu0 0.0
  %2236 = vmatpush1.msra.mxu0 %v588
  %2237 = vmatprep.subr.mxu0 0.0
  %2238 = vmatpush1.msra.mxu0 %v587
  %2239 = vmatprep.subr.mxu0 0.0
  %2240 = vmatpush1.msra.mxu0 %v586
  %2241 = vmatprep.subr.mxu0 0.0
  %2242 = vmatpush1.msra.mxu0 %v585
  %2243 = vmatprep.subr.mxu0 0.0
  %2244 = vmatpush2.msra.mxu0 0.0
  %2245 = vmatprep.subr.mxu0 0.0
  %2246 = vmatpush2.msra.mxu0 0.0
  %2247 = vmatprep.subr.mxu0 0.0
  %2248 = vmatpush2.msra.mxu0 0.0
  %2249 = vmatprep.subr.mxu0 0.0
  %2250 = vmatpush2.msra.mxu0 0.0
  %2251 = vmatprep.subr.mxu0 0.0
  %2252 = vmatpush2.msra.mxu0 0.0
  %2253 = vmatprep.subr.mxu0 0.0
  %2254 = vmatpush2.msra.mxu0 0.0
  %2255 = vmatprep.subr.mxu0 0.0
  %2256 = vmatpush2.msra.mxu0 0.0
  %2257 = vmatprep.subr.mxu0 0.0
  %2258 = vmatpush2.msra.mxu0 0.0
  %2259 = vmatprep.subr.mxu0 0.0
  %2260 = vmatpush2.msra.mxu0 0.0
  %2261 = vmatprep.subr.mxu0 0.0
  %2262 = vmatpush2.msra.mxu0 0.0
  %2263 = vmatprep.subr.mxu0 0.0
  %2264 = vmatpush2.msra.mxu0 0.0
  %2265 = vmatprep.subr.mxu0 0.0
  %2266 = vmatpush2.msra.mxu0 0.0
  %2267 = vmatprep.subr.mxu0 0.0
  %2268 = vmatpush2.msra.mxu0 0.0
  %2269 = vmatprep.subr.mxu0 0.0
  %2270 = vmatpush2.msra.mxu0 0.0
  %2271 = vmatprep.subr.mxu0 0.0
  %2272 = vmatpush2.msra.mxu0 0.0
  %2273 = vmatprep.subr.mxu0 0.0
  %2274 = vmatpush2.msra.mxu0 0.0
  %2275 = vmatprep.mubr.f32.mxu0 0.0
  %2276 = vmatmul.mubr.f32.gmra.mxu0 %v2209
  %v2277 = vpop.f32.mrf.mxu0
  %v2278 = vadd.f32 0.0, %v2277
  %v2279 = vpop.f32.mrf.mxu0
  %2280 = vdwg.mxu0
  %v2281 = vadd.f32 %v2207, %v2278
  %v2282 = vxor.u32 %v2281, 2147483648
  %v2283 = vmul.f32 %v2282, 1.442695
  %v2284 = vpow.pop %v2283
  %v2285 = vadd.f32 %v2284, 1.0
  %v2286 = vrcp.pop %v2285
  %v2287 = vmul.f32 1.0, %v2286
  %s2288 = scalar_lea.vmem [#allocation3], 40
  %v2289 = vld [vmem:[%s2288] sm:$0xff]
  %2290 = vmatprep.subr.mxu0 0.0
  %2291 = vmatpush1.msra.mxu0 0.0
  %2292 = vmatprep.subr.mxu0 0.0
  %2293 = vmatpush1.msra.mxu0 0.0
  %2294 = vmatprep.subr.mxu0 0.0
  %2295 = vmatpush1.msra.mxu0 0.0
  %2296 = vmatprep.subr.mxu0 0.0
  %2297 = vmatpush1.msra.mxu0 0.0
  %2298 = vmatprep.subr.mxu0 0.0
  %2299 = vmatpush1.msra.mxu0 0.0
  %2300 = vmatprep.subr.mxu0 0.0
  %2301 = vmatpush1.msra.mxu0 0.0
  %2302 = vmatprep.subr.mxu0 0.0
  %2303 = vmatpush1.msra.mxu0 0.0
  %2304 = vmatprep.subr.mxu0 0.0
  %2305 = vmatpush1.msra.mxu0 0.0
  %2306 = vmatprep.subr.mxu0 0.0
  %2307 = vmatpush1.msra.mxu0 0.0
  %2308 = vmatprep.subr.mxu0 0.0
  %2309 = vmatpush1.msra.mxu0 0.0
  %2310 = vmatprep.subr.mxu0 0.0
  %2311 = vmatpush1.msra.mxu0 0.0
  %2312 = vmatprep.subr.mxu0 0.0
  %2313 = vmatpush1.msra.mxu0 0.0
  %2314 = vmatprep.subr.mxu0 0.0
  %2315 = vmatpush1.msra.mxu0 %v593
  %2316 = vmatprep.subr.mxu0 0.0
  %2317 = vmatpush1.msra.mxu0 %v592
  %2318 = vmatprep.subr.mxu0 0.0
  %2319 = vmatpush1.msra.mxu0 %v591
  %2320 = vmatprep.subr.mxu0 0.0
  %2321 = vmatpush1.msra.mxu0 %v590
  %2322 = vmatprep.subr.mxu0 0.0
  %2323 = vmatpush2.msra.mxu0 0.0
  %2324 = vmatprep.subr.mxu0 0.0
  %2325 = vmatpush2.msra.mxu0 0.0
  %2326 = vmatprep.subr.mxu0 0.0
  %2327 = vmatpush2.msra.mxu0 0.0
  %2328 = vmatprep.subr.mxu0 0.0
  %2329 = vmatpush2.msra.mxu0 0.0
  %2330 = vmatprep.subr.mxu0 0.0
  %2331 = vmatpush2.msra.mxu0 0.0
  %2332 = vmatprep.subr.mxu0 0.0
  %2333 = vmatpush2.msra.mxu0 0.0
  %2334 = vmatprep.subr.mxu0 0.0
  %2335 = vmatpush2.msra.mxu0 0.0
  %2336 = vmatprep.subr.mxu0 0.0
  %2337 = vmatpush2.msra.mxu0 0.0
  %2338 = vmatprep.subr.mxu0 0.0
  %2339 = vmatpush2.msra.mxu0 0.0
  %2340 = vmatprep.subr.mxu0 0.0
  %2341 = vmatpush2.msra.mxu0 0.0
  %2342 = vmatprep.subr.mxu0 0.0
  %2343 = vmatpush2.msra.mxu0 0.0
  %2344 = vmatprep.subr.mxu0 0.0
  %2345 = vmatpush2.msra.mxu0 0.0
  %2346 = vmatprep.subr.mxu0 0.0
  %2347 = vmatpush2.msra.mxu0 0.0
  %2348 = vmatprep.subr.mxu0 0.0
  %2349 = vmatpush2.msra.mxu0 0.0
  %2350 = vmatprep.subr.mxu0 0.0
  %2351 = vmatpush2.msra.mxu0 0.0
  %2352 = vmatprep.subr.mxu0 0.0
  %2353 = vmatpush2.msra.mxu0 0.0
  %2354 = vmatprep.mubr.f32.mxu0 0.0
  %2355 = vmatmul.mubr.f32.gmra.mxu0 %v2209
  %v2356 = vpop.f32.mrf.mxu0
  %v2357 = vadd.f32 0.0, %v2356
  %v2358 = vpop.f32.mrf.mxu0
  %2359 = vdwg.mxu0
  %v2360 = vadd.f32 %v2289, %v2357
  %v2361 = vxor.u32 %v2360, 2147483648
  %v2362 = vmul.f32 %v2361, 1.442695
  %v2363 = vpow.pop %v2362
  %v2364 = vadd.f32 %v2363, 1.0
  %v2365 = vrcp.pop %v2364
  %v2366 = vmul.f32 1.0, %v2365
  %s2367 = scalar_lea.vmem [#allocation4], 40
  %v2368 = vld [vmem:[%s2367] sm:$0xff]
  %2369 = vmatprep.subr.mxu0 0.0
  %2370 = vmatpush1.msra.mxu0 0.0
  %2371 = vmatprep.subr.mxu0 0.0
  %2372 = vmatpush1.msra.mxu0 0.0
  %2373 = vmatprep.subr.mxu0 0.0
  %2374 = vmatpush1.msra.mxu0 0.0
  %2375 = vmatprep.subr.mxu0 0.0
  %2376 = vmatpush1.msra.mxu0 0.0
  %2377 = vmatprep.subr.mxu0 0.0
  %2378 = vmatpush1.msra.mxu0 0.0
  %2379 = vmatprep.subr.mxu0 0.0
  %2380 = vmatpush1.msra.mxu0 0.0
  %2381 = vmatprep.subr.mxu0 0.0
  %2382 = vmatpush1.msra.mxu0 0.0
  %2383 = vmatprep.subr.mxu0 0.0
  %2384 = vmatpush1.msra.mxu0 0.0
  %2385 = vmatprep.subr.mxu0 0.0
  %2386 = vmatpush1.msra.mxu0 0.0
  %2387 = vmatprep.subr.mxu0 0.0
  %2388 = vmatpush1.msra.mxu0 0.0
  %2389 = vmatprep.subr.mxu0 0.0
  %2390 = vmatpush1.msra.mxu0 0.0
  %2391 = vmatprep.subr.mxu0 0.0
  %2392 = vmatpush1.msra.mxu0 0.0
  %2393 = vmatprep.subr.mxu0 0.0
  %2394 = vmatpush1.msra.mxu0 %v598
  %2395 = vmatprep.subr.mxu0 0.0
  %2396 = vmatpush1.msra.mxu0 %v597
  %2397 = vmatprep.subr.mxu0 0.0
  %2398 = vmatpush1.msra.mxu0 %v596
  %2399 = vmatprep.subr.mxu0 0.0
  %2400 = vmatpush1.msra.mxu0 %v595
  %2401 = vmatprep.subr.mxu0 0.0
  %2402 = vmatpush2.msra.mxu0 0.0
  %2403 = vmatprep.subr.mxu0 0.0
  %2404 = vmatpush2.msra.mxu0 0.0
  %2405 = vmatprep.subr.mxu0 0.0
  %2406 = vmatpush2.msra.mxu0 0.0
  %2407 = vmatprep.subr.mxu0 0.0
  %2408 = vmatpush2.msra.mxu0 0.0
  %2409 = vmatprep.subr.mxu0 0.0
  %2410 = vmatpush2.msra.mxu0 0.0
  %2411 = vmatprep.subr.mxu0 0.0
  %2412 = vmatpush2.msra.mxu0 0.0
  %2413 = vmatprep.subr.mxu0 0.0
  %2414 = vmatpush2.msra.mxu0 0.0
  %2415 = vmatprep.subr.mxu0 0.0
  %2416 = vmatpush2.msra.mxu0 0.0
  %2417 = vmatprep.subr.mxu0 0.0
  %2418 = vmatpush2.msra.mxu0 0.0
  %2419 = vmatprep.subr.mxu0 0.0
  %2420 = vmatpush2.msra.mxu0 0.0
  %2421 = vmatprep.subr.mxu0 0.0
  %2422 = vmatpush2.msra.mxu0 0.0
  %2423 = vmatprep.subr.mxu0 0.0
  %2424 = vmatpush2.msra.mxu0 0.0
  %2425 = vmatprep.subr.mxu0 0.0
  %2426 = vmatpush2.msra.mxu0 0.0
  %2427 = vmatprep.subr.mxu0 0.0
  %2428 = vmatpush2.msra.mxu0 0.0
  %2429 = vmatprep.subr.mxu0 0.0
  %2430 = vmatpush2.msra.mxu0 0.0
  %2431 = vmatprep.subr.mxu0 0.0
  %2432 = vmatpush2.msra.mxu0 0.0
  %2433 = vmatprep.mubr.f32.mxu0 0.0
  %2434 = vmatmul.mubr.f32.gmra.mxu0 %v2209
  %v2435 = vpop.f32.mrf.mxu0
  %v2436 = vadd.f32 0.0, %v2435
  %v2437 = vpop.f32.mrf.mxu0
  %2438 = vdwg.mxu0
  %v2439 = vadd.f32 %v2368, %v2436
  %v2440 = vtanh.pop %v2439
  %s2441 = scalar_lea.vmem [#allocation5], 40
  %v2442 = vld [vmem:[%s2441] sm:$0xff]
  %2443 = vmatprep.subr.mxu0 0.0
  %2444 = vmatpush1.msra.mxu0 0.0
  %2445 = vmatprep.subr.mxu0 0.0
  %2446 = vmatpush1.msra.mxu0 0.0
  %2447 = vmatprep.subr.mxu0 0.0
  %2448 = vmatpush1.msra.mxu0 0.0
  %2449 = vmatprep.subr.mxu0 0.0
  %2450 = vmatpush1.msra.mxu0 0.0
  %2451 = vmatprep.subr.mxu0 0.0
  %2452 = vmatpush1.msra.mxu0 0.0
  %2453 = vmatprep.subr.mxu0 0.0
  %2454 = vmatpush1.msra.mxu0 0.0
  %2455 = vmatprep.subr.mxu0 0.0
  %2456 = vmatpush1.msra.mxu0 0.0
  %2457 = vmatprep.subr.mxu0 0.0
  %2458 = vmatpush1.msra.mxu0 0.0
  %2459 = vmatprep.subr.mxu0 0.0
  %2460 = vmatpush1.msra.mxu0 0.0
  %2461 = vmatprep.subr.mxu0 0.0
  %2462 = vmatpush1.msra.mxu0 0.0
  %2463 = vmatprep.subr.mxu0 0.0
  %2464 = vmatpush1.msra.mxu0 0.0
  %2465 = vmatprep.subr.mxu0 0.0
  %2466 = vmatpush1.msra.mxu0 0.0
  %2467 = vmatprep.subr.mxu0 0.0
  %2468 = vmatpush1.msra.mxu0 %v603
  %2469 = vmatprep.subr.mxu0 0.0
  %2470 = vmatpush1.msra.mxu0 %v602
  %2471 = vmatprep.subr.mxu0 0.0
  %2472 = vmatpush1.msra.mxu0 %v601
  %2473 = vmatprep.subr.mxu0 0.0
  %2474 = vmatpush1.msra.mxu0 %v600
  %2475 = vmatprep.subr.mxu0 0.0
  %2476 = vmatpush2.msra.mxu0 0.0
  %2477 = vmatprep.subr.mxu0 0.0
  %2478 = vmatpush2.msra.mxu0 0.0
  %2479 = vmatprep.subr.mxu0 0.0
  %2480 = vmatpush2.msra.mxu0 0.0
  %2481 = vmatprep.subr.mxu0 0.0
  %2482 = vmatpush2.msra.mxu0 0.0
  %2483 = vmatprep.subr.mxu0 0.0
  %2484 = vmatpush2.msra.mxu0 0.0
  %2485 = vmatprep.subr.mxu0 0.0
  %2486 = vmatpush2.msra.mxu0 0.0
  %2487 = vmatprep.subr.mxu0 0.0
  %2488 = vmatpush2.msra.mxu0 0.0
  %2489 = vmatprep.subr.mxu0 0.0
  %2490 = vmatpush2.msra.mxu0 0.0
  %2491 = vmatprep.subr.mxu0 0.0
  %2492 = vmatpush2.msra.mxu0 0.0
  %2493 = vmatprep.subr.mxu0 0.0
  %2494 = vmatpush2.msra.mxu0 0.0
  %2495 = vmatprep.subr.mxu0 0.0
  %2496 = vmatpush2.msra.mxu0 0.0
  %2497 = vmatprep.subr.mxu0 0.0
  %2498 = vmatpush2.msra.mxu0 0.0
  %2499 = vmatprep.subr.mxu0 0.0
  %2500 = vmatpush2.msra.mxu0 0.0
  %2501 = vmatprep.subr.mxu0 0.0
  %2502 = vmatpush2.msra.mxu0 0.0
  %2503 = vmatprep.subr.mxu0 0.0
  %2504 = vmatpush2.msra.mxu0 0.0
  %2505 = vmatprep.subr.mxu0 0.0
  %2506 = vmatpush2.msra.mxu0 0.0
  %2507 = vmatprep.mubr.f32.mxu0 0.0
  %2508 = vmatmul.mubr.f32.gmra.mxu0 %v2209
  %v2509 = vpop.f32.mrf.mxu0
  %v2510 = vadd.f32 0.0, %v2509
  %v2511 = vpop.f32.mrf.mxu0
  %2512 = vdwg.mxu0
  %v2513 = vadd.f32 %v2442, %v2510
  %v2514 = vxor.u32 %v2513, 2147483648
  %v2515 = vmul.f32 %v2514, 1.442695
  %v2516 = vpow.pop %v2515
  %v2517 = vadd.f32 %v2516, 1.0
  %v2518 = vrcp.pop %v2517
  %v2519 = vmul.f32 1.0, %v2518
  %v2520 = vmul.f32 %v2366, %v2201
  %v2521 = vmul.f32 %v2287, %v2440
  %v2522 = vadd.f32 %v2520, %v2521
  %v2523 = vtanh.pop %v2522
  %v2524 = vmul.f32 %v2519, %v2523
  %s2525 = scalar_lea.vmem [#allocation6], 40
  %2526 = vst.msk [vmem:[%s2525] sm:$0xff] %vm186, %v2524
  %s2527 = scalar_lea.vmem [#allocation2], 48
  %v2528 = vld [vmem:[%s2527] sm:$0xff]
  %v2530 = vsel %vm186, %v2524, 0
  %2532 = vmatprep.subr.mxu0 0.0
  %2533 = vmatpush1.msra.mxu0 0.0
  %2534 = vmatprep.subr.mxu0 0.0
  %2535 = vmatpush1.msra.mxu0 0.0
  %2536 = vmatprep.subr.mxu0 0.0
  %2537 = vmatpush1.msra.mxu0 0.0
  %2538 = vmatprep.subr.mxu0 0.0
  %2539 = vmatpush1.msra.mxu0 0.0
  %2540 = vmatprep.subr.mxu0 0.0
  %2541 = vmatpush1.msra.mxu0 0.0
  %2542 = vmatprep.subr.mxu0 0.0
  %2543 = vmatpush1.msra.mxu0 0.0
  %2544 = vmatprep.subr.mxu0 0.0
  %2545 = vmatpush1.msra.mxu0 0.0
  %2546 = vmatprep.subr.mxu0 0.0
  %2547 = vmatpush1.msra.mxu0 0.0
  %2548 = vmatprep.subr.mxu0 0.0
  %2549 = vmatpush1.msra.mxu0 0.0
  %2550 = vmatprep.subr.mxu0 0.0
  %2551 = vmatpush1.msra.mxu0 0.0
  %2552 = vmatprep.subr.mxu0 0.0
  %2553 = vmatpush1.msra.mxu0 0.0
  %2554 = vmatprep.subr.mxu0 0.0
  %2555 = vmatpush1.msra.mxu0 0.0
  %2556 = vmatprep.subr.mxu0 0.0
  %2557 = vmatpush1.msra.mxu0 %v588
  %2558 = vmatprep.subr.mxu0 0.0
  %2559 = vmatpush1.msra.mxu0 %v587
  %2560 = vmatprep.subr.mxu0 0.0
  %2561 = vmatpush1.msra.mxu0 %v586
  %2562 = vmatprep.subr.mxu0 0.0
  %2563 = vmatpush1.msra.mxu0 %v585
  %2564 = vmatprep.subr.mxu0 0.0
  %2565 = vmatpush2.msra.mxu0 0.0
  %2566 = vmatprep.subr.mxu0 0.0
  %2567 = vmatpush2.msra.mxu0 0.0
  %2568 = vmatprep.subr.mxu0 0.0
  %2569 = vmatpush2.msra.mxu0 0.0
  %2570 = vmatprep.subr.mxu0 0.0
  %2571 = vmatpush2.msra.mxu0 0.0
  %2572 = vmatprep.subr.mxu0 0.0
  %2573 = vmatpush2.msra.mxu0 0.0
  %2574 = vmatprep.subr.mxu0 0.0
  %2575 = vmatpush2.msra.mxu0 0.0
  %2576 = vmatprep.subr.mxu0 0.0
  %2577 = vmatpush2.msra.mxu0 0.0
  %2578 = vmatprep.subr.mxu0 0.0
  %2579 = vmatpush2.msra.mxu0 0.0
  %2580 = vmatprep.subr.mxu0 0.0
  %2581 = vmatpush2.msra.mxu0 0.0
  %2582 = vmatprep.subr.mxu0 0.0
  %2583 = vmatpush2.msra.mxu0 0.0
  %2584 = vmatprep.subr.mxu0 0.0
  %2585 = vmatpush2.msra.mxu0 0.0
  %2586 = vmatprep.subr.mxu0 0.0
  %2587 = vmatpush2.msra.mxu0 0.0
  %2588 = vmatprep.subr.mxu0 0.0
  %2589 = vmatpush2.msra.mxu0 0.0
  %2590 = vmatprep.subr.mxu0 0.0
  %2591 = vmatpush2.msra.mxu0 0.0
  %2592 = vmatprep.subr.mxu0 0.0
  %2593 = vmatpush2.msra.mxu0 0.0
  %2594 = vmatprep.subr.mxu0 0.0
  %2595 = vmatpush2.msra.mxu0 0.0
  %2596 = vmatprep.mubr.f32.mxu0 0.0
  %2597 = vmatmul.mubr.f32.gmra.mxu0 %v2530
  %v2598 = vpop.f32.mrf.mxu0
  %v2599 = vadd.f32 0.0, %v2598
  %v2600 = vpop.f32.mrf.mxu0
  %2601 = vdwg.mxu0
  %v2602 = vadd.f32 %v2528, %v2599
  %v2603 = vxor.u32 %v2602, 2147483648
  %v2604 = vmul.f32 %v2603, 1.442695
  %v2605 = vpow.pop %v2604
  %v2606 = vadd.f32 %v2605, 1.0
  %v2607 = vrcp.pop %v2606
  %v2608 = vmul.f32 1.0, %v2607
  %s2609 = scalar_lea.vmem [#allocation3], 48
  %v2610 = vld [vmem:[%s2609] sm:$0xff]
  %2611 = vmatprep.subr.mxu0 0.0
  %2612 = vmatpush1.msra.mxu0 0.0
  %2613 = vmatprep.subr.mxu0 0.0
  %2614 = vmatpush1.msra.mxu0 0.0
  %2615 = vmatprep.subr.mxu0 0.0
  %2616 = vmatpush1.msra.mxu0 0.0
  %2617 = vmatprep.subr.mxu0 0.0
  %2618 = vmatpush1.msra.mxu0 0.0
  %2619 = vmatprep.subr.mxu0 0.0
  %2620 = vmatpush1.msra.mxu0 0.0
  %2621 = vmatprep.subr.mxu0 0.0
  %2622 = vmatpush1.msra.mxu0 0.0
  %2623 = vmatprep.subr.mxu0 0.0
  %2624 = vmatpush1.msra.mxu0 0.0
  %2625 = vmatprep.subr.mxu0 0.0
  %2626 = vmatpush1.msra.mxu0 0.0
  %2627 = vmatprep.subr.mxu0 0.0
  %2628 = vmatpush1.msra.mxu0 0.0
  %2629 = vmatprep.subr.mxu0 0.0
  %2630 = vmatpush1.msra.mxu0 0.0
  %2631 = vmatprep.subr.mxu0 0.0
  %2632 = vmatpush1.msra.mxu0 0.0
  %2633 = vmatprep.subr.mxu0 0.0
  %2634 = vmatpush1.msra.mxu0 0.0
  %2635 = vmatprep.subr.mxu0 0.0
  %2636 = vmatpush1.msra.mxu0 %v593
  %2637 = vmatprep.subr.mxu0 0.0
  %2638 = vmatpush1.msra.mxu0 %v592
  %2639 = vmatprep.subr.mxu0 0.0
  %2640 = vmatpush1.msra.mxu0 %v591
  %2641 = vmatprep.subr.mxu0 0.0
  %2642 = vmatpush1.msra.mxu0 %v590
  %2643 = vmatprep.subr.mxu0 0.0
  %2644 = vmatpush2.msra.mxu0 0.0
  %2645 = vmatprep.subr.mxu0 0.0
  %2646 = vmatpush2.msra.mxu0 0.0
  %2647 = vmatprep.subr.mxu0 0.0
  %2648 = vmatpush2.msra.mxu0 0.0
  %2649 = vmatprep.subr.mxu0 0.0
  %2650 = vmatpush2.msra.mxu0 0.0
  %2651 = vmatprep.subr.mxu0 0.0
  %2652 = vmatpush2.msra.mxu0 0.0
  %2653 = vmatprep.subr.mxu0 0.0
  %2654 = vmatpush2.msra.mxu0 0.0
  %2655 = vmatprep.subr.mxu0 0.0
  %2656 = vmatpush2.msra.mxu0 0.0
  %2657 = vmatprep.subr.mxu0 0.0
  %2658 = vmatpush2.msra.mxu0 0.0
  %2659 = vmatprep.subr.mxu0 0.0
  %2660 = vmatpush2.msra.mxu0 0.0
  %2661 = vmatprep.subr.mxu0 0.0
  %2662 = vmatpush2.msra.mxu0 0.0
  %2663 = vmatprep.subr.mxu0 0.0
  %2664 = vmatpush2.msra.mxu0 0.0
  %2665 = vmatprep.subr.mxu0 0.0
  %2666 = vmatpush2.msra.mxu0 0.0
  %2667 = vmatprep.subr.mxu0 0.0
  %2668 = vmatpush2.msra.mxu0 0.0
  %2669 = vmatprep.subr.mxu0 0.0
  %2670 = vmatpush2.msra.mxu0 0.0
  %2671 = vmatprep.subr.mxu0 0.0
  %2672 = vmatpush2.msra.mxu0 0.0
  %2673 = vmatprep.subr.mxu0 0.0
  %2674 = vmatpush2.msra.mxu0 0.0
  %2675 = vmatprep.mubr.f32.mxu0 0.0
  %2676 = vmatmul.mubr.f32.gmra.mxu0 %v2530
  %v2677 = vpop.f32.mrf.mxu0
  %v2678 = vadd.f32 0.0, %v2677
  %v2679 = vpop.f32.mrf.mxu0
  %2680 = vdwg.mxu0
  %v2681 = vadd.f32 %v2610, %v2678
  %v2682 = vxor.u32 %v2681, 2147483648
  %v2683 = vmul.f32 %v2682, 1.442695
  %v2684 = vpow.pop %v2683
  %v2685 = vadd.f32 %v2684, 1.0
  %v2686 = vrcp.pop %v2685
  %v2687 = vmul.f32 1.0, %v2686
  %s2688 = scalar_lea.vmem [#allocation4], 48
  %v2689 = vld [vmem:[%s2688] sm:$0xff]
  %2690 = vmatprep.subr.mxu0 0.0
  %2691 = vmatpush1.msra.mxu0 0.0
  %2692 = vmatprep.subr.mxu0 0.0
  %2693 = vmatpush1.msra.mxu0 0.0
  %2694 = vmatprep.subr.mxu0 0.0
  %2695 = vmatpush1.msra.mxu0 0.0
  %2696 = vmatprep.subr.mxu0 0.0
  %2697 = vmatpush1.msra.mxu0 0.0
  %2698 = vmatprep.subr.mxu0 0.0
  %2699 = vmatpush1.msra.mxu0 0.0
  %2700 = vmatprep.subr.mxu0 0.0
  %2701 = vmatpush1.msra.mxu0 0.0
  %2702 = vmatprep.subr.mxu0 0.0
  %2703 = vmatpush1.msra.mxu0 0.0
  %2704 = vmatprep.subr.mxu0 0.0
  %2705 = vmatpush1.msra.mxu0 0.0
  %2706 = vmatprep.subr.mxu0 0.0
  %2707 = vmatpush1.msra.mxu0 0.0
  %2708 = vmatprep.subr.mxu0 0.0
  %2709 = vmatpush1.msra.mxu0 0.0
  %2710 = vmatprep.subr.mxu0 0.0
  %2711 = vmatpush1.msra.mxu0 0.0
  %2712 = vmatprep.subr.mxu0 0.0
  %2713 = vmatpush1.msra.mxu0 0.0
  %2714 = vmatprep.subr.mxu0 0.0
  %2715 = vmatpush1.msra.mxu0 %v598
  %2716 = vmatprep.subr.mxu0 0.0
  %2717 = vmatpush1.msra.mxu0 %v597
  %2718 = vmatprep.subr.mxu0 0.0
  %2719 = vmatpush1.msra.mxu0 %v596
  %2720 = vmatprep.subr.mxu0 0.0
  %2721 = vmatpush1.msra.mxu0 %v595
  %2722 = vmatprep.subr.mxu0 0.0
  %2723 = vmatpush2.msra.mxu0 0.0
  %2724 = vmatprep.subr.mxu0 0.0
  %2725 = vmatpush2.msra.mxu0 0.0
  %2726 = vmatprep.subr.mxu0 0.0
  %2727 = vmatpush2.msra.mxu0 0.0
  %2728 = vmatprep.subr.mxu0 0.0
  %2729 = vmatpush2.msra.mxu0 0.0
  %2730 = vmatprep.subr.mxu0 0.0
  %2731 = vmatpush2.msra.mxu0 0.0
  %2732 = vmatprep.subr.mxu0 0.0
  %2733 = vmatpush2.msra.mxu0 0.0
  %2734 = vmatprep.subr.mxu0 0.0
  %2735 = vmatpush2.msra.mxu0 0.0
  %2736 = vmatprep.subr.mxu0 0.0
  %2737 = vmatpush2.msra.mxu0 0.0
  %2738 = vmatprep.subr.mxu0 0.0
  %2739 = vmatpush2.msra.mxu0 0.0
  %2740 = vmatprep.subr.mxu0 0.0
  %2741 = vmatpush2.msra.mxu0 0.0
  %2742 = vmatprep.subr.mxu0 0.0
  %2743 = vmatpush2.msra.mxu0 0.0
  %2744 = vmatprep.subr.mxu0 0.0
  %2745 = vmatpush2.msra.mxu0 0.0
  %2746 = vmatprep.subr.mxu0 0.0
  %2747 = vmatpush2.msra.mxu0 0.0
  %2748 = vmatprep.subr.mxu0 0.0
  %2749 = vmatpush2.msra.mxu0 0.0
  %2750 = vmatprep.subr.mxu0 0.0
  %2751 = vmatpush2.msra.mxu0 0.0
  %2752 = vmatprep.subr.mxu0 0.0
  %2753 = vmatpush2.msra.mxu0 0.0
  %2754 = vmatprep.mubr.f32.mxu0 0.0
  %2755 = vmatmul.mubr.f32.gmra.mxu0 %v2530
  %v2756 = vpop.f32.mrf.mxu0
  %v2757 = vadd.f32 0.0, %v2756
  %v2758 = vpop.f32.mrf.mxu0
  %2759 = vdwg.mxu0
  %v2760 = vadd.f32 %v2689, %v2757
  %v2761 = vtanh.pop %v2760
  %s2762 = scalar_lea.vmem [#allocation5], 48
  %v2763 = vld [vmem:[%s2762] sm:$0xff]
  %2764 = vmatprep.subr.mxu0 0.0
  %2765 = vmatpush1.msra.mxu0 0.0
  %2766 = vmatprep.subr.mxu0 0.0
  %2767 = vmatpush1.msra.mxu0 0.0
  %2768 = vmatprep.subr.mxu0 0.0
  %2769 = vmatpush1.msra.mxu0 0.0
  %2770 = vmatprep.subr.mxu0 0.0
  %2771 = vmatpush1.msra.mxu0 0.0
  %2772 = vmatprep.subr.mxu0 0.0
  %2773 = vmatpush1.msra.mxu0 0.0
  %2774 = vmatprep.subr.mxu0 0.0
  %2775 = vmatpush1.msra.mxu0 0.0
  %2776 = vmatprep.subr.mxu0 0.0
  %2777 = vmatpush1.msra.mxu0 0.0
  %2778 = vmatprep.subr.mxu0 0.0
  %2779 = vmatpush1.msra.mxu0 0.0
  %2780 = vmatprep.subr.mxu0 0.0
  %2781 = vmatpush1.msra.mxu0 0.0
  %2782 = vmatprep.subr.mxu0 0.0
  %2783 = vmatpush1.msra.mxu0 0.0
  %2784 = vmatprep.subr.mxu0 0.0
  %2785 = vmatpush1.msra.mxu0 0.0
  %2786 = vmatprep.subr.mxu0 0.0
  %2787 = vmatpush1.msra.mxu0 0.0
  %2788 = vmatprep.subr.mxu0 0.0
  %2789 = vmatpush1.msra.mxu0 %v603
  %2790 = vmatprep.subr.mxu0 0.0
  %2791 = vmatpush1.msra.mxu0 %v602
  %2792 = vmatprep.subr.mxu0 0.0
  %2793 = vmatpush1.msra.mxu0 %v601
  %2794 = vmatprep.subr.mxu0 0.0
  %2795 = vmatpush1.msra.mxu0 %v600
  %2796 = vmatprep.subr.mxu0 0.0
  %2797 = vmatpush2.msra.mxu0 0.0
  %2798 = vmatprep.subr.mxu0 0.0
  %2799 = vmatpush2.msra.mxu0 0.0
  %2800 = vmatprep.subr.mxu0 0.0
  %2801 = vmatpush2.msra.mxu0 0.0
  %2802 = vmatprep.subr.mxu0 0.0
  %2803 = vmatpush2.msra.mxu0 0.0
  %2804 = vmatprep.subr.mxu0 0.0
  %2805 = vmatpush2.msra.mxu0 0.0
  %2806 = vmatprep.subr.mxu0 0.0
  %2807 = vmatpush2.msra.mxu0 0.0
  %2808 = vmatprep.subr.mxu0 0.0
  %2809 = vmatpush2.msra.mxu0 0.0
  %2810 = vmatprep.subr.mxu0 0.0
  %2811 = vmatpush2.msra.mxu0 0.0
  %2812 = vmatprep.subr.mxu0 0.0
  %2813 = vmatpush2.msra.mxu0 0.0
  %2814 = vmatprep.subr.mxu0 0.0
  %2815 = vmatpush2.msra.mxu0 0.0
  %2816 = vmatprep.subr.mxu0 0.0
  %2817 = vmatpush2.msra.mxu0 0.0
  %2818 = vmatprep.subr.mxu0 0.0
  %2819 = vmatpush2.msra.mxu0 0.0
  %2820 = vmatprep.subr.mxu0 0.0
  %2821 = vmatpush2.msra.mxu0 0.0
  %2822 = vmatprep.subr.mxu0 0.0
  %2823 = vmatpush2.msra.mxu0 0.0
  %2824 = vmatprep.subr.mxu0 0.0
  %2825 = vmatpush2.msra.mxu0 0.0
  %2826 = vmatprep.subr.mxu0 0.0
  %2827 = vmatpush2.msra.mxu0 0.0
  %2828 = vmatprep.mubr.f32.mxu0 0.0
  %2829 = vmatmul.mubr.f32.gmra.mxu0 %v2530
  %v2830 = vpop.f32.mrf.mxu0
  %v2831 = vadd.f32 0.0, %v2830
  %v2832 = vpop.f32.mrf.mxu0
  %2833 = vdwg.mxu0
  %v2834 = vadd.f32 %v2763, %v2831
  %v2835 = vxor.u32 %v2834, 2147483648
  %v2836 = vmul.f32 %v2835, 1.442695
  %v2837 = vpow.pop %v2836
  %v2838 = vadd.f32 %v2837, 1.0
  %v2839 = vrcp.pop %v2838
  %v2840 = vmul.f32 1.0, %v2839
  %v2841 = vmul.f32 %v2687, %v2522
  %v2842 = vmul.f32 %v2608, %v2761
  %v2843 = vadd.f32 %v2841, %v2842
  %v2844 = vtanh.pop %v2843
  %v2845 = vmul.f32 %v2840, %v2844
  %s2846 = scalar_lea.vmem [#allocation6], 48
  %2847 = vst.msk [vmem:[%s2846] sm:$0xff] %vm186, %v2845
  %s2848 = scalar_lea.vmem [#allocation2], 56
  %v2849 = vld [vmem:[%s2848] sm:$0xff]
  %v2851 = vsel %vm186, %v2845, 0
  %2853 = vmatprep.subr.mxu0 0.0
  %2854 = vmatpush1.msra.mxu0 0.0
  %2855 = vmatprep.subr.mxu0 0.0
  %2856 = vmatpush1.msra.mxu0 0.0
  %2857 = vmatprep.subr.mxu0 0.0
  %2858 = vmatpush1.msra.mxu0 0.0
  %2859 = vmatprep.subr.mxu0 0.0
  %2860 = vmatpush1.msra.mxu0 0.0
  %2861 = vmatprep.subr.mxu0 0.0
  %2862 = vmatpush1.msra.mxu0 0.0
  %2863 = vmatprep.subr.mxu0 0.0
  %2864 = vmatpush1.msra.mxu0 0.0
  %2865 = vmatprep.subr.mxu0 0.0
  %2866 = vmatpush1.msra.mxu0 0.0
  %2867 = vmatprep.subr.mxu0 0.0
  %2868 = vmatpush1.msra.mxu0 0.0
  %2869 = vmatprep.subr.mxu0 0.0
  %2870 = vmatpush1.msra.mxu0 0.0
  %2871 = vmatprep.subr.mxu0 0.0
  %2872 = vmatpush1.msra.mxu0 0.0
  %2873 = vmatprep.subr.mxu0 0.0
  %2874 = vmatpush1.msra.mxu0 0.0
  %2875 = vmatprep.subr.mxu0 0.0
  %2876 = vmatpush1.msra.mxu0 0.0
  %2877 = vmatprep.subr.mxu0 0.0
  %2878 = vmatpush1.msra.mxu0 %v588
  %2879 = vmatprep.subr.mxu0 0.0
  %2880 = vmatpush1.msra.mxu0 %v587
  %2881 = vmatprep.subr.mxu0 0.0
  %2882 = vmatpush1.msra.mxu0 %v586
  %2883 = vmatprep.subr.mxu0 0.0
  %2884 = vmatpush1.msra.mxu0 %v585
  %2885 = vmatprep.subr.mxu0 0.0
  %2886 = vmatpush2.msra.mxu0 0.0
  %2887 = vmatprep.subr.mxu0 0.0
  %2888 = vmatpush2.msra.mxu0 0.0
  %2889 = vmatprep.subr.mxu0 0.0
  %2890 = vmatpush2.msra.mxu0 0.0
  %2891 = vmatprep.subr.mxu0 0.0
  %2892 = vmatpush2.msra.mxu0 0.0
  %2893 = vmatprep.subr.mxu0 0.0
  %2894 = vmatpush2.msra.mxu0 0.0
  %2895 = vmatprep.subr.mxu0 0.0
  %2896 = vmatpush2.msra.mxu0 0.0
  %2897 = vmatprep.subr.mxu0 0.0
  %2898 = vmatpush2.msra.mxu0 0.0
  %2899 = vmatprep.subr.mxu0 0.0
  %2900 = vmatpush2.msra.mxu0 0.0
  %2901 = vmatprep.subr.mxu0 0.0
  %2902 = vmatpush2.msra.mxu0 0.0
  %2903 = vmatprep.subr.mxu0 0.0
  %2904 = vmatpush2.msra.mxu0 0.0
  %2905 = vmatprep.subr.mxu0 0.0
  %2906 = vmatpush2.msra.mxu0 0.0
  %2907 = vmatprep.subr.mxu0 0.0
  %2908 = vmatpush2.msra.mxu0 0.0
  %2909 = vmatprep.subr.mxu0 0.0
  %2910 = vmatpush2.msra.mxu0 0.0
  %2911 = vmatprep.subr.mxu0 0.0
  %2912 = vmatpush2.msra.mxu0 0.0
  %2913 = vmatprep.subr.mxu0 0.0
  %2914 = vmatpush2.msra.mxu0 0.0
  %2915 = vmatprep.subr.mxu0 0.0
  %2916 = vmatpush2.msra.mxu0 0.0
  %2917 = vmatprep.mubr.f32.mxu0 0.0
  %2918 = vmatmul.mubr.f32.gmra.mxu0 %v2851
  %v2919 = vpop.f32.mrf.mxu0
  %v2920 = vadd.f32 0.0, %v2919
  %v2921 = vpop.f32.mrf.mxu0
  %2922 = vdwg.mxu0
  %v2923 = vadd.f32 %v2849, %v2920
  %v2924 = vxor.u32 %v2923, 2147483648
  %v2925 = vmul.f32 %v2924, 1.442695
  %v2926 = vpow.pop %v2925
  %v2927 = vadd.f32 %v2926, 1.0
  %v2928 = vrcp.pop %v2927
  %v2929 = vmul.f32 1.0, %v2928
  %s2930 = scalar_lea.vmem [#allocation3], 56
  %v2931 = vld [vmem:[%s2930] sm:$0xff]
  %2932 = vmatprep.subr.mxu0 0.0
  %2933 = vmatpush1.msra.mxu0 0.0
  %2934 = vmatprep.subr.mxu0 0.0
  %2935 = vmatpush1.msra.mxu0 0.0
  %2936 = vmatprep.subr.mxu0 0.0
  %2937 = vmatpush1.msra.mxu0 0.0
  %2938 = vmatprep.subr.mxu0 0.0
  %2939 = vmatpush1.msra.mxu0 0.0
  %2940 = vmatprep.subr.mxu0 0.0
  %2941 = vmatpush1.msra.mxu0 0.0
  %2942 = vmatprep.subr.mxu0 0.0
  %2943 = vmatpush1.msra.mxu0 0.0
  %2944 = vmatprep.subr.mxu0 0.0
  %2945 = vmatpush1.msra.mxu0 0.0
  %2946 = vmatprep.subr.mxu0 0.0
  %2947 = vmatpush1.msra.mxu0 0.0
  %2948 = vmatprep.subr.mxu0 0.0
  %2949 = vmatpush1.msra.mxu0 0.0
  %2950 = vmatprep.subr.mxu0 0.0
  %2951 = vmatpush1.msra.mxu0 0.0
  %2952 = vmatprep.subr.mxu0 0.0
  %2953 = vmatpush1.msra.mxu0 0.0
  %2954 = vmatprep.subr.mxu0 0.0
  %2955 = vmatpush1.msra.mxu0 0.0
  %2956 = vmatprep.subr.mxu0 0.0
  %2957 = vmatpush1.msra.mxu0 %v593
  %2958 = vmatprep.subr.mxu0 0.0
  %2959 = vmatpush1.msra.mxu0 %v592
  %2960 = vmatprep.subr.mxu0 0.0
  %2961 = vmatpush1.msra.mxu0 %v591
  %2962 = vmatprep.subr.mxu0 0.0
  %2963 = vmatpush1.msra.mxu0 %v590
  %2964 = vmatprep.subr.mxu0 0.0
  %2965 = vmatpush2.msra.mxu0 0.0
  %2966 = vmatprep.subr.mxu0 0.0
  %2967 = vmatpush2.msra.mxu0 0.0
  %2968 = vmatprep.subr.mxu0 0.0
  %2969 = vmatpush2.msra.mxu0 0.0
  %2970 = vmatprep.subr.mxu0 0.0
  %2971 = vmatpush2.msra.mxu0 0.0
  %2972 = vmatprep.subr.mxu0 0.0
  %2973 = vmatpush2.msra.mxu0 0.0
  %2974 = vmatprep.subr.mxu0 0.0
  %2975 = vmatpush2.msra.mxu0 0.0
  %2976 = vmatprep.subr.mxu0 0.0
  %2977 = vmatpush2.msra.mxu0 0.0
  %2978 = vmatprep.subr.mxu0 0.0
  %2979 = vmatpush2.msra.mxu0 0.0
  %2980 = vmatprep.subr.mxu0 0.0
  %2981 = vmatpush2.msra.mxu0 0.0
  %2982 = vmatprep.subr.mxu0 0.0
  %2983 = vmatpush2.msra.mxu0 0.0
  %2984 = vmatprep.subr.mxu0 0.0
  %2985 = vmatpush2.msra.mxu0 0.0
  %2986 = vmatprep.subr.mxu0 0.0
  %2987 = vmatpush2.msra.mxu0 0.0
  %2988 = vmatprep.subr.mxu0 0.0
  %2989 = vmatpush2.msra.mxu0 0.0
  %2990 = vmatprep.subr.mxu0 0.0
  %2991 = vmatpush2.msra.mxu0 0.0
  %2992 = vmatprep.subr.mxu0 0.0
  %2993 = vmatpush2.msra.mxu0 0.0
  %2994 = vmatprep.subr.mxu0 0.0
  %2995 = vmatpush2.msra.mxu0 0.0
  %2996 = vmatprep.mubr.f32.mxu0 0.0
  %2997 = vmatmul.mubr.f32.gmra.mxu0 %v2851
  %v2998 = vpop.f32.mrf.mxu0
  %v2999 = vadd.f32 0.0, %v2998
  %v3000 = vpop.f32.mrf.mxu0
  %3001 = vdwg.mxu0
  %v3002 = vadd.f32 %v2931, %v2999
  %v3003 = vxor.u32 %v3002, 2147483648
  %v3004 = vmul.f32 %v3003, 1.442695
  %v3005 = vpow.pop %v3004
  %v3006 = vadd.f32 %v3005, 1.0
  %v3007 = vrcp.pop %v3006
  %v3008 = vmul.f32 1.0, %v3007
  %s3009 = scalar_lea.vmem [#allocation4], 56
  %v3010 = vld [vmem:[%s3009] sm:$0xff]
  %3011 = vmatprep.subr.mxu0 0.0
  %3012 = vmatpush1.msra.mxu0 0.0
  %3013 = vmatprep.subr.mxu0 0.0
  %3014 = vmatpush1.msra.mxu0 0.0
  %3015 = vmatprep.subr.mxu0 0.0
  %3016 = vmatpush1.msra.mxu0 0.0
  %3017 = vmatprep.subr.mxu0 0.0
  %3018 = vmatpush1.msra.mxu0 0.0
  %3019 = vmatprep.subr.mxu0 0.0
  %3020 = vmatpush1.msra.mxu0 0.0
  %3021 = vmatprep.subr.mxu0 0.0
  %3022 = vmatpush1.msra.mxu0 0.0
  %3023 = vmatprep.subr.mxu0 0.0
  %3024 = vmatpush1.msra.mxu0 0.0
  %3025 = vmatprep.subr.mxu0 0.0
  %3026 = vmatpush1.msra.mxu0 0.0
  %3027 = vmatprep.subr.mxu0 0.0
  %3028 = vmatpush1.msra.mxu0 0.0
  %3029 = vmatprep.subr.mxu0 0.0
  %3030 = vmatpush1.msra.mxu0 0.0
  %3031 = vmatprep.subr.mxu0 0.0
  %3032 = vmatpush1.msra.mxu0 0.0
  %3033 = vmatprep.subr.mxu0 0.0
  %3034 = vmatpush1.msra.mxu0 0.0
  %3035 = vmatprep.subr.mxu0 0.0
  %3036 = vmatpush1.msra.mxu0 %v598
  %3037 = vmatprep.subr.mxu0 0.0
  %3038 = vmatpush1.msra.mxu0 %v597
  %3039 = vmatprep.subr.mxu0 0.0
  %3040 = vmatpush1.msra.mxu0 %v596
  %3041 = vmatprep.subr.mxu0 0.0
  %3042 = vmatpush1.msra.mxu0 %v595
  %3043 = vmatprep.subr.mxu0 0.0
  %3044 = vmatpush2.msra.mxu0 0.0
  %3045 = vmatprep.subr.mxu0 0.0
  %3046 = vmatpush2.msra.mxu0 0.0
  %3047 = vmatprep.subr.mxu0 0.0
  %3048 = vmatpush2.msra.mxu0 0.0
  %3049 = vmatprep.subr.mxu0 0.0
  %3050 = vmatpush2.msra.mxu0 0.0
  %3051 = vmatprep.subr.mxu0 0.0
  %3052 = vmatpush2.msra.mxu0 0.0
  %3053 = vmatprep.subr.mxu0 0.0
  %3054 = vmatpush2.msra.mxu0 0.0
  %3055 = vmatprep.subr.mxu0 0.0
  %3056 = vmatpush2.msra.mxu0 0.0
  %3057 = vmatprep.subr.mxu0 0.0
  %3058 = vmatpush2.msra.mxu0 0.0
  %3059 = vmatprep.subr.mxu0 0.0
  %3060 = vmatpush2.msra.mxu0 0.0
  %3061 = vmatprep.subr.mxu0 0.0
  %3062 = vmatpush2.msra.mxu0 0.0
  %3063 = vmatprep.subr.mxu0 0.0
  %3064 = vmatpush2.msra.mxu0 0.0
  %3065 = vmatprep.subr.mxu0 0.0
  %3066 = vmatpush2.msra.mxu0 0.0
  %3067 = vmatprep.subr.mxu0 0.0
  %3068 = vmatpush2.msra.mxu0 0.0
  %3069 = vmatprep.subr.mxu0 0.0
  %3070 = vmatpush2.msra.mxu0 0.0
  %3071 = vmatprep.subr.mxu0 0.0
  %3072 = vmatpush2.msra.mxu0 0.0
  %3073 = vmatprep.subr.mxu0 0.0
  %3074 = vmatpush2.msra.mxu0 0.0
  %3075 = vmatprep.mubr.f32.mxu0 0.0
  %3076 = vmatmul.mubr.f32.gmra.mxu0 %v2851
  %v3077 = vpop.f32.mrf.mxu0
  %v3078 = vadd.f32 0.0, %v3077
  %v3079 = vpop.f32.mrf.mxu0
  %3080 = vdwg.mxu0
  %v3081 = vadd.f32 %v3010, %v3078
  %v3082 = vtanh.pop %v3081
  %s3083 = scalar_lea.vmem [#allocation5], 56
  %v3084 = vld [vmem:[%s3083] sm:$0xff]
  %3085 = vmatprep.subr.mxu0 0.0
  %3086 = vmatpush1.msra.mxu0 0.0
  %3087 = vmatprep.subr.mxu0 0.0
  %3088 = vmatpush1.msra.mxu0 0.0
  %3089 = vmatprep.subr.mxu0 0.0
  %3090 = vmatpush1.msra.mxu0 0.0
  %3091 = vmatprep.subr.mxu0 0.0
  %3092 = vmatpush1.msra.mxu0 0.0
  %3093 = vmatprep.subr.mxu0 0.0
  %3094 = vmatpush1.msra.mxu0 0.0
  %3095 = vmatprep.subr.mxu0 0.0
  %3096 = vmatpush1.msra.mxu0 0.0
  %3097 = vmatprep.subr.mxu0 0.0
  %3098 = vmatpush1.msra.mxu0 0.0
  %3099 = vmatprep.subr.mxu0 0.0
  %3100 = vmatpush1.msra.mxu0 0.0
  %3101 = vmatprep.subr.mxu0 0.0
  %3102 = vmatpush1.msra.mxu0 0.0
  %3103 = vmatprep.subr.mxu0 0.0
  %3104 = vmatpush1.msra.mxu0 0.0
  %3105 = vmatprep.subr.mxu0 0.0
  %3106 = vmatpush1.msra.mxu0 0.0
  %3107 = vmatprep.subr.mxu0 0.0
  %3108 = vmatpush1.msra.mxu0 0.0
  %3109 = vmatprep.subr.mxu0 0.0
  %3110 = vmatpush1.msra.mxu0 %v603
  %3111 = vmatprep.subr.mxu0 0.0
  %3112 = vmatpush1.msra.mxu0 %v602
  %3113 = vmatprep.subr.mxu0 0.0
  %3114 = vmatpush1.msra.mxu0 %v601
  %3115 = vmatprep.subr.mxu0 0.0
  %3116 = vmatpush1.msra.mxu0 %v600
  %3117 = vmatprep.subr.mxu0 0.0
  %3118 = vmatpush2.msra.mxu0 0.0
  %3119 = vmatprep.subr.mxu0 0.0
  %3120 = vmatpush2.msra.mxu0 0.0
  %3121 = vmatprep.subr.mxu0 0.0
  %3122 = vmatpush2.msra.mxu0 0.0
  %3123 = vmatprep.subr.mxu0 0.0
  %3124 = vmatpush2.msra.mxu0 0.0
  %3125 = vmatprep.subr.mxu0 0.0
  %3126 = vmatpush2.msra.mxu0 0.0
  %3127 = vmatprep.subr.mxu0 0.0
  %3128 = vmatpush2.msra.mxu0 0.0
  %3129 = vmatprep.subr.mxu0 0.0
  %3130 = vmatpush2.msra.mxu0 0.0
  %3131 = vmatprep.subr.mxu0 0.0
  %3132 = vmatpush2.msra.mxu0 0.0
  %3133 = vmatprep.subr.mxu0 0.0
  %3134 = vmatpush2.msra.mxu0 0.0
  %3135 = vmatprep.subr.mxu0 0.0
  %3136 = vmatpush2.msra.mxu0 0.0
  %3137 = vmatprep.subr.mxu0 0.0
  %3138 = vmatpush2.msra.mxu0 0.0
  %3139 = vmatprep.subr.mxu0 0.0
  %3140 = vmatpush2.msra.mxu0 0.0
  %3141 = vmatprep.subr.mxu0 0.0
  %3142 = vmatpush2.msra.mxu0 0.0
  %3143 = vmatprep.subr.mxu0 0.0
  %3144 = vmatpush2.msra.mxu0 0.0
  %3145 = vmatprep.subr.mxu0 0.0
  %3146 = vmatpush2.msra.mxu0 0.0
  %3147 = vmatprep.subr.mxu0 0.0
  %3148 = vmatpush2.msra.mxu0 0.0
  %3149 = vmatprep.mubr.f32.mxu0 0.0
  %3150 = vmatmul.mubr.f32.gmra.mxu0 %v2851
  %v3151 = vpop.f32.mrf.mxu0
  %v3152 = vadd.f32 0.0, %v3151
  %v3153 = vpop.f32.mrf.mxu0
  %3154 = vdwg.mxu0
  %v3155 = vadd.f32 %v3084, %v3152
  %v3156 = vxor.u32 %v3155, 2147483648
  %v3157 = vmul.f32 %v3156, 1.442695
  %v3158 = vpow.pop %v3157
  %v3159 = vadd.f32 %v3158, 1.0
  %v3160 = vrcp.pop %v3159
  %v3161 = vmul.f32 1.0, %v3160
  %v3162 = vmul.f32 %v3008, %v2843
  %v3163 = vmul.f32 %v2929, %v3082
  %v3164 = vadd.f32 %v3162, %v3163
  %v3165 = vtanh.pop %v3164
  %v3166 = vmul.f32 %v3161, %v3165
  %s3167 = scalar_lea.vmem [#allocation6], 56
  %3168 = vst.msk [vmem:[%s3167] sm:$0xff] %vm186, %v3166
  %3169 = vst.msk [vmem:[%s9] sm:$0xff] %vm186, %v3166
  %3170 = vst.msk [vmem:[%s10] sm:$0xff] %vm186, %v3164
  %v3171 = vld [vmem:[#allocation6] sm:$0xff]
  %v3172 = vld [vmem:[#allocation6 + $0x8] sm:$0xff]
  %v3173 = vld [vmem:[#allocation6 + $0x10] sm:$0xff]
  %v3174 = vld [vmem:[#allocation6 + $0x18] sm:$0xff]
  %v3175 = vld [vmem:[#allocation6 + $0x20] sm:$0xff]
  %v3176 = vld [vmem:[#allocation6 + $0x28] sm:$0xff]
  %v3177 = vld [vmem:[#allocation6 + $0x30] sm:$0xff]
  %v3178 = vld [vmem:[#allocation6 + $0x38] sm:$0xff]
  %v3179 = vld [vmem:[%s6] sm:$0xff]
  %v3180 = vld [vmem:[%s6 + $0x8] sm:$0xff]
  %v3181 = vld [vmem:[%s6 + $0x10] sm:$0xff]
  %v3182 = vld [vmem:[%s6 + $0x18] sm:$0xff]
  %v3183 = vld [vmem:[%s6 + $0x20] sm:$0xff]
  %v3184 = vld [vmem:[%s6 + $0x28] sm:$0xff]
  %v3185 = vld [vmem:[%s6 + $0x30] sm:$0xff]
  %v3186 = vld [vmem:[%s6 + $0x38] sm:$0xff]
  %v3187 = vld [vmem:[%s6 + $0x40] sm:$0xff]
  %v3188 = vld [vmem:[%s6 + $0x48] sm:$0xff]
  %v3189 = vld [vmem:[%s6 + $0x50] sm:$0xff]
  %v3190 = vld [vmem:[%s6 + $0x58] sm:$0xff]
  %v3191 = vld [vmem:[%s7] sm:$0x7]
  %v3193 = vlaneseq
  %v3194 = vshrl.u32 %v3193, 7
  %v3195 = vsub.s32 0, %v3194
  %v3196 = vrot.slane %v3191, %v3195
  %v3197 = vlaneseq
  %v3198 = vshrl.u32 %v3197, 7
  %v3199 = vsub.s32 1, %v3198
  %v3200 = vrot.slane %v3191, %v3199
  %v3201 = vlaneseq
  %v3202 = vshrl.u32 %v3201, 7
  %v3203 = vsub.s32 2, %v3202
  %v3204 = vrot.slane %v3191, %v3203
  %v3209 = vsel %vm186, %v3171, 0
  %v3212 = vsel %vm186, %v3172, 0
  %v3215 = vsel %vm186, %v3173, 0
  %v3218 = vsel %vm186, %v3174, 0
  %v3221 = vsel %vm186, %v3175, 0
  %v3224 = vsel %vm186, %v3176, 0
  %v3227 = vsel %vm186, %v3177, 0
  %v3230 = vsel %vm186, %v3178, 0
  %3232 = vmatprep.subr.mxu0 0.0
  %3233 = vmatpush1.msra.mxu0 0.0
  %3234 = vmatprep.subr.mxu0 0.0
  %3235 = vmatpush1.msra.mxu0 0.0
  %3236 = vmatprep.subr.mxu0 0.0
  %3237 = vmatpush1.msra.mxu0 0.0
  %3238 = vmatprep.subr.mxu0 0.0
  %3239 = vmatpush1.msra.mxu0 0.0
  %3240 = vmatprep.subr.mxu0 0.0
  %3241 = vmatpush1.msra.mxu0 0.0
  %3242 = vmatprep.subr.mxu0 0.0
  %3243 = vmatpush1.msra.mxu0 0.0
  %3244 = vmatprep.subr.mxu0 0.0
  %3245 = vmatpush1.msra.mxu0 0.0
  %3246 = vmatprep.subr.mxu0 0.0
  %3247 = vmatpush1.msra.mxu0 0.0
  %3248 = vmatprep.subr.mxu0 0.0
  %3249 = vmatpush1.msra.mxu0 0.0
  %3250 = vmatprep.subr.mxu0 0.0
  %3251 = vmatpush1.msra.mxu0 0.0
  %3252 = vmatprep.subr.mxu0 0.0
  %3253 = vmatpush1.msra.mxu0 0.0
  %3254 = vmatprep.subr.mxu0 0.0
  %3255 = vmatpush1.msra.mxu0 0.0
  %3256 = vmatprep.subr.mxu0 %v3189
  %3257 = vmatpush1.msra.mxu0 %v3188
  %3258 = vmatprep.subr.mxu0 %v3186
  %3259 = vmatpush1.msra.mxu0 %v3185
  %3260 = vmatprep.subr.mxu0 %v3183
  %3261 = vmatpush1.msra.mxu0 %v3182
  %3262 = vmatprep.subr.mxu0 %v3180
  %3263 = vmatpush1.msra.mxu0 %v3179
  %3264 = vmatprep.subr.mxu0 0.0
  %3265 = vmatpush2.msra.mxu0 0.0
  %3266 = vmatprep.subr.mxu0 0.0
  %3267 = vmatpush2.msra.mxu0 0.0
  %3268 = vmatprep.subr.mxu0 0.0
  %3269 = vmatpush2.msra.mxu0 0.0
  %3270 = vmatprep.subr.mxu0 0.0
  %3271 = vmatpush2.msra.mxu0 0.0
  %3272 = vmatprep.subr.mxu0 0.0
  %3273 = vmatpush2.msra.mxu0 0.0
  %3274 = vmatprep.subr.mxu0 0.0
  %3275 = vmatpush2.msra.mxu0 0.0
  %3276 = vmatprep.subr.mxu0 0.0
  %3277 = vmatpush2.msra.mxu0 0.0
  %3278 = vmatprep.subr.mxu0 0.0
  %3279 = vmatpush2.msra.mxu0 0.0
  %3280 = vmatprep.subr.mxu0 0.0
  %3281 = vmatpush2.msra.mxu0 0.0
  %3282 = vmatprep.subr.mxu0 0.0
  %3283 = vmatpush2.msra.mxu0 0.0
  %3284 = vmatprep.subr.mxu0 0.0
  %3285 = vmatpush2.msra.mxu0 0.0
  %3286 = vmatprep.subr.mxu0 0.0
  %3287 = vmatpush2.msra.mxu0 0.0
  %3288 = vmatprep.subr.mxu0 0.0
  %3289 = vmatpush2.msra.mxu0 0.0
  %3290 = vmatprep.subr.mxu0 0.0
  %3291 = vmatpush2.msra.mxu0 0.0
  %3292 = vmatprep.subr.mxu0 0.0
  %3293 = vmatpush2.msra.mxu0 0.0
  %3294 = vmatprep.subr.mxu0 0.0
  %3295 = vmatpush2.msra.mxu0 0.0
  %3296 = vmatprep.mubr.f32.mxu0 0.0
  %3297 = vmatmul.mubr.f32.gmra.mxu0 %v3209
  %v3298 = vpop.f32.mrf.mxu0
  %v3299 = vadd.f32 %v3196, %v3298
  %v3300 = vpop.f32.mrf.mxu0
  %v3301 = vadd.f32 %v3200, %v3300
  %3302 = vmatprep.mubr.f32.mxu0 0.0
  %3303 = vmatmul.mubr.f32.gmra.mxu0 %v3212
  %v3304 = vpop.f32.mrf.mxu0
  %v3305 = vadd.f32 %v3196, %v3304
  %v3306 = vpop.f32.mrf.mxu0
  %v3307 = vadd.f32 %v3200, %v3306
  %3308 = vmatprep.mubr.f32.mxu0 0.0
  %3309 = vmatmul.mubr.f32.gmra.mxu0 %v3215
  %v3310 = vpop.f32.mrf.mxu0
  %v3311 = vadd.f32 %v3196, %v3310
  %v3312 = vpop.f32.mrf.mxu0
  %v3313 = vadd.f32 %v3200, %v3312
  %3314 = vmatprep.mubr.f32.mxu0 0.0
  %3315 = vmatmul.mubr.f32.gmra.mxu0 %v3218
  %v3316 = vpop.f32.mrf.mxu0
  %v3317 = vadd.f32 %v3196, %v3316
  %v3318 = vpop.f32.mrf.mxu0
  %v3319 = vadd.f32 %v3200, %v3318
  %3320 = vmatprep.mubr.f32.mxu0 0.0
  %3321 = vmatmul.mubr.f32.gmra.mxu0 %v3221
  %v3322 = vpop.f32.mrf.mxu0
  %v3323 = vadd.f32 %v3196, %v3322
  %v3324 = vpop.f32.mrf.mxu0
  %v3325 = vadd.f32 %v3200, %v3324
  %3326 = vmatprep.mubr.f32.mxu0 0.0
  %3327 = vmatmul.mubr.f32.gmra.mxu0 %v3224
  %v3328 = vpop.f32.mrf.mxu0
  %v3329 = vadd.f32 %v3196, %v3328
  %v3330 = vpop.f32.mrf.mxu0
  %v3331 = vadd.f32 %v3200, %v3330
  %3332 = vmatprep.mubr.f32.mxu0 0.0
  %3333 = vmatmul.mubr.f32.gmra.mxu0 %v3227
  %v3334 = vpop.f32.mrf.mxu0
  %v3335 = vadd.f32 %v3196, %v3334
  %v3336 = vpop.f32.mrf.mxu0
  %v3337 = vadd.f32 %v3200, %v3336
  %3338 = vmatprep.mubr.f32.mxu0 0.0
  %3339 = vmatmul.mubr.f32.gmra.mxu0 %v3230
  %v3340 = vpop.f32.mrf.mxu0
  %v3341 = vadd.f32 %v3196, %v3340
  %v3342 = vpop.f32.mrf.mxu0
  %v3343 = vadd.f32 %v3200, %v3342
  %3344 = vdwg.mxu0
  %3345 = vmatprep.subr.mxu0 0.0
  %3346 = vmatpush1.msra.mxu0 0.0
  %3347 = vmatprep.subr.mxu0 0.0
  %3348 = vmatpush1.msra.mxu0 0.0
  %3349 = vmatprep.subr.mxu0 0.0
  %3350 = vmatpush1.msra.mxu0 0.0
  %3351 = vmatprep.subr.mxu0 0.0
  %3352 = vmatpush1.msra.mxu0 0.0
  %3353 = vmatprep.subr.mxu0 0.0
  %3354 = vmatpush1.msra.mxu0 0.0
  %3355 = vmatprep.subr.mxu0 0.0
  %3356 = vmatpush1.msra.mxu0 0.0
  %3357 = vmatprep.subr.mxu0 0.0
  %3358 = vmatpush1.msra.mxu0 0.0
  %3359 = vmatprep.subr.mxu0 0.0
  %3360 = vmatpush1.msra.mxu0 0.0
  %3361 = vmatprep.subr.mxu0 0.0
  %3362 = vmatpush1.msra.mxu0 0.0
  %3363 = vmatprep.subr.mxu0 0.0
  %3364 = vmatpush1.msra.mxu0 0.0
  %3365 = vmatprep.subr.mxu0 0.0
  %3366 = vmatpush1.msra.mxu0 0.0
  %3367 = vmatprep.subr.mxu0 0.0
  %3368 = vmatpush1.msra.mxu0 0.0
  %3369 = vmatprep.subr.mxu0 0.0
  %3370 = vmatpush1.msra.mxu0 %v3190
  %3371 = vmatprep.subr.mxu0 0.0
  %3372 = vmatpush1.msra.mxu0 %v3187
  %3373 = vmatprep.subr.mxu0 0.0
  %3374 = vmatpush1.msra.mxu0 %v3184
  %3375 = vmatprep.subr.mxu0 0.0
  %3376 = vmatpush1.msra.mxu0 %v3181
  %3377 = vmatprep.subr.mxu0 0.0
  %3378 = vmatpush2.msra.mxu0 0.0
  %3379 = vmatprep.subr.mxu0 0.0
  %3380 = vmatpush2.msra.mxu0 0.0
  %3381 = vmatprep.subr.mxu0 0.0
  %3382 = vmatpush2.msra.mxu0 0.0
  %3383 = vmatprep.subr.mxu0 0.0
  %3384 = vmatpush2.msra.mxu0 0.0
  %3385 = vmatprep.subr.mxu0 0.0
  %3386 = vmatpush2.msra.mxu0 0.0
  %3387 = vmatprep.subr.mxu0 0.0
  %3388 = vmatpush2.msra.mxu0 0.0
  %3389 = vmatprep.subr.mxu0 0.0
  %3390 = vmatpush2.msra.mxu0 0.0
  %3391 = vmatprep.subr.mxu0 0.0
  %3392 = vmatpush2.msra.mxu0 0.0
  %3393 = vmatprep.subr.mxu0 0.0
  %3394 = vmatpush2.msra.mxu0 0.0
  %3395 = vmatprep.subr.mxu0 0.0
  %3396 = vmatpush2.msra.mxu0 0.0
  %3397 = vmatprep.subr.mxu0 0.0
  %3398 = vmatpush2.msra.mxu0 0.0
  %3399 = vmatprep.subr.mxu0 0.0
  %3400 = vmatpush2.msra.mxu0 0.0
  %3401 = vmatprep.subr.mxu0 0.0
  %3402 = vmatpush2.msra.mxu0 0.0
  %3403 = vmatprep.subr.mxu0 0.0
  %3404 = vmatpush2.msra.mxu0 0.0
  %3405 = vmatprep.subr.mxu0 0.0
  %3406 = vmatpush2.msra.mxu0 0.0
  %3407 = vmatprep.subr.mxu0 0.0
  %3408 = vmatpush2.msra.mxu0 0.0
  %3409 = vmatprep.mubr.f32.mxu0 0.0
  %3410 = vmatmul.mubr.f32.gmra.mxu0 %v3209
  %v3411 = vpop.f32.mrf.mxu0
  %v3412 = vadd.f32 %v3204, %v3411
  %v3413 = vpop.f32.mrf.mxu0
  %3414 = vmatprep.mubr.f32.mxu0 0.0
  %3415 = vmatmul.mubr.f32.gmra.mxu0 %v3212
  %v3416 = vpop.f32.mrf.mxu0
  %v3417 = vadd.f32 %v3204, %v3416
  %v3418 = vpop.f32.mrf.mxu0
  %3419 = vmatprep.mubr.f32.mxu0 0.0
  %3420 = vmatmul.mubr.f32.gmra.mxu0 %v3215
  %v3421 = vpop.f32.mrf.mxu0
  %v3422 = vadd.f32 %v3204, %v3421
  %v3423 = vpop.f32.mrf.mxu0
  %3424 = vmatprep.mubr.f32.mxu0 0.0
  %3425 = vmatmul.mubr.f32.gmra.mxu0 %v3218
  %v3426 = vpop.f32.mrf.mxu0
  %v3427 = vadd.f32 %v3204, %v3426
  %v3428 = vpop.f32.mrf.mxu0
  %3429 = vmatprep.mubr.f32.mxu0 0.0
  %3430 = vmatmul.mubr.f32.gmra.mxu0 %v3221
  %v3431 = vpop.f32.mrf.mxu0
  %v3432 = vadd.f32 %v3204, %v3431
  %v3433 = vpop.f32.mrf.mxu0
  %3434 = vmatprep.mubr.f32.mxu0 0.0
  %3435 = vmatmul.mubr.f32.gmra.mxu0 %v3224
  %v3436 = vpop.f32.mrf.mxu0
  %v3437 = vadd.f32 %v3204, %v3436
  %v3438 = vpop.f32.mrf.mxu0
  %3439 = vmatprep.mubr.f32.mxu0 0.0
  %3440 = vmatmul.mubr.f32.gmra.mxu0 %v3227
  %v3441 = vpop.f32.mrf.mxu0
  %v3442 = vadd.f32 %v3204, %v3441
  %v3443 = vpop.f32.mrf.mxu0
  %3444 = vmatprep.mubr.f32.mxu0 0.0
  %3445 = vmatmul.mubr.f32.gmra.mxu0 %v3230
  %v3446 = vpop.f32.mrf.mxu0
  %v3447 = vadd.f32 %v3204, %v3446
  %v3448 = vpop.f32.mrf.mxu0
  %3449 = vdwg.mxu0
  %v3450 = vmul.f32 %v3301, 1.442695
  %v3451 = vpow.pop %v3450
  %v3452 = vmul.f32 %v3307, 1.442695
  %v3453 = vpow.pop %v3452
  %v3454 = vmul.f32 %v3313, 1.442695
  %v3455 = vpow.pop %v3454
  %v3456 = vmul.f32 %v3319, 1.442695
  %v3457 = vpow.pop %v3456
  %v3458 = vmul.f32 %v3325, 1.442695
  %v3459 = vpow.pop %v3458
  %v3460 = vmul.f32 %v3331, 1.442695
  %v3461 = vpow.pop %v3460
  %v3462 = vmul.f32 %v3337, 1.442695
  %v3463 = vpow.pop %v3462
  %v3464 = vmul.f32 %v3343, 1.442695
  %v3465 = vpow.pop %v3464
  %3466 = vrot.lane.b32.xlu0 %v3412, 32
  %v3467 = vpop.permute.xlu0 %3466
  %3468 = vrot.lane.b32.xlu0 %v3417, 32
  %v3469 = vpop.permute.xlu0 %3468
  %3470 = vrot.lane.b32.xlu0 %v3422, 32
  %v3471 = vpop.permute.xlu0 %3470
  %3472 = vrot.lane.b32.xlu0 %v3427, 32
  %v3473 = vpop.permute.xlu0 %3472
  %3474 = vrot.lane.b32.xlu0 %v3432, 32
  %v3475 = vpop.permute.xlu0 %3474
  %3476 = vrot.lane.b32.xlu0 %v3437, 32
  %v3477 = vpop.permute.xlu0 %3476
  %3478 = vrot.lane.b32.xlu0 %v3442, 32
  %v3479 = vpop.permute.xlu0 %3478
  %3480 = vrot.lane.b32.xlu0 %v3447, 32
  %v3481 = vpop.permute.xlu0 %3480
  %v3482 = vmax.f32 %v3412, %v3467
  %v3483 = vmax.f32 %v3417, %v3469
  %v3484 = vmax.f32 %v3422, %v3471
  %v3485 = vmax.f32 %v3427, %v3473
  %v3486 = vmax.f32 %v3432, %v3475
  %v3487 = vmax.f32 %v3437, %v3477
  %v3488 = vmax.f32 %v3442, %v3479
  %v3489 = vmax.f32 %v3447, %v3481
  %3490 = vrot.lane.b32.xlu0 %v3412, 64
  %v3491 = vpop.permute.xlu0 %3490
  %3492 = vrot.lane.b32.xlu0 %v3417, 64
  %v3493 = vpop.permute.xlu0 %3492
  %3494 = vrot.lane.b32.xlu0 %v3422, 64
  %v3495 = vpop.permute.xlu0 %3494
  %3496 = vrot.lane.b32.xlu0 %v3427, 64
  %v3497 = vpop.permute.xlu0 %3496
  %3498 = vrot.lane.b32.xlu0 %v3432, 64
  %v3499 = vpop.permute.xlu0 %3498
  %3500 = vrot.lane.b32.xlu0 %v3437, 64
  %v3501 = vpop.permute.xlu0 %3500
  %3502 = vrot.lane.b32.xlu0 %v3442, 64
  %v3503 = vpop.permute.xlu0 %3502
  %3504 = vrot.lane.b32.xlu0 %v3447, 64
  %v3505 = vpop.permute.xlu0 %3504
  %v3506 = vmax.f32 %v3482, %v3491
  %v3507 = vmax.f32 %v3483, %v3493
  %v3508 = vmax.f32 %v3484, %v3495
  %v3509 = vmax.f32 %v3485, %v3497
  %v3510 = vmax.f32 %v3486, %v3499
  %v3511 = vmax.f32 %v3487, %v3501
  %v3512 = vmax.f32 %v3488, %v3503
  %v3513 = vmax.f32 %v3489, %v3505
  %3514 = vrot.lane.b32.xlu0 %v3412, 96
  %v3515 = vpop.permute.xlu0 %3514
  %3516 = vrot.lane.b32.xlu0 %v3417, 96
  %v3517 = vpop.permute.xlu0 %3516
  %3518 = vrot.lane.b32.xlu0 %v3422, 96
  %v3519 = vpop.permute.xlu0 %3518
  %3520 = vrot.lane.b32.xlu0 %v3427, 96
  %v3521 = vpop.permute.xlu0 %3520
  %3522 = vrot.lane.b32.xlu0 %v3432, 96
  %v3523 = vpop.permute.xlu0 %3522
  %3524 = vrot.lane.b32.xlu0 %v3437, 96
  %v3525 = vpop.permute.xlu0 %3524
  %3526 = vrot.lane.b32.xlu0 %v3442, 96
  %v3527 = vpop.permute.xlu0 %3526
  %3528 = vrot.lane.b32.xlu0 %v3447, 96
  %v3529 = vpop.permute.xlu0 %3528
  %v3530 = vmax.f32 %v3506, %v3515
  %v3531 = vmax.f32 %v3507, %v3517
  %v3532 = vmax.f32 %v3508, %v3519
  %v3533 = vmax.f32 %v3509, %v3521
  %v3534 = vmax.f32 %v3510, %v3523
  %v3535 = vmax.f32 %v3511, %v3525
  %v3536 = vmax.f32 %v3512, %v3527
  %v3537 = vmax.f32 %v3513, %v3529
  %v3538 = vsub.f32 %v3412, %v3530
  %v3539 = vsub.f32 %v3417, %v3531
  %v3540 = vsub.f32 %v3422, %v3532
  %v3541 = vsub.f32 %v3427, %v3533
  %v3542 = vsub.f32 %v3432, %v3534
  %v3543 = vsub.f32 %v3437, %v3535
  %v3544 = vsub.f32 %v3442, %v3536
  %v3545 = vsub.f32 %v3447, %v3537
  %v3546 = vmul.f32 %v3538, 1.442695
  %v3547 = vpow.pop %v3546
  %v3548 = vmul.f32 %v3539, 1.442695
  %v3549 = vpow.pop %v3548
  %v3550 = vmul.f32 %v3540, 1.442695
  %v3551 = vpow.pop %v3550
  %v3552 = vmul.f32 %v3541, 1.442695
  %v3553 = vpow.pop %v3552
  %v3554 = vmul.f32 %v3542, 1.442695
  %v3555 = vpow.pop %v3554
  %v3556 = vmul.f32 %v3543, 1.442695
  %v3557 = vpow.pop %v3556
  %v3558 = vmul.f32 %v3544, 1.442695
  %v3559 = vpow.pop %v3558
  %v3560 = vmul.f32 %v3545, 1.442695
  %v3561 = vpow.pop %v3560
  %3562 = vrot.lane.b32.xlu0 %v3547, 32
  %v3563 = vpop.permute.xlu0 %3562
  %3564 = vrot.lane.b32.xlu0 %v3549, 32
  %v3565 = vpop.permute.xlu0 %3564
  %3566 = vrot.lane.b32.xlu0 %v3551, 32
  %v3567 = vpop.permute.xlu0 %3566
  %3568 = vrot.lane.b32.xlu0 %v3553, 32
  %v3569 = vpop.permute.xlu0 %3568
  %3570 = vrot.lane.b32.xlu0 %v3555, 32
  %v3571 = vpop.permute.xlu0 %3570
  %3572 = vrot.lane.b32.xlu0 %v3557, 32
  %v3573 = vpop.permute.xlu0 %3572
  %3574 = vrot.lane.b32.xlu0 %v3559, 32
  %v3575 = vpop.permute.xlu0 %3574
  %3576 = vrot.lane.b32.xlu0 %v3561, 32
  %v3577 = vpop.permute.xlu0 %3576
  %v3578 = vadd.f32 %v3547, %v3563
  %v3579 = vadd.f32 %v3549, %v3565
  %v3580 = vadd.f32 %v3551, %v3567
  %v3581 = vadd.f32 %v3553, %v3569
  %v3582 = vadd.f32 %v3555, %v3571
  %v3583 = vadd.f32 %v3557, %v3573
  %v3584 = vadd.f32 %v3559, %v3575
  %v3585 = vadd.f32 %v3561, %v3577
  %3586 = vrot.lane.b32.xlu0 %v3547, 64
  %v3587 = vpop.permute.xlu0 %3586
  %3588 = vrot.lane.b32.xlu0 %v3549, 64
  %v3589 = vpop.permute.xlu0 %3588
  %3590 = vrot.lane.b32.xlu0 %v3551, 64
  %v3591 = vpop.permute.xlu0 %3590
  %3592 = vrot.lane.b32.xlu0 %v3553, 64
  %v3593 = vpop.permute.xlu0 %3592
  %3594 = vrot.lane.b32.xlu0 %v3555, 64
  %v3595 = vpop.permute.xlu0 %3594
  %3596 = vrot.lane.b32.xlu0 %v3557, 64
  %v3597 = vpop.permute.xlu0 %3596
  %3598 = vrot.lane.b32.xlu0 %v3559, 64
  %v3599 = vpop.permute.xlu0 %3598
  %3600 = vrot.lane.b32.xlu0 %v3561, 64
  %v3601 = vpop.permute.xlu0 %3600
  %v3602 = vadd.f32 %v3578, %v3587
  %v3603 = vadd.f32 %v3579, %v3589
  %v3604 = vadd.f32 %v3580, %v3591
  %v3605 = vadd.f32 %v3581, %v3593
  %v3606 = vadd.f32 %v3582, %v3595
  %v3607 = vadd.f32 %v3583, %v3597
  %v3608 = vadd.f32 %v3584, %v3599
  %v3609 = vadd.f32 %v3585, %v3601
  %3610 = vrot.lane.b32.xlu0 %v3547, 96
  %v3611 = vpop.permute.xlu0 %3610
  %3612 = vrot.lane.b32.xlu0 %v3549, 96
  %v3613 = vpop.permute.xlu0 %3612
  %3614 = vrot.lane.b32.xlu0 %v3551, 96
  %v3615 = vpop.permute.xlu0 %3614
  %3616 = vrot.lane.b32.xlu0 %v3553, 96
  %v3617 = vpop.permute.xlu0 %3616
  %3618 = vrot.lane.b32.xlu0 %v3555, 96
  %v3619 = vpop.permute.xlu0 %3618
  %3620 = vrot.lane.b32.xlu0 %v3557, 96
  %v3621 = vpop.permute.xlu0 %3620
  %3622 = vrot.lane.b32.xlu0 %v3559, 96
  %v3623 = vpop.permute.xlu0 %3622
  %3624 = vrot.lane.b32.xlu0 %v3561, 96
  %v3625 = vpop.permute.xlu0 %3624
  %v3626 = vadd.f32 %v3602, %v3611
  %v3627 = vadd.f32 %v3603, %v3613
  %v3628 = vadd.f32 %v3604, %v3615
  %v3629 = vadd.f32 %v3605, %v3617
  %v3630 = vadd.f32 %v3606, %v3619
  %v3631 = vadd.f32 %v3607, %v3621
  %v3632 = vadd.f32 %v3608, %v3623
  %v3633 = vadd.f32 %v3609, %v3625
  %v3634 = vlog2.pop %v3626
  %v3635 = vmul.f32 %v3634, 0.6931472
  %v3636 = vlog2.pop %v3627
  %v3637 = vmul.f32 %v3636, 0.6931472
  %v3638 = vlog2.pop %v3628
  %v3639 = vmul.f32 %v3638, 0.6931472
  %v3640 = vlog2.pop %v3629
  %v3641 = vmul.f32 %v3640, 0.6931472
  %v3642 = vlog2.pop %v3630
  %v3643 = vmul.f32 %v3642, 0.6931472
  %v3644 = vlog2.pop %v3631
  %v3645 = vmul.f32 %v3644, 0.6931472
  %v3646 = vlog2.pop %v3632
  %v3647 = vmul.f32 %v3646, 0.6931472
  %v3648 = vlog2.pop %v3633
  %v3649 = vmul.f32 %v3648, 0.6931472
  %v3650 = vsub.f32 %v3538, %v3635
  %v3651 = vsub.f32 %v3539, %v3637
  %v3652 = vsub.f32 %v3540, %v3639
  %v3653 = vsub.f32 %v3541, %v3641
  %v3654 = vsub.f32 %v3542, %v3643
  %v3655 = vsub.f32 %v3543, %v3645
  %v3656 = vsub.f32 %v3544, %v3647
  %v3657 = vsub.f32 %v3545, %v3649
  %3658 = vst [vmem:[%s8] sm:$0xff] %v3299
  %3659 = vst [vmem:[%s8 + $0x18] sm:$0xff] %v3305
  %3660 = vst [vmem:[%s8 + $0x30] sm:$0xff] %v3311
  %3661 = vst [vmem:[%s8 + $0x48] sm:$0xff] %v3317
  %3662 = vst [vmem:[%s8 + $0x60] sm:$0xff] %v3323
  %3663 = vst [vmem:[%s8 + $0x78] sm:$0xff] %v3329
  %3664 = vst [vmem:[%s8 + $0x90] sm:$0xff] %v3335
  %3665 = vst [vmem:[%s8 + $0xa8] sm:$0xff] %v3341
  %3666 = vst [vmem:[%s8 + $0x8] sm:$0xff] %v3451
  %3667 = vst [vmem:[%s8 + $0x20] sm:$0xff] %v3453
  %3668 = vst [vmem:[%s8 + $0x38] sm:$0xff] %v3455
  %3669 = vst [vmem:[%s8 + $0x50] sm:$0xff] %v3457
  %3670 = vst [vmem:[%s8 + $0x68] sm:$0xff] %v3459
  %3671 = vst [vmem:[%s8 + $0x80] sm:$0xff] %v3461
  %3672 = vst [vmem:[%s8 + $0x98] sm:$0xff] %v3463
  %3673 = vst [vmem:[%s8 + $0xb0] sm:$0xff] %v3465
  %3674 = vst [vmem:[%s8 + $0x10] sm:$0xff] %v3650
  %3675 = vst [vmem:[%s8 + $0x28] sm:$0xff] %v3651
  %3676 = vst [vmem:[%s8 + $0x40] sm:$0xff] %v3652
  %3677 = vst [vmem:[%s8 + $0x58] sm:$0xff] %v3653
  %3678 = vst [vmem:[%s8 + $0x70] sm:$0xff] %v3654
  %3679 = vst [vmem:[%s8 + $0x88] sm:$0xff] %v3655
  %3680 = vst [vmem:[%s8 + $0xa0] sm:$0xff] %v3656
  %3681 = vst [vmem:[%s8 + $0xb8] sm:$0xff] %v3657
  // Predicated region
  $region34: #{mdnrnn_forward.1} parent=0 // pred_check
    _
  $region35: #{mdnrnn_forward.1} parent=0 // pred_check_branch
    %3683 = sbr.rel (0) target = $region37
  $region36: #{mdnrnn_forward.1} parent=0 // pred_region
    _
  $region37: #{mdnrnn_forward.1} parent=0 // pred_fallthru
    _
  // Predicated region
  $region38: #{mdnrnn_forward.1} parent=0 // pred_check
    _
  $region39: #{mdnrnn_forward.1} parent=0 // pred_check_branch
    %3685 = sbr.rel (0) target = $region41
  $region40: #{mdnrnn_forward.1} parent=0 // pred_region
    _
  $region41: #{mdnrnn_forward.1} parent=0 // pred_fallthru
    _
  // Predicated region
  $region42: #{mdnrnn_forward.1} parent=0 // pred_check
    _
  $region43: #{mdnrnn_forward.1} parent=0 // pred_check_branch
    %3687 = sbr.rel (0) target = $region45
  $region44: #{mdnrnn_forward.1} parent=0 // pred_region
    _
  $region45: #{mdnrnn_forward.1} parent=0 // pred_fallthru
    _
  // Predicated region
  $region46: #{mdnrnn_forward.1} parent=0 // pred_check
    _
  $region47: #{mdnrnn_forward.1} parent=0 // pred_check_branch
    %3689 = sbr.rel (0) target = $region49
  $region48: #{mdnrnn_forward.1} parent=0 // pred_region
    _
  $region49: #{mdnrnn_forward.1} parent=0 // pred_fallthru
    _
  // Predicated region
  $region50: #{mdnrnn_forward.1} parent=0 // pred_check
    _
  $region51: #{mdnrnn_forward.1} parent=0 // pred_check_branch
    %3691 = sbr.rel (0) target = $region53
  $region52: #{mdnrnn_forward.1} parent=0 // pred_region
    _
  $region53: #{mdnrnn_forward.1} parent=0 // pred_fallthru
    _
  // Predicated region
  $region54: #{mdnrnn_forward.1} parent=0 // pred_check
    _
  $region55: #{mdnrnn_forward.1} parent=0 // pred_check_branch
    %3693 = sbr.rel (0) target = $region57
  $region56: #{mdnrnn_forward.1} parent=0 // pred_region
    _
  $region57: #{mdnrnn_forward.1} parent=0 // pred_fallthru
    _

</llo_original>
